<compile_context>
chip_gen: v7x
topology: tpu7x:2x2x1
jax: 0.10.0
libtpu: 0.0.40
codegen_flags: <defaults>
</compile_context>

<pallas_src>
import functools
import math

import jax
import jax.numpy as jnp
from jax.experimental import pallas as pl
from jax.experimental.pallas import tpu as pltpu

# ---- synthetic "small XLM-Roberta" config (deterministic init, no checkpoint) ----
VOCAB = 100
HIDDEN = 32
N_HEADS = 4
HEAD_DIM = HIDDEN // N_HEADS
N_LAYERS = 2
INTERMEDIATE = 64
MAX_POS = 24            # max_position_embeddings (includes padding offset)
TYPE_VOCAB = 1
PAD_ID = 1              # self.pad_token_id = 1
LN_EPS = 1e-5
INIT_STD = 0.02


# ------------------------- in-kernel math helpers -------------------------

def _layernorm(x, g, b):
    mu = jnp.mean(x, axis=-1, keepdims=True)
    var = jnp.mean((x - mu) ** 2, axis=-1, keepdims=True)   # biased, like torch LN
    return (x - mu) * jax.lax.rsqrt(var + LN_EPS) * g + b


def _erf(x):
    # Abramowitz & Stegun 7.1.26 polynomial (|err| <= 1.5e-7).  Uses only
    # exp / abs / where / mul / add, which all have Mosaic lowerings.
    a1, a2, a3, a4, a5 = (0.254829592, -0.284496736, 1.421413741,
                          -1.453152027, 1.061405429)
    p = 0.3275911
    ax = jnp.abs(x)
    t = 1.0 / (1.0 + p * ax)
    poly = ((((a5 * t + a4) * t + a3) * t + a2) * t + a1) * t
    y = 1.0 - poly * jnp.exp(-(ax * ax))
    return jnp.where(x < 0.0, -y, y)


def _gelu(x):
    # exact (erf-based) GELU, matching torch.nn.functional.gelu / HF "gelu"
    return 0.5 * x * (1.0 + _erf(x * (1.0 / math.sqrt(2.0))))


# ------------------------- fused Pallas kernel (one batch per program) -----

def _bert_kernel(h0_ref, mask_ref,
                 emb_g_ref, emb_b_ref,
                 qkv_w_ref, qkv_b_ref,
                 ao_w_ref, ao_b_ref,
                 attn_g_ref, attn_b_ref,
                 i_w_ref, i_b_ref,
                 o_w_ref, o_b_ref,
                 ffn_g_ref, ffn_b_ref,
                 head_w_ref, head_b_ref,
                 out_ref,
                 *, seq, n_layers, n_heads, head_dim):
    hidden = n_heads * head_dim
    scale = 1.0 / math.sqrt(head_dim)

    # embeddings LayerNorm (embedding gathers happen in the XLA wrapper)
    h = _layernorm(h0_ref[...], emb_g_ref[...], emb_b_ref[...])      # [S, H]
    m_add = mask_ref[0]                                               # [1, S]

    for l in range(n_layers):
        # fused Q/K/V projection: one [S, H] x [H, 3H] matmul
        qkv = (jnp.dot(h, qkv_w_ref[l], preferred_element_type=jnp.float32)
               + qkv_b_ref[l])                                        # [S, 3H]

        w_o = ao_w_ref[l]                                             # [H, H]
        attn = jnp.zeros((seq, hidden), jnp.float32)
        for hh in range(n_heads):
            c0 = hh * head_dim
            q_h = qkv[:, c0:c0 + head_dim]                            # [S, dh]
            k_h = qkv[:, hidden + c0:hidden + c0 + head_dim]
            v_h = qkv[:, 2 * hidden + c0:2 * hidden + c0 + head_dim]

            # q @ k^T via dot_general (contract last dims, no transpose op)
            s = jax.lax.dot_general(
                q_h, k_h, (((1,), (1,)), ((), ())),
                preferred_element_type=jnp.float32) * scale           # [S, S]
            s = s + m_add                                             # additive mask
            s = s - jnp.max(s, axis=-1, keepdims=True)
            p = jnp.exp(s)
            p = p * pl.reciprocal(jnp.sum(p, axis=-1, keepdims=True),
                                  approx=True)
            ctx_h = jnp.dot(p, v_h, preferred_element_type=jnp.float32)  # [S, dh]
            # fold the per-head slice of the output projection here (sublane
            # slice of w_o at a multiple of 8 -> no lane relayout, no scratch).
            attn = attn + jnp.dot(ctx_h, w_o[c0:c0 + head_dim, :],
                                  preferred_element_type=jnp.float32)
        attn = attn + ao_b_ref[l]
        h = _layernorm(attn + h, attn_g_ref[l], attn_b_ref[l])

        inter = _gelu(jnp.dot(h, i_w_ref[l],
                              preferred_element_type=jnp.float32) + i_b_ref[l])
        ffn_out = (jnp.dot(inter, o_w_ref[l],
                           preferred_element_type=jnp.float32) + o_b_ref[l])
        h = _layernorm(ffn_out + h, ffn_g_ref[l], ffn_b_ref[l])

    # classifier head on the [CLS] row: x = bert(...)[0][:, 0]; x = head(x)
    cls = h[0:1, :]                                                   # [1, H]
    out_ref[0] = (jnp.dot(cls, head_w_ref[...],
                          preferred_element_type=jnp.float32)
                  + head_b_ref[...])                                  # [1, 1]


# ------------------------- parameters -------------------------

def init_params(key):
    def normal(k, shape):
        return (INIT_STD * jax.random.normal(k, shape)).astype(jnp.float32)

    keys = iter(jax.random.split(key, 4 + 6 * N_LAYERS))

    # padding_idx row of the word embedding is zero in (XLM-)Roberta
    word_emb = normal(next(keys), (VOCAB, HIDDEN)).at[PAD_ID].set(0.0)
    pos_emb = normal(next(keys), (MAX_POS, HIDDEN))
    type_emb = normal(next(keys), (TYPE_VOCAB, HIDDEN))
    head_w = normal(next(keys), (HIDDEN, 1))

    qkv_w, ao_w, i_w, o_w = [], [], [], []
    for _ in range(N_LAYERS):
        q_w = normal(next(keys), (HIDDEN, HIDDEN))
        k_w = normal(next(keys), (HIDDEN, HIDDEN))
        v_w = normal(next(keys), (HIDDEN, HIDDEN))
        # pre-concatenate Q/K/V weights -> one fused projection per layer
        qkv_w.append(jnp.concatenate([q_w, k_w, v_w], axis=1))       # [H, 3H]
        ao_w.append(normal(next(keys), (HIDDEN, HIDDEN)))
        i_w.append(normal(next(keys), (HIDDEN, INTERMEDIATE)))
        o_w.append(normal(next(keys), (INTERMEDIATE, HIDDEN)))

    zeros = lambda s: jnp.zeros(s, jnp.float32)
    ones = lambda s: jnp.ones(s, jnp.float32)
    return {
        "word_emb": word_emb,
        "pos_emb": pos_emb,
        "type_emb": type_emb,
        "emb_ln_g": ones((1, HIDDEN)),
        "emb_ln_b": zeros((1, HIDDEN)),
        "qkv_w": jnp.stack(qkv_w),                      # [L, H, 3H]
        "qkv_b": zeros((N_LAYERS, 1, 3 * HIDDEN)),
        "ao_w": jnp.stack(ao_w),                        # [L, H, H]
        "ao_b": zeros((N_LAYERS, 1, HIDDEN)),
        "attn_ln_g": ones((N_LAYERS, 1, HIDDEN)),
        "attn_ln_b": zeros((N_LAYERS, 1, HIDDEN)),
        "i_w": jnp.stack(i_w),                          # [L, H, I]
        "i_b": zeros((N_LAYERS, 1, INTERMEDIATE)),
        "o_w": jnp.stack(o_w),                          # [L, I, H]
        "o_b": zeros((N_LAYERS, 1, HIDDEN)),
        "ffn_ln_g": ones((N_LAYERS, 1, HIDDEN)),
        "ffn_ln_b": zeros((N_LAYERS, 1, HIDDEN)),
        "head_w": head_w,                               # [H, 1]
        "head_b": zeros((1, 1)),
    }


# ------------------------- forward pass -------------------------

def _const_index_map(ndim):
    def im(b):
        return (0,) * ndim
    return im


def bert_small_forward(params, input_ids):
    B, S = input_ids.shape
    mask = input_ids != PAD_ID                          # attention_mask
    mask_i = mask.astype(jnp.int32)

    # XLM-Roberta position ids: cumsum over non-pad tokens, offset by pad id
    pos_ids = jnp.cumsum(mask_i, axis=1) * mask_i + PAD_ID
    type_ids = jnp.zeros_like(input_ids)

    # embedding-table gathers stay in XLA glue; everything else is in-kernel
    h0 = (params["word_emb"][input_ids]
          + params["type_emb"][type_ids]
          + params["pos_emb"][pos_ids]).reshape(B * S, HIDDEN)

    # HF-style extended attention mask: (1 - mask) * finfo(f32).min, additive
    add_mask = ((1.0 - mask.astype(jnp.float32))
                * jnp.finfo(jnp.float32).min).reshape(B, 1, S)

    kernel = functools.partial(
        _bert_kernel, seq=S,
        n_layers=N_LAYERS, n_heads=N_HEADS, head_dim=HEAD_DIM)

    weights = (params["emb_ln_g"], params["emb_ln_b"],
               params["qkv_w"], params["qkv_b"],
               params["ao_w"], params["ao_b"],
               params["attn_ln_g"], params["attn_ln_b"],
               params["i_w"], params["i_b"],
               params["o_w"], params["o_b"],
               params["ffn_ln_g"], params["ffn_ln_b"],
               params["head_w"], params["head_b"])

    # Weights: full-array resident blocks (constant index map -> DMA'd once).
    weight_specs = [pl.BlockSpec(w.shape, _const_index_map(w.ndim))
                    for w in weights]

    in_specs = ([pl.BlockSpec((S, HIDDEN), lambda b: (b, 0)),     # activations
                 pl.BlockSpec((1, 1, S), lambda b: (b, 0, 0))]    # additive mask
                + weight_specs)

    out = pl.pallas_call(
        kernel,
        out_shape=jax.ShapeDtypeStruct((B, 1, 1), jnp.float32),
        grid=(B,),
        in_specs=in_specs,
        out_specs=pl.BlockSpec((1, 1, 1), lambda b: (b, 0, 0)),
        compiler_params=pltpu.CompilerParams(
            dimension_semantics=("parallel",)),    # batch split across TCs (v7x)
    )(h0, add_mask, *weights)
    return out.reshape(B, 1)


if __name__ == "__main__":
    key = jax.random.PRNGKey(0)
    pkey, ikey = jax.random.split(key)
    params = init_params(pkey)

    B, S = 2, 8
    input_ids = jax.random.randint(ikey, (B, S), 2, VOCAB, dtype=jnp.int32)
    input_ids = input_ids.at[1, 6:].set(PAD_ID)         # pad tail of sequence 1

    out = jax.jit(bert_small_forward)(params, input_ids)
    jax.block_until_ready(out)
    assert out.shape == (B, 1) and out.dtype == jnp.float32
    assert bool(jnp.all(jnp.isfinite(out)))
    print("KERNEL_OK")
</pallas_src>

<mosaic_0001>
module attributes {stable_mosaic.version = 11 : i64} {
  func.func @_bert_kernel(%arg0: i32, %arg1: memref<8x32xf32, #tpu.memory_space<vmem>>, %arg2: memref<1x1x8xf32, #tpu.memory_space<vmem>>, %arg3: memref<1x32xf32, #tpu.memory_space<vmem>>, %arg4: memref<1x32xf32, #tpu.memory_space<vmem>>, %arg5: memref<2x32x96xf32, #tpu.memory_space<vmem>>, %arg6: memref<2x1x96xf32, #tpu.memory_space<vmem>>, %arg7: memref<2x32x32xf32, #tpu.memory_space<vmem>>, %arg8: memref<2x1x32xf32, #tpu.memory_space<vmem>>, %arg9: memref<2x1x32xf32, #tpu.memory_space<vmem>>, %arg10: memref<2x1x32xf32, #tpu.memory_space<vmem>>, %arg11: memref<2x32x64xf32, #tpu.memory_space<vmem>>, %arg12: memref<2x1x64xf32, #tpu.memory_space<vmem>>, %arg13: memref<2x64x32xf32, #tpu.memory_space<vmem>>, %arg14: memref<2x1x32xf32, #tpu.memory_space<vmem>>, %arg15: memref<2x1x32xf32, #tpu.memory_space<vmem>>, %arg16: memref<2x1x32xf32, #tpu.memory_space<vmem>>, %arg17: memref<32x1xf32, #tpu.memory_space<vmem>>, %arg18: memref<1x1xf32, #tpu.memory_space<vmem>>, %arg19: memref<1x1x1xf32, #tpu.memory_space<vmem>>) attributes {dimension_semantics = [#tpu.dimension_semantics<parallel>], iteration_bounds = array<i64: 2>, scalar_prefetch = 0 : i64, scratch_operands = 0 : i64, tpu.core_type = #tpu.core_type<tc>, window_params = [{transform_indices = @transform_0, window_bounds = array<i64: 8, 32>}, {transform_indices = @transform_1, window_bounds = array<i64: 1, 1, 8>}, {pipeline_mode = #tpu.pipeline_mode<synchronous>, transform_indices = @transform_2, window_bounds = array<i64: 1, 32>}, {pipeline_mode = #tpu.pipeline_mode<synchronous>, transform_indices = @transform_3, window_bounds = array<i64: 1, 32>}, {pipeline_mode = #tpu.pipeline_mode<synchronous>, transform_indices = @transform_4, window_bounds = array<i64: 2, 32, 96>}, {pipeline_mode = #tpu.pipeline_mode<synchronous>, transform_indices = @transform_5, window_bounds = array<i64: 2, 1, 96>}, {pipeline_mode = #tpu.pipeline_mode<synchronous>, transform_indices = @transform_6, window_bounds = array<i64: 2, 32, 32>}, {pipeline_mode = #tpu.pipeline_mode<synchronous>, transform_indices = @transform_7, window_bounds = array<i64: 2, 1, 32>}, {pipeline_mode = #tpu.pipeline_mode<synchronous>, transform_indices = @transform_8, window_bounds = array<i64: 2, 1, 32>}, {pipeline_mode = #tpu.pipeline_mode<synchronous>, transform_indices = @transform_9, window_bounds = array<i64: 2, 1, 32>}, {pipeline_mode = #tpu.pipeline_mode<synchronous>, transform_indices = @transform_10, window_bounds = array<i64: 2, 32, 64>}, {pipeline_mode = #tpu.pipeline_mode<synchronous>, transform_indices = @transform_11, window_bounds = array<i64: 2, 1, 64>}, {pipeline_mode = #tpu.pipeline_mode<synchronous>, transform_indices = @transform_12, window_bounds = array<i64: 2, 64, 32>}, {pipeline_mode = #tpu.pipeline_mode<synchronous>, transform_indices = @transform_13, window_bounds = array<i64: 2, 1, 32>}, {pipeline_mode = #tpu.pipeline_mode<synchronous>, transform_indices = @transform_14, window_bounds = array<i64: 2, 1, 32>}, {pipeline_mode = #tpu.pipeline_mode<synchronous>, transform_indices = @transform_15, window_bounds = array<i64: 2, 1, 32>}, {pipeline_mode = #tpu.pipeline_mode<synchronous>, transform_indices = @transform_16, window_bounds = array<i64: 32, 1>}, {pipeline_mode = #tpu.pipeline_mode<synchronous>, transform_indices = @transform_17, window_bounds = array<i64: 1, 1>}, {transform_indices = @transform_18, window_bounds = array<i64: 1, 1, 1>}]} {
    %c0 = arith.constant 0 : index
    %c0_0 = arith.constant 0 : index
    %0 = vector.load %arg1[%c0, %c0_0] : memref<8x32xf32, #tpu.memory_space<vmem>>, vector<8x32xf32>
    %c0_1 = arith.constant 0 : index
    %c0_2 = arith.constant 0 : index
    %1 = vector.load %arg3[%c0_1, %c0_2] : memref<1x32xf32, #tpu.memory_space<vmem>>, vector<1x32xf32>
    %c0_3 = arith.constant 0 : index
    %c0_4 = arith.constant 0 : index
    %2 = vector.load %arg4[%c0_3, %c0_4] : memref<1x32xf32, #tpu.memory_space<vmem>>, vector<1x32xf32>
    %cst = arith.constant dense<0.000000e+00> : vector<8xf32>
    %3 = vector.multi_reduction <add>, %0, %cst [1] : vector<8x32xf32> to vector<8xf32>
    %4 = vector.shape_cast %3 : vector<8xf32> to vector<8x1xf32>
    %cst_5 = arith.constant 3.200000e+01 : f32
    %5 = vector.broadcast %cst_5 : f32 to vector<8x1xf32>
    %6 = arith.divf %4, %5 : vector<8x1xf32>
    %7 = vector.broadcast %6 : vector<8x1xf32> to vector<8x32xf32>
    %8 = arith.subf %0, %7 : vector<8x32xf32>
    %9 = arith.mulf %8, %8 : vector<8x32xf32>
    %cst_6 = arith.constant dense<0.000000e+00> : vector<8xf32>
    %10 = vector.multi_reduction <add>, %9, %cst_6 [1] : vector<8x32xf32> to vector<8xf32>
    %11 = vector.shape_cast %10 : vector<8xf32> to vector<8x1xf32>
    %cst_7 = arith.constant 3.200000e+01 : f32
    %12 = vector.broadcast %cst_7 : f32 to vector<8x1xf32>
    %13 = arith.divf %11, %12 : vector<8x1xf32>
    %14 = vector.broadcast %6 : vector<8x1xf32> to vector<8x32xf32>
    %15 = arith.subf %0, %14 : vector<8x32xf32>
    %cst_8 = arith.constant 9.99999974E-6 : f32
    %16 = vector.broadcast %cst_8 : f32 to vector<8x1xf32>
    %17 = arith.addf %13, %16 : vector<8x1xf32>
    %18 = math.rsqrt %17 : vector<8x1xf32>
    %19 = vector.broadcast %18 : vector<8x1xf32> to vector<8x32xf32>
    %20 = arith.mulf %15, %19 : vector<8x32xf32>
    %21 = vector.broadcast %1 : vector<1x32xf32> to vector<8x32xf32>
    %22 = arith.mulf %20, %21 : vector<8x32xf32>
    %23 = vector.broadcast %2 : vector<1x32xf32> to vector<8x32xf32>
    %24 = arith.addf %22, %23 : vector<8x32xf32>
    %c0_9 = arith.constant 0 : index
    %c0_10 = arith.constant 0 : index
    %c0_11 = arith.constant 0 : index
    %25 = vector.load %arg2[%c0_9, %c0_10, %c0_11] : memref<1x1x8xf32, #tpu.memory_space<vmem>>, vector<1x1x8xf32>
    %26 = vector.shape_cast %25 : vector<1x1x8xf32> to vector<1x8xf32>
    %c0_12 = arith.constant 0 : index
    %c0_13 = arith.constant 0 : index
    %c0_14 = arith.constant 0 : index
    %27 = vector.load %arg5[%c0_12, %c0_13, %c0_14] : memref<2x32x96xf32, #tpu.memory_space<vmem>>, vector<1x32x96xf32>
    %28 = vector.shape_cast %27 : vector<1x32x96xf32> to vector<32x96xf32>
    %cst_15 = arith.constant dense<0.000000e+00> : vector<8x96xf32>
    %29 = tpu.matmul %24, %28, %cst_15 {dimension_numbers = #tpu.dot_dimension_numbers<[1], [0], [0], [1], [0, 0, 1, 1], [], []>} : vector<8x32xf32>, vector<32x96xf32>, vector<8x96xf32> -> vector<8x96xf32>
    %c0_16 = arith.constant 0 : index
    %c0_17 = arith.constant 0 : index
    %c0_18 = arith.constant 0 : index
    %30 = vector.load %arg6[%c0_16, %c0_17, %c0_18] : memref<2x1x96xf32, #tpu.memory_space<vmem>>, vector<1x1x96xf32>
    %31 = vector.shape_cast %30 : vector<1x1x96xf32> to vector<1x96xf32>
    %32 = vector.broadcast %31 : vector<1x96xf32> to vector<8x96xf32>
    %33 = arith.addf %29, %32 : vector<8x96xf32>
    %c0_19 = arith.constant 0 : index
    %c0_20 = arith.constant 0 : index
    %c0_21 = arith.constant 0 : index
    %34 = vector.load %arg7[%c0_19, %c0_20, %c0_21] : memref<2x32x32xf32, #tpu.memory_space<vmem>>, vector<1x32x32xf32>
    %35 = vector.shape_cast %34 : vector<1x32x32xf32> to vector<32x32xf32>
    %cst_22 = arith.constant 0.000000e+00 : f32
    %36 = vector.broadcast %cst_22 : f32 to vector<8x32xf32>
    %37 = vector.extract_strided_slice %33 {offsets = [0, 0], sizes = [8, 8], strides = [1, 1]} : vector<8x96xf32> to vector<8x8xf32>
    %38 = vector.extract_strided_slice %33 {offsets = [0, 32], sizes = [8, 8], strides = [1, 1]} : vector<8x96xf32> to vector<8x8xf32>
    %39 = vector.extract_strided_slice %33 {offsets = [0, 64], sizes = [8, 8], strides = [1, 1]} : vector<8x96xf32> to vector<8x8xf32>
    %cst_23 = arith.constant dense<0.000000e+00> : vector<8x8xf32>
    %40 = tpu.matmul %37, %38, %cst_23 {dimension_numbers = #tpu.dot_dimension_numbers<[1], [1], [0], [0], [0, 0, 1, 0], [], []>} : vector<8x8xf32>, vector<8x8xf32>, vector<8x8xf32> -> vector<8x8xf32>
    %cst_24 = arith.constant 0.353553385 : f32
    %41 = vector.broadcast %cst_24 : f32 to vector<8x8xf32>
    %42 = arith.mulf %40, %41 : vector<8x8xf32>
    %43 = vector.broadcast %26 : vector<1x8xf32> to vector<8x8xf32>
    %44 = arith.addf %42, %43 : vector<8x8xf32>
    %cst_25 = arith.constant dense<0xFF800000> : vector<8xf32>
    %45 = vector.multi_reduction <maximumf>, %44, %cst_25 [1] : vector<8x8xf32> to vector<8xf32>
    %46 = vector.shape_cast %45 : vector<8xf32> to vector<8x1xf32>
    %47 = vector.broadcast %46 : vector<8x1xf32> to vector<8x8xf32>
    %48 = arith.subf %44, %47 : vector<8x8xf32>
    %49 = math.exp %48 : vector<8x8xf32>
    %cst_26 = arith.constant dense<0.000000e+00> : vector<8xf32>
    %50 = vector.multi_reduction <add>, %49, %cst_26 [1] : vector<8x8xf32> to vector<8xf32>
    %51 = vector.shape_cast %50 : vector<8xf32> to vector<8x1xf32>
    %52 = tpu.reciprocal %51 {approx = true} : vector<8x1xf32> -> vector<8x1xf32>
    %53 = vector.broadcast %52 : vector<8x1xf32> to vector<8x8xf32>
    %54 = arith.mulf %49, %53 : vector<8x8xf32>
    %cst_27 = arith.constant dense<0.000000e+00> : vector<8x8xf32>
    %55 = tpu.matmul %54, %39, %cst_27 {dimension_numbers = #tpu.dot_dimension_numbers<[1], [0], [0], [1], [0, 0, 1, 1], [], []>} : vector<8x8xf32>, vector<8x8xf32>, vector<8x8xf32> -> vector<8x8xf32>
    %56 = vector.extract_strided_slice %35 {offsets = [0, 0], sizes = [8, 32], strides = [1, 1]} : vector<32x32xf32> to vector<8x32xf32>
    %cst_28 = arith.constant dense<0.000000e+00> : vector<8x32xf32>
    %57 = tpu.matmul %55, %56, %cst_28 {dimension_numbers = #tpu.dot_dimension_numbers<[1], [0], [0], [1], [0, 0, 1, 1], [], []>} : vector<8x8xf32>, vector<8x32xf32>, vector<8x32xf32> -> vector<8x32xf32>
    %58 = arith.addf %36, %57 : vector<8x32xf32>
    %59 = vector.extract_strided_slice %33 {offsets = [0, 8], sizes = [8, 8], strides = [1, 1]} : vector<8x96xf32> to vector<8x8xf32>
    %60 = vector.extract_strided_slice %33 {offsets = [0, 40], sizes = [8, 8], strides = [1, 1]} : vector<8x96xf32> to vector<8x8xf32>
    %61 = vector.extract_strided_slice %33 {offsets = [0, 72], sizes = [8, 8], strides = [1, 1]} : vector<8x96xf32> to vector<8x8xf32>
    %cst_29 = arith.constant dense<0.000000e+00> : vector<8x8xf32>
    %62 = tpu.matmul %59, %60, %cst_29 {dimension_numbers = #tpu.dot_dimension_numbers<[1], [1], [0], [0], [0, 0, 1, 0], [], []>} : vector<8x8xf32>, vector<8x8xf32>, vector<8x8xf32> -> vector<8x8xf32>
    %cst_30 = arith.constant 0.353553385 : f32
    %63 = vector.broadcast %cst_30 : f32 to vector<8x8xf32>
    %64 = arith.mulf %62, %63 : vector<8x8xf32>
    %65 = vector.broadcast %26 : vector<1x8xf32> to vector<8x8xf32>
    %66 = arith.addf %64, %65 : vector<8x8xf32>
    %cst_31 = arith.constant dense<0xFF800000> : vector<8xf32>
    %67 = vector.multi_reduction <maximumf>, %66, %cst_31 [1] : vector<8x8xf32> to vector<8xf32>
    %68 = vector.shape_cast %67 : vector<8xf32> to vector<8x1xf32>
    %69 = vector.broadcast %68 : vector<8x1xf32> to vector<8x8xf32>
    %70 = arith.subf %66, %69 : vector<8x8xf32>
    %71 = math.exp %70 : vector<8x8xf32>
    %cst_32 = arith.constant dense<0.000000e+00> : vector<8xf32>
    %72 = vector.multi_reduction <add>, %71, %cst_32 [1] : vector<8x8xf32> to vector<8xf32>
    %73 = vector.shape_cast %72 : vector<8xf32> to vector<8x1xf32>
    %74 = tpu.reciprocal %73 {approx = true} : vector<8x1xf32> -> vector<8x1xf32>
    %75 = vector.broadcast %74 : vector<8x1xf32> to vector<8x8xf32>
    %76 = arith.mulf %71, %75 : vector<8x8xf32>
    %cst_33 = arith.constant dense<0.000000e+00> : vector<8x8xf32>
    %77 = tpu.matmul %76, %61, %cst_33 {dimension_numbers = #tpu.dot_dimension_numbers<[1], [0], [0], [1], [0, 0, 1, 1], [], []>} : vector<8x8xf32>, vector<8x8xf32>, vector<8x8xf32> -> vector<8x8xf32>
    %78 = vector.extract_strided_slice %35 {offsets = [8, 0], sizes = [8, 32], strides = [1, 1]} : vector<32x32xf32> to vector<8x32xf32>
    %cst_34 = arith.constant dense<0.000000e+00> : vector<8x32xf32>
    %79 = tpu.matmul %77, %78, %cst_34 {dimension_numbers = #tpu.dot_dimension_numbers<[1], [0], [0], [1], [0, 0, 1, 1], [], []>} : vector<8x8xf32>, vector<8x32xf32>, vector<8x32xf32> -> vector<8x32xf32>
    %80 = arith.addf %58, %79 : vector<8x32xf32>
    %81 = vector.extract_strided_slice %33 {offsets = [0, 16], sizes = [8, 8], strides = [1, 1]} : vector<8x96xf32> to vector<8x8xf32>
    %82 = vector.extract_strided_slice %33 {offsets = [0, 48], sizes = [8, 8], strides = [1, 1]} : vector<8x96xf32> to vector<8x8xf32>
    %83 = vector.extract_strided_slice %33 {offsets = [0, 80], sizes = [8, 8], strides = [1, 1]} : vector<8x96xf32> to vector<8x8xf32>
    %cst_35 = arith.constant dense<0.000000e+00> : vector<8x8xf32>
    %84 = tpu.matmul %81, %82, %cst_35 {dimension_numbers = #tpu.dot_dimension_numbers<[1], [1], [0], [0], [0, 0, 1, 0], [], []>} : vector<8x8xf32>, vector<8x8xf32>, vector<8x8xf32> -> vector<8x8xf32>
    %cst_36 = arith.constant 0.353553385 : f32
    %85 = vector.broadcast %cst_36 : f32 to vector<8x8xf32>
    %86 = arith.mulf %84, %85 : vector<8x8xf32>
    %87 = vector.broadcast %26 : vector<1x8xf32> to vector<8x8xf32>
    %88 = arith.addf %86, %87 : vector<8x8xf32>
    %cst_37 = arith.constant dense<0xFF800000> : vector<8xf32>
    %89 = vector.multi_reduction <maximumf>, %88, %cst_37 [1] : vector<8x8xf32> to vector<8xf32>
    %90 = vector.shape_cast %89 : vector<8xf32> to vector<8x1xf32>
    %91 = vector.broadcast %90 : vector<8x1xf32> to vector<8x8xf32>
    %92 = arith.subf %88, %91 : vector<8x8xf32>
    %93 = math.exp %92 : vector<8x8xf32>
    %cst_38 = arith.constant dense<0.000000e+00> : vector<8xf32>
    %94 = vector.multi_reduction <add>, %93, %cst_38 [1] : vector<8x8xf32> to vector<8xf32>
    %95 = vector.shape_cast %94 : vector<8xf32> to vector<8x1xf32>
    %96 = tpu.reciprocal %95 {approx = true} : vector<8x1xf32> -> vector<8x1xf32>
    %97 = vector.broadcast %96 : vector<8x1xf32> to vector<8x8xf32>
    %98 = arith.mulf %93, %97 : vector<8x8xf32>
    %cst_39 = arith.constant dense<0.000000e+00> : vector<8x8xf32>
    %99 = tpu.matmul %98, %83, %cst_39 {dimension_numbers = #tpu.dot_dimension_numbers<[1], [0], [0], [1], [0, 0, 1, 1], [], []>} : vector<8x8xf32>, vector<8x8xf32>, vector<8x8xf32> -> vector<8x8xf32>
    %100 = vector.extract_strided_slice %35 {offsets = [16, 0], sizes = [8, 32], strides = [1, 1]} : vector<32x32xf32> to vector<8x32xf32>
    %cst_40 = arith.constant dense<0.000000e+00> : vector<8x32xf32>
    %101 = tpu.matmul %99, %100, %cst_40 {dimension_numbers = #tpu.dot_dimension_numbers<[1], [0], [0], [1], [0, 0, 1, 1], [], []>} : vector<8x8xf32>, vector<8x32xf32>, vector<8x32xf32> -> vector<8x32xf32>
    %102 = arith.addf %80, %101 : vector<8x32xf32>
    %103 = vector.extract_strided_slice %33 {offsets = [0, 24], sizes = [8, 8], strides = [1, 1]} : vector<8x96xf32> to vector<8x8xf32>
    %104 = vector.extract_strided_slice %33 {offsets = [0, 56], sizes = [8, 8], strides = [1, 1]} : vector<8x96xf32> to vector<8x8xf32>
    %105 = vector.extract_strided_slice %33 {offsets = [0, 88], sizes = [8, 8], strides = [1, 1]} : vector<8x96xf32> to vector<8x8xf32>
    %cst_41 = arith.constant dense<0.000000e+00> : vector<8x8xf32>
    %106 = tpu.matmul %103, %104, %cst_41 {dimension_numbers = #tpu.dot_dimension_numbers<[1], [1], [0], [0], [0, 0, 1, 0], [], []>} : vector<8x8xf32>, vector<8x8xf32>, vector<8x8xf32> -> vector<8x8xf32>
    %cst_42 = arith.constant 0.353553385 : f32
    %107 = vector.broadcast %cst_42 : f32 to vector<8x8xf32>
    %108 = arith.mulf %106, %107 : vector<8x8xf32>
    %109 = vector.broadcast %26 : vector<1x8xf32> to vector<8x8xf32>
    %110 = arith.addf %108, %109 : vector<8x8xf32>
    %cst_43 = arith.constant dense<0xFF800000> : vector<8xf32>
    %111 = vector.multi_reduction <maximumf>, %110, %cst_43 [1] : vector<8x8xf32> to vector<8xf32>
    %112 = vector.shape_cast %111 : vector<8xf32> to vector<8x1xf32>
    %113 = vector.broadcast %112 : vector<8x1xf32> to vector<8x8xf32>
    %114 = arith.subf %110, %113 : vector<8x8xf32>
    %115 = math.exp %114 : vector<8x8xf32>
    %cst_44 = arith.constant dense<0.000000e+00> : vector<8xf32>
    %116 = vector.multi_reduction <add>, %115, %cst_44 [1] : vector<8x8xf32> to vector<8xf32>
    %117 = vector.shape_cast %116 : vector<8xf32> to vector<8x1xf32>
    %118 = tpu.reciprocal %117 {approx = true} : vector<8x1xf32> -> vector<8x1xf32>
    %119 = vector.broadcast %118 : vector<8x1xf32> to vector<8x8xf32>
    %120 = arith.mulf %115, %119 : vector<8x8xf32>
    %cst_45 = arith.constant dense<0.000000e+00> : vector<8x8xf32>
    %121 = tpu.matmul %120, %105, %cst_45 {dimension_numbers = #tpu.dot_dimension_numbers<[1], [0], [0], [1], [0, 0, 1, 1], [], []>} : vector<8x8xf32>, vector<8x8xf32>, vector<8x8xf32> -> vector<8x8xf32>
    %122 = vector.extract_strided_slice %35 {offsets = [24, 0], sizes = [8, 32], strides = [1, 1]} : vector<32x32xf32> to vector<8x32xf32>
    %cst_46 = arith.constant dense<0.000000e+00> : vector<8x32xf32>
    %123 = tpu.matmul %121, %122, %cst_46 {dimension_numbers = #tpu.dot_dimension_numbers<[1], [0], [0], [1], [0, 0, 1, 1], [], []>} : vector<8x8xf32>, vector<8x32xf32>, vector<8x32xf32> -> vector<8x32xf32>
    %124 = arith.addf %102, %123 : vector<8x32xf32>
    %c0_47 = arith.constant 0 : index
    %c0_48 = arith.constant 0 : index
    %c0_49 = arith.constant 0 : index
    %125 = vector.load %arg8[%c0_47, %c0_48, %c0_49] : memref<2x1x32xf32, #tpu.memory_space<vmem>>, vector<1x1x32xf32>
    %126 = vector.shape_cast %125 : vector<1x1x32xf32> to vector<1x32xf32>
    %127 = vector.broadcast %126 : vector<1x32xf32> to vector<8x32xf32>
    %128 = arith.addf %124, %127 : vector<8x32xf32>
    %129 = arith.addf %128, %24 : vector<8x32xf32>
    %c0_50 = arith.constant 0 : index
    %c0_51 = arith.constant 0 : index
    %c0_52 = arith.constant 0 : index
    %130 = vector.load %arg9[%c0_50, %c0_51, %c0_52] : memref<2x1x32xf32, #tpu.memory_space<vmem>>, vector<1x1x32xf32>
    %131 = vector.shape_cast %130 : vector<1x1x32xf32> to vector<1x32xf32>
    %c0_53 = arith.constant 0 : index
    %c0_54 = arith.constant 0 : index
    %c0_55 = arith.constant 0 : index
    %132 = vector.load %arg10[%c0_53, %c0_54, %c0_55] : memref<2x1x32xf32, #tpu.memory_space<vmem>>, vector<1x1x32xf32>
    %133 = vector.shape_cast %132 : vector<1x1x32xf32> to vector<1x32xf32>
    %cst_56 = arith.constant dense<0.000000e+00> : vector<8xf32>
    %134 = vector.multi_reduction <add>, %129, %cst_56 [1] : vector<8x32xf32> to vector<8xf32>
    %135 = vector.shape_cast %134 : vector<8xf32> to vector<8x1xf32>
    %cst_57 = arith.constant 3.200000e+01 : f32
    %136 = vector.broadcast %cst_57 : f32 to vector<8x1xf32>
    %137 = arith.divf %135, %136 : vector<8x1xf32>
    %138 = vector.broadcast %137 : vector<8x1xf32> to vector<8x32xf32>
    %139 = arith.subf %129, %138 : vector<8x32xf32>
    %140 = arith.mulf %139, %139 : vector<8x32xf32>
    %cst_58 = arith.constant dense<0.000000e+00> : vector<8xf32>
    %141 = vector.multi_reduction <add>, %140, %cst_58 [1] : vector<8x32xf32> to vector<8xf32>
    %142 = vector.shape_cast %141 : vector<8xf32> to vector<8x1xf32>
    %cst_59 = arith.constant 3.200000e+01 : f32
    %143 = vector.broadcast %cst_59 : f32 to vector<8x1xf32>
    %144 = arith.divf %142, %143 : vector<8x1xf32>
    %145 = vector.broadcast %137 : vector<8x1xf32> to vector<8x32xf32>
    %146 = arith.subf %129, %145 : vector<8x32xf32>
    %cst_60 = arith.constant 9.99999974E-6 : f32
    %147 = vector.broadcast %cst_60 : f32 to vector<8x1xf32>
    %148 = arith.addf %144, %147 : vector<8x1xf32>
    %149 = math.rsqrt %148 : vector<8x1xf32>
    %150 = vector.broadcast %149 : vector<8x1xf32> to vector<8x32xf32>
    %151 = arith.mulf %146, %150 : vector<8x32xf32>
    %152 = vector.broadcast %131 : vector<1x32xf32> to vector<8x32xf32>
    %153 = arith.mulf %151, %152 : vector<8x32xf32>
    %154 = vector.broadcast %133 : vector<1x32xf32> to vector<8x32xf32>
    %155 = arith.addf %153, %154 : vector<8x32xf32>
    %c0_61 = arith.constant 0 : index
    %c0_62 = arith.constant 0 : index
    %c0_63 = arith.constant 0 : index
    %156 = vector.load %arg11[%c0_61, %c0_62, %c0_63] : memref<2x32x64xf32, #tpu.memory_space<vmem>>, vector<1x32x64xf32>
    %157 = vector.shape_cast %156 : vector<1x32x64xf32> to vector<32x64xf32>
    %cst_64 = arith.constant dense<0.000000e+00> : vector<8x64xf32>
    %158 = tpu.matmul %155, %157, %cst_64 {dimension_numbers = #tpu.dot_dimension_numbers<[1], [0], [0], [1], [0, 0, 1, 1], [], []>} : vector<8x32xf32>, vector<32x64xf32>, vector<8x64xf32> -> vector<8x64xf32>
    %c0_65 = arith.constant 0 : index
    %c0_66 = arith.constant 0 : index
    %c0_67 = arith.constant 0 : index
    %159 = vector.load %arg12[%c0_65, %c0_66, %c0_67] : memref<2x1x64xf32, #tpu.memory_space<vmem>>, vector<1x1x64xf32>
    %160 = vector.shape_cast %159 : vector<1x1x64xf32> to vector<1x64xf32>
    %161 = vector.broadcast %160 : vector<1x64xf32> to vector<8x64xf32>
    %162 = arith.addf %158, %161 : vector<8x64xf32>
    %cst_68 = arith.constant 5.000000e-01 : f32
    %163 = vector.broadcast %cst_68 : f32 to vector<8x64xf32>
    %164 = arith.mulf %163, %162 : vector<8x64xf32>
    %cst_69 = arith.constant 0.707106769 : f32
    %165 = vector.broadcast %cst_69 : f32 to vector<8x64xf32>
    %166 = arith.mulf %162, %165 : vector<8x64xf32>
    %167 = math.absf %166 : vector<8x64xf32>
    %cst_70 = arith.constant 0.327591091 : f32
    %168 = vector.broadcast %cst_70 : f32 to vector<8x64xf32>
    %169 = arith.mulf %168, %167 : vector<8x64xf32>
    %cst_71 = arith.constant 1.000000e+00 : f32
    %170 = vector.broadcast %cst_71 : f32 to vector<8x64xf32>
    %171 = arith.addf %170, %169 : vector<8x64xf32>
    %cst_72 = arith.constant 1.000000e+00 : f32
    %172 = vector.broadcast %cst_72 : f32 to vector<8x64xf32>
    %173 = arith.divf %172, %171 : vector<8x64xf32>
    %cst_73 = arith.constant 1.06140542 : f32
    %174 = vector.broadcast %cst_73 : f32 to vector<8x64xf32>
    %175 = arith.mulf %174, %173 : vector<8x64xf32>
    %cst_74 = arith.constant -1.45315206 : f32
    %176 = vector.broadcast %cst_74 : f32 to vector<8x64xf32>
    %177 = arith.addf %175, %176 : vector<8x64xf32>
    %178 = arith.mulf %177, %173 : vector<8x64xf32>
    %cst_75 = arith.constant 1.42141378 : f32
    %179 = vector.broadcast %cst_75 : f32 to vector<8x64xf32>
    %180 = arith.addf %178, %179 : vector<8x64xf32>
    %181 = arith.mulf %180, %173 : vector<8x64xf32>
    %cst_76 = arith.constant -0.284496725 : f32
    %182 = vector.broadcast %cst_76 : f32 to vector<8x64xf32>
    %183 = arith.addf %181, %182 : vector<8x64xf32>
    %184 = arith.mulf %183, %173 : vector<8x64xf32>
    %cst_77 = arith.constant 0.254829586 : f32
    %185 = vector.broadcast %cst_77 : f32 to vector<8x64xf32>
    %186 = arith.addf %184, %185 : vector<8x64xf32>
    %187 = arith.mulf %186, %173 : vector<8x64xf32>
    %188 = arith.mulf %167, %167 : vector<8x64xf32>
    %cst_78 = arith.constant 0.000000e+00 : f32
    %189 = vector.broadcast %cst_78 : f32 to vector<8x64xf32>
    %190 = arith.subf %189, %188 : vector<8x64xf32>
    %191 = math.exp %190 : vector<8x64xf32>
    %192 = arith.mulf %187, %191 : vector<8x64xf32>
    %cst_79 = arith.constant 1.000000e+00 : f32
    %193 = vector.broadcast %cst_79 : f32 to vector<8x64xf32>
    %194 = arith.subf %193, %192 : vector<8x64xf32>
    %cst_80 = arith.constant 0.000000e+00 : f32
    %195 = vector.broadcast %cst_80 : f32 to vector<8x64xf32>
    %196 = arith.cmpf olt, %166, %195 : vector<8x64xf32>
    %cst_81 = arith.constant 0.000000e+00 : f32
    %197 = vector.broadcast %cst_81 : f32 to vector<8x64xf32>
    %198 = arith.subf %197, %194 : vector<8x64xf32>
    %199 = arith.select %196, %198, %194 : vector<8x64xi1>, vector<8x64xf32>
    %cst_82 = arith.constant 1.000000e+00 : f32
    %200 = vector.broadcast %cst_82 : f32 to vector<8x64xf32>
    %201 = arith.addf %200, %199 : vector<8x64xf32>
    %202 = arith.mulf %164, %201 : vector<8x64xf32>
    %c0_83 = arith.constant 0 : index
    %c0_84 = arith.constant 0 : index
    %c0_85 = arith.constant 0 : index
    %203 = vector.load %arg13[%c0_83, %c0_84, %c0_85] : memref<2x64x32xf32, #tpu.memory_space<vmem>>, vector<1x64x32xf32>
    %204 = vector.shape_cast %203 : vector<1x64x32xf32> to vector<64x32xf32>
    %cst_86 = arith.constant dense<0.000000e+00> : vector<8x32xf32>
    %205 = tpu.matmul %202, %204, %cst_86 {dimension_numbers = #tpu.dot_dimension_numbers<[1], [0], [0], [1], [0, 0, 1, 1], [], []>} : vector<8x64xf32>, vector<64x32xf32>, vector<8x32xf32> -> vector<8x32xf32>
    %c0_87 = arith.constant 0 : index
    %c0_88 = arith.constant 0 : index
    %c0_89 = arith.constant 0 : index
    %206 = vector.load %arg14[%c0_87, %c0_88, %c0_89] : memref<2x1x32xf32, #tpu.memory_space<vmem>>, vector<1x1x32xf32>
    %207 = vector.shape_cast %206 : vector<1x1x32xf32> to vector<1x32xf32>
    %208 = vector.broadcast %207 : vector<1x32xf32> to vector<8x32xf32>
    %209 = arith.addf %205, %208 : vector<8x32xf32>
    %210 = arith.addf %209, %155 : vector<8x32xf32>
    %c0_90 = arith.constant 0 : index
    %c0_91 = arith.constant 0 : index
    %c0_92 = arith.constant 0 : index
    %211 = vector.load %arg15[%c0_90, %c0_91, %c0_92] : memref<2x1x32xf32, #tpu.memory_space<vmem>>, vector<1x1x32xf32>
    %212 = vector.shape_cast %211 : vector<1x1x32xf32> to vector<1x32xf32>
    %c0_93 = arith.constant 0 : index
    %c0_94 = arith.constant 0 : index
    %c0_95 = arith.constant 0 : index
    %213 = vector.load %arg16[%c0_93, %c0_94, %c0_95] : memref<2x1x32xf32, #tpu.memory_space<vmem>>, vector<1x1x32xf32>
    %214 = vector.shape_cast %213 : vector<1x1x32xf32> to vector<1x32xf32>
    %cst_96 = arith.constant dense<0.000000e+00> : vector<8xf32>
    %215 = vector.multi_reduction <add>, %210, %cst_96 [1] : vector<8x32xf32> to vector<8xf32>
    %216 = vector.shape_cast %215 : vector<8xf32> to vector<8x1xf32>
    %cst_97 = arith.constant 3.200000e+01 : f32
    %217 = vector.broadcast %cst_97 : f32 to vector<8x1xf32>
    %218 = arith.divf %216, %217 : vector<8x1xf32>
    %219 = vector.broadcast %218 : vector<8x1xf32> to vector<8x32xf32>
    %220 = arith.subf %210, %219 : vector<8x32xf32>
    %221 = arith.mulf %220, %220 : vector<8x32xf32>
    %cst_98 = arith.constant dense<0.000000e+00> : vector<8xf32>
    %222 = vector.multi_reduction <add>, %221, %cst_98 [1] : vector<8x32xf32> to vector<8xf32>
    %223 = vector.shape_cast %222 : vector<8xf32> to vector<8x1xf32>
    %cst_99 = arith.constant 3.200000e+01 : f32
    %224 = vector.broadcast %cst_99 : f32 to vector<8x1xf32>
    %225 = arith.divf %223, %224 : vector<8x1xf32>
    %226 = vector.broadcast %218 : vector<8x1xf32> to vector<8x32xf32>
    %227 = arith.subf %210, %226 : vector<8x32xf32>
    %cst_100 = arith.constant 9.99999974E-6 : f32
    %228 = vector.broadcast %cst_100 : f32 to vector<8x1xf32>
    %229 = arith.addf %225, %228 : vector<8x1xf32>
    %230 = math.rsqrt %229 : vector<8x1xf32>
    %231 = vector.broadcast %230 : vector<8x1xf32> to vector<8x32xf32>
    %232 = arith.mulf %227, %231 : vector<8x32xf32>
    %233 = vector.broadcast %212 : vector<1x32xf32> to vector<8x32xf32>
    %234 = arith.mulf %232, %233 : vector<8x32xf32>
    %235 = vector.broadcast %214 : vector<1x32xf32> to vector<8x32xf32>
    %236 = arith.addf %234, %235 : vector<8x32xf32>
    %c1 = arith.constant 1 : index
    %c0_101 = arith.constant 0 : index
    %c0_102 = arith.constant 0 : index
    %237 = vector.load %arg5[%c1, %c0_101, %c0_102] : memref<2x32x96xf32, #tpu.memory_space<vmem>>, vector<1x32x96xf32>
    %238 = vector.shape_cast %237 : vector<1x32x96xf32> to vector<32x96xf32>
    %cst_103 = arith.constant dense<0.000000e+00> : vector<8x96xf32>
    %239 = tpu.matmul %236, %238, %cst_103 {dimension_numbers = #tpu.dot_dimension_numbers<[1], [0], [0], [1], [0, 0, 1, 1], [], []>} : vector<8x32xf32>, vector<32x96xf32>, vector<8x96xf32> -> vector<8x96xf32>
    %c1_104 = arith.constant 1 : index
    %c0_105 = arith.constant 0 : index
    %c0_106 = arith.constant 0 : index
    %240 = vector.load %arg6[%c1_104, %c0_105, %c0_106] : memref<2x1x96xf32, #tpu.memory_space<vmem>>, vector<1x1x96xf32>
    %241 = vector.shape_cast %240 : vector<1x1x96xf32> to vector<1x96xf32>
    %242 = vector.broadcast %241 : vector<1x96xf32> to vector<8x96xf32>
    %243 = arith.addf %239, %242 : vector<8x96xf32>
    %c1_107 = arith.constant 1 : index
    %c0_108 = arith.constant 0 : index
    %c0_109 = arith.constant 0 : index
    %244 = vector.load %arg7[%c1_107, %c0_108, %c0_109] : memref<2x32x32xf32, #tpu.memory_space<vmem>>, vector<1x32x32xf32>
    %245 = vector.shape_cast %244 : vector<1x32x32xf32> to vector<32x32xf32>
    %cst_110 = arith.constant 0.000000e+00 : f32
    %246 = vector.broadcast %cst_110 : f32 to vector<8x32xf32>
    %247 = vector.extract_strided_slice %243 {offsets = [0, 0], sizes = [8, 8], strides = [1, 1]} : vector<8x96xf32> to vector<8x8xf32>
    %248 = vector.extract_strided_slice %243 {offsets = [0, 32], sizes = [8, 8], strides = [1, 1]} : vector<8x96xf32> to vector<8x8xf32>
    %249 = vector.extract_strided_slice %243 {offsets = [0, 64], sizes = [8, 8], strides = [1, 1]} : vector<8x96xf32> to vector<8x8xf32>
    %cst_111 = arith.constant dense<0.000000e+00> : vector<8x8xf32>
    %250 = tpu.matmul %247, %248, %cst_111 {dimension_numbers = #tpu.dot_dimension_numbers<[1], [1], [0], [0], [0, 0, 1, 0], [], []>} : vector<8x8xf32>, vector<8x8xf32>, vector<8x8xf32> -> vector<8x8xf32>
    %cst_112 = arith.constant 0.353553385 : f32
    %251 = vector.broadcast %cst_112 : f32 to vector<8x8xf32>
    %252 = arith.mulf %250, %251 : vector<8x8xf32>
    %253 = vector.broadcast %26 : vector<1x8xf32> to vector<8x8xf32>
    %254 = arith.addf %252, %253 : vector<8x8xf32>
    %cst_113 = arith.constant dense<0xFF800000> : vector<8xf32>
    %255 = vector.multi_reduction <maximumf>, %254, %cst_113 [1] : vector<8x8xf32> to vector<8xf32>
    %256 = vector.shape_cast %255 : vector<8xf32> to vector<8x1xf32>
    %257 = vector.broadcast %256 : vector<8x1xf32> to vector<8x8xf32>
    %258 = arith.subf %254, %257 : vector<8x8xf32>
    %259 = math.exp %258 : vector<8x8xf32>
    %cst_114 = arith.constant dense<0.000000e+00> : vector<8xf32>
    %260 = vector.multi_reduction <add>, %259, %cst_114 [1] : vector<8x8xf32> to vector<8xf32>
    %261 = vector.shape_cast %260 : vector<8xf32> to vector<8x1xf32>
    %262 = tpu.reciprocal %261 {approx = true} : vector<8x1xf32> -> vector<8x1xf32>
    %263 = vector.broadcast %262 : vector<8x1xf32> to vector<8x8xf32>
    %264 = arith.mulf %259, %263 : vector<8x8xf32>
    %cst_115 = arith.constant dense<0.000000e+00> : vector<8x8xf32>
    %265 = tpu.matmul %264, %249, %cst_115 {dimension_numbers = #tpu.dot_dimension_numbers<[1], [0], [0], [1], [0, 0, 1, 1], [], []>} : vector<8x8xf32>, vector<8x8xf32>, vector<8x8xf32> -> vector<8x8xf32>
    %266 = vector.extract_strided_slice %245 {offsets = [0, 0], sizes = [8, 32], strides = [1, 1]} : vector<32x32xf32> to vector<8x32xf32>
    %cst_116 = arith.constant dense<0.000000e+00> : vector<8x32xf32>
    %267 = tpu.matmul %265, %266, %cst_116 {dimension_numbers = #tpu.dot_dimension_numbers<[1], [0], [0], [1], [0, 0, 1, 1], [], []>} : vector<8x8xf32>, vector<8x32xf32>, vector<8x32xf32> -> vector<8x32xf32>
    %268 = arith.addf %246, %267 : vector<8x32xf32>
    %269 = vector.extract_strided_slice %243 {offsets = [0, 8], sizes = [8, 8], strides = [1, 1]} : vector<8x96xf32> to vector<8x8xf32>
    %270 = vector.extract_strided_slice %243 {offsets = [0, 40], sizes = [8, 8], strides = [1, 1]} : vector<8x96xf32> to vector<8x8xf32>
    %271 = vector.extract_strided_slice %243 {offsets = [0, 72], sizes = [8, 8], strides = [1, 1]} : vector<8x96xf32> to vector<8x8xf32>
    %cst_117 = arith.constant dense<0.000000e+00> : vector<8x8xf32>
    %272 = tpu.matmul %269, %270, %cst_117 {dimension_numbers = #tpu.dot_dimension_numbers<[1], [1], [0], [0], [0, 0, 1, 0], [], []>} : vector<8x8xf32>, vector<8x8xf32>, vector<8x8xf32> -> vector<8x8xf32>
    %cst_118 = arith.constant 0.353553385 : f32
    %273 = vector.broadcast %cst_118 : f32 to vector<8x8xf32>
    %274 = arith.mulf %272, %273 : vector<8x8xf32>
    %275 = vector.broadcast %26 : vector<1x8xf32> to vector<8x8xf32>
    %276 = arith.addf %274, %275 : vector<8x8xf32>
    %cst_119 = arith.constant dense<0xFF800000> : vector<8xf32>
    %277 = vector.multi_reduction <maximumf>, %276, %cst_119 [1] : vector<8x8xf32> to vector<8xf32>
    %278 = vector.shape_cast %277 : vector<8xf32> to vector<8x1xf32>
    %279 = vector.broadcast %278 : vector<8x1xf32> to vector<8x8xf32>
    %280 = arith.subf %276, %279 : vector<8x8xf32>
    %281 = math.exp %280 : vector<8x8xf32>
    %cst_120 = arith.constant dense<0.000000e+00> : vector<8xf32>
    %282 = vector.multi_reduction <add>, %281, %cst_120 [1] : vector<8x8xf32> to vector<8xf32>
    %283 = vector.shape_cast %282 : vector<8xf32> to vector<8x1xf32>
    %284 = tpu.reciprocal %283 {approx = true} : vector<8x1xf32> -> vector<8x1xf32>
    %285 = vector.broadcast %284 : vector<8x1xf32> to vector<8x8xf32>
    %286 = arith.mulf %281, %285 : vector<8x8xf32>
    %cst_121 = arith.constant dense<0.000000e+00> : vector<8x8xf32>
    %287 = tpu.matmul %286, %271, %cst_121 {dimension_numbers = #tpu.dot_dimension_numbers<[1], [0], [0], [1], [0, 0, 1, 1], [], []>} : vector<8x8xf32>, vector<8x8xf32>, vector<8x8xf32> -> vector<8x8xf32>
    %288 = vector.extract_strided_slice %245 {offsets = [8, 0], sizes = [8, 32], strides = [1, 1]} : vector<32x32xf32> to vector<8x32xf32>
    %cst_122 = arith.constant dense<0.000000e+00> : vector<8x32xf32>
    %289 = tpu.matmul %287, %288, %cst_122 {dimension_numbers = #tpu.dot_dimension_numbers<[1], [0], [0], [1], [0, 0, 1, 1], [], []>} : vector<8x8xf32>, vector<8x32xf32>, vector<8x32xf32> -> vector<8x32xf32>
    %290 = arith.addf %268, %289 : vector<8x32xf32>
    %291 = vector.extract_strided_slice %243 {offsets = [0, 16], sizes = [8, 8], strides = [1, 1]} : vector<8x96xf32> to vector<8x8xf32>
    %292 = vector.extract_strided_slice %243 {offsets = [0, 48], sizes = [8, 8], strides = [1, 1]} : vector<8x96xf32> to vector<8x8xf32>
    %293 = vector.extract_strided_slice %243 {offsets = [0, 80], sizes = [8, 8], strides = [1, 1]} : vector<8x96xf32> to vector<8x8xf32>
    %cst_123 = arith.constant dense<0.000000e+00> : vector<8x8xf32>
    %294 = tpu.matmul %291, %292, %cst_123 {dimension_numbers = #tpu.dot_dimension_numbers<[1], [1], [0], [0], [0, 0, 1, 0], [], []>} : vector<8x8xf32>, vector<8x8xf32>, vector<8x8xf32> -> vector<8x8xf32>
    %cst_124 = arith.constant 0.353553385 : f32
    %295 = vector.broadcast %cst_124 : f32 to vector<8x8xf32>
    %296 = arith.mulf %294, %295 : vector<8x8xf32>
    %297 = vector.broadcast %26 : vector<1x8xf32> to vector<8x8xf32>
    %298 = arith.addf %296, %297 : vector<8x8xf32>
    %cst_125 = arith.constant dense<0xFF800000> : vector<8xf32>
    %299 = vector.multi_reduction <maximumf>, %298, %cst_125 [1] : vector<8x8xf32> to vector<8xf32>
    %300 = vector.shape_cast %299 : vector<8xf32> to vector<8x1xf32>
    %301 = vector.broadcast %300 : vector<8x1xf32> to vector<8x8xf32>
    %302 = arith.subf %298, %301 : vector<8x8xf32>
    %303 = math.exp %302 : vector<8x8xf32>
    %cst_126 = arith.constant dense<0.000000e+00> : vector<8xf32>
    %304 = vector.multi_reduction <add>, %303, %cst_126 [1] : vector<8x8xf32> to vector<8xf32>
    %305 = vector.shape_cast %304 : vector<8xf32> to vector<8x1xf32>
    %306 = tpu.reciprocal %305 {approx = true} : vector<8x1xf32> -> vector<8x1xf32>
    %307 = vector.broadcast %306 : vector<8x1xf32> to vector<8x8xf32>
    %308 = arith.mulf %303, %307 : vector<8x8xf32>
    %cst_127 = arith.constant dense<0.000000e+00> : vector<8x8xf32>
    %309 = tpu.matmul %308, %293, %cst_127 {dimension_numbers = #tpu.dot_dimension_numbers<[1], [0], [0], [1], [0, 0, 1, 1], [], []>} : vector<8x8xf32>, vector<8x8xf32>, vector<8x8xf32> -> vector<8x8xf32>
    %310 = vector.extract_strided_slice %245 {offsets = [16, 0], sizes = [8, 32], strides = [1, 1]} : vector<32x32xf32> to vector<8x32xf32>
    %cst_128 = arith.constant dense<0.000000e+00> : vector<8x32xf32>
    %311 = tpu.matmul %309, %310, %cst_128 {dimension_numbers = #tpu.dot_dimension_numbers<[1], [0], [0], [1], [0, 0, 1, 1], [], []>} : vector<8x8xf32>, vector<8x32xf32>, vector<8x32xf32> -> vector<8x32xf32>
    %312 = arith.addf %290, %311 : vector<8x32xf32>
    %313 = vector.extract_strided_slice %243 {offsets = [0, 24], sizes = [8, 8], strides = [1, 1]} : vector<8x96xf32> to vector<8x8xf32>
    %314 = vector.extract_strided_slice %243 {offsets = [0, 56], sizes = [8, 8], strides = [1, 1]} : vector<8x96xf32> to vector<8x8xf32>
    %315 = vector.extract_strided_slice %243 {offsets = [0, 88], sizes = [8, 8], strides = [1, 1]} : vector<8x96xf32> to vector<8x8xf32>
    %cst_129 = arith.constant dense<0.000000e+00> : vector<8x8xf32>
    %316 = tpu.matmul %313, %314, %cst_129 {dimension_numbers = #tpu.dot_dimension_numbers<[1], [1], [0], [0], [0, 0, 1, 0], [], []>} : vector<8x8xf32>, vector<8x8xf32>, vector<8x8xf32> -> vector<8x8xf32>
    %cst_130 = arith.constant 0.353553385 : f32
    %317 = vector.broadcast %cst_130 : f32 to vector<8x8xf32>
    %318 = arith.mulf %316, %317 : vector<8x8xf32>
    %319 = vector.broadcast %26 : vector<1x8xf32> to vector<8x8xf32>
    %320 = arith.addf %318, %319 : vector<8x8xf32>
    %cst_131 = arith.constant dense<0xFF800000> : vector<8xf32>
    %321 = vector.multi_reduction <maximumf>, %320, %cst_131 [1] : vector<8x8xf32> to vector<8xf32>
    %322 = vector.shape_cast %321 : vector<8xf32> to vector<8x1xf32>
    %323 = vector.broadcast %322 : vector<8x1xf32> to vector<8x8xf32>
    %324 = arith.subf %320, %323 : vector<8x8xf32>
    %325 = math.exp %324 : vector<8x8xf32>
    %cst_132 = arith.constant dense<0.000000e+00> : vector<8xf32>
    %326 = vector.multi_reduction <add>, %325, %cst_132 [1] : vector<8x8xf32> to vector<8xf32>
    %327 = vector.shape_cast %326 : vector<8xf32> to vector<8x1xf32>
    %328 = tpu.reciprocal %327 {approx = true} : vector<8x1xf32> -> vector<8x1xf32>
    %329 = vector.broadcast %328 : vector<8x1xf32> to vector<8x8xf32>
    %330 = arith.mulf %325, %329 : vector<8x8xf32>
    %cst_133 = arith.constant dense<0.000000e+00> : vector<8x8xf32>
    %331 = tpu.matmul %330, %315, %cst_133 {dimension_numbers = #tpu.dot_dimension_numbers<[1], [0], [0], [1], [0, 0, 1, 1], [], []>} : vector<8x8xf32>, vector<8x8xf32>, vector<8x8xf32> -> vector<8x8xf32>
    %332 = vector.extract_strided_slice %245 {offsets = [24, 0], sizes = [8, 32], strides = [1, 1]} : vector<32x32xf32> to vector<8x32xf32>
    %cst_134 = arith.constant dense<0.000000e+00> : vector<8x32xf32>
    %333 = tpu.matmul %331, %332, %cst_134 {dimension_numbers = #tpu.dot_dimension_numbers<[1], [0], [0], [1], [0, 0, 1, 1], [], []>} : vector<8x8xf32>, vector<8x32xf32>, vector<8x32xf32> -> vector<8x32xf32>
    %334 = arith.addf %312, %333 : vector<8x32xf32>
    %c1_135 = arith.constant 1 : index
    %c0_136 = arith.constant 0 : index
    %c0_137 = arith.constant 0 : index
    %335 = vector.load %arg8[%c1_135, %c0_136, %c0_137] : memref<2x1x32xf32, #tpu.memory_space<vmem>>, vector<1x1x32xf32>
    %336 = vector.shape_cast %335 : vector<1x1x32xf32> to vector<1x32xf32>
    %337 = vector.broadcast %336 : vector<1x32xf32> to vector<8x32xf32>
    %338 = arith.addf %334, %337 : vector<8x32xf32>
    %339 = arith.addf %338, %236 : vector<8x32xf32>
    %c1_138 = arith.constant 1 : index
    %c0_139 = arith.constant 0 : index
    %c0_140 = arith.constant 0 : index
    %340 = vector.load %arg9[%c1_138, %c0_139, %c0_140] : memref<2x1x32xf32, #tpu.memory_space<vmem>>, vector<1x1x32xf32>
    %341 = vector.shape_cast %340 : vector<1x1x32xf32> to vector<1x32xf32>
    %c1_141 = arith.constant 1 : index
    %c0_142 = arith.constant 0 : index
    %c0_143 = arith.constant 0 : index
    %342 = vector.load %arg10[%c1_141, %c0_142, %c0_143] : memref<2x1x32xf32, #tpu.memory_space<vmem>>, vector<1x1x32xf32>
    %343 = vector.shape_cast %342 : vector<1x1x32xf32> to vector<1x32xf32>
    %cst_144 = arith.constant dense<0.000000e+00> : vector<8xf32>
    %344 = vector.multi_reduction <add>, %339, %cst_144 [1] : vector<8x32xf32> to vector<8xf32>
    %345 = vector.shape_cast %344 : vector<8xf32> to vector<8x1xf32>
    %cst_145 = arith.constant 3.200000e+01 : f32
    %346 = vector.broadcast %cst_145 : f32 to vector<8x1xf32>
    %347 = arith.divf %345, %346 : vector<8x1xf32>
    %348 = vector.broadcast %347 : vector<8x1xf32> to vector<8x32xf32>
    %349 = arith.subf %339, %348 : vector<8x32xf32>
    %350 = arith.mulf %349, %349 : vector<8x32xf32>
    %cst_146 = arith.constant dense<0.000000e+00> : vector<8xf32>
    %351 = vector.multi_reduction <add>, %350, %cst_146 [1] : vector<8x32xf32> to vector<8xf32>
    %352 = vector.shape_cast %351 : vector<8xf32> to vector<8x1xf32>
    %cst_147 = arith.constant 3.200000e+01 : f32
    %353 = vector.broadcast %cst_147 : f32 to vector<8x1xf32>
    %354 = arith.divf %352, %353 : vector<8x1xf32>
    %355 = vector.broadcast %347 : vector<8x1xf32> to vector<8x32xf32>
    %356 = arith.subf %339, %355 : vector<8x32xf32>
    %cst_148 = arith.constant 9.99999974E-6 : f32
    %357 = vector.broadcast %cst_148 : f32 to vector<8x1xf32>
    %358 = arith.addf %354, %357 : vector<8x1xf32>
    %359 = math.rsqrt %358 : vector<8x1xf32>
    %360 = vector.broadcast %359 : vector<8x1xf32> to vector<8x32xf32>
    %361 = arith.mulf %356, %360 : vector<8x32xf32>
    %362 = vector.broadcast %341 : vector<1x32xf32> to vector<8x32xf32>
    %363 = arith.mulf %361, %362 : vector<8x32xf32>
    %364 = vector.broadcast %343 : vector<1x32xf32> to vector<8x32xf32>
    %365 = arith.addf %363, %364 : vector<8x32xf32>
    %c1_149 = arith.constant 1 : index
    %c0_150 = arith.constant 0 : index
    %c0_151 = arith.constant 0 : index
    %366 = vector.load %arg11[%c1_149, %c0_150, %c0_151] : memref<2x32x64xf32, #tpu.memory_space<vmem>>, vector<1x32x64xf32>
    %367 = vector.shape_cast %366 : vector<1x32x64xf32> to vector<32x64xf32>
    %cst_152 = arith.constant dense<0.000000e+00> : vector<8x64xf32>
    %368 = tpu.matmul %365, %367, %cst_152 {dimension_numbers = #tpu.dot_dimension_numbers<[1], [0], [0], [1], [0, 0, 1, 1], [], []>} : vector<8x32xf32>, vector<32x64xf32>, vector<8x64xf32> -> vector<8x64xf32>
    %c1_153 = arith.constant 1 : index
    %c0_154 = arith.constant 0 : index
    %c0_155 = arith.constant 0 : index
    %369 = vector.load %arg12[%c1_153, %c0_154, %c0_155] : memref<2x1x64xf32, #tpu.memory_space<vmem>>, vector<1x1x64xf32>
    %370 = vector.shape_cast %369 : vector<1x1x64xf32> to vector<1x64xf32>
    %371 = vector.broadcast %370 : vector<1x64xf32> to vector<8x64xf32>
    %372 = arith.addf %368, %371 : vector<8x64xf32>
    %cst_156 = arith.constant 5.000000e-01 : f32
    %373 = vector.broadcast %cst_156 : f32 to vector<8x64xf32>
    %374 = arith.mulf %373, %372 : vector<8x64xf32>
    %cst_157 = arith.constant 0.707106769 : f32
    %375 = vector.broadcast %cst_157 : f32 to vector<8x64xf32>
    %376 = arith.mulf %372, %375 : vector<8x64xf32>
    %377 = math.absf %376 : vector<8x64xf32>
    %cst_158 = arith.constant 0.327591091 : f32
    %378 = vector.broadcast %cst_158 : f32 to vector<8x64xf32>
    %379 = arith.mulf %378, %377 : vector<8x64xf32>
    %cst_159 = arith.constant 1.000000e+00 : f32
    %380 = vector.broadcast %cst_159 : f32 to vector<8x64xf32>
    %381 = arith.addf %380, %379 : vector<8x64xf32>
    %cst_160 = arith.constant 1.000000e+00 : f32
    %382 = vector.broadcast %cst_160 : f32 to vector<8x64xf32>
    %383 = arith.divf %382, %381 : vector<8x64xf32>
    %cst_161 = arith.constant 1.06140542 : f32
    %384 = vector.broadcast %cst_161 : f32 to vector<8x64xf32>
    %385 = arith.mulf %384, %383 : vector<8x64xf32>
    %cst_162 = arith.constant -1.45315206 : f32
    %386 = vector.broadcast %cst_162 : f32 to vector<8x64xf32>
    %387 = arith.addf %385, %386 : vector<8x64xf32>
    %388 = arith.mulf %387, %383 : vector<8x64xf32>
    %cst_163 = arith.constant 1.42141378 : f32
    %389 = vector.broadcast %cst_163 : f32 to vector<8x64xf32>
    %390 = arith.addf %388, %389 : vector<8x64xf32>
    %391 = arith.mulf %390, %383 : vector<8x64xf32>
    %cst_164 = arith.constant -0.284496725 : f32
    %392 = vector.broadcast %cst_164 : f32 to vector<8x64xf32>
    %393 = arith.addf %391, %392 : vector<8x64xf32>
    %394 = arith.mulf %393, %383 : vector<8x64xf32>
    %cst_165 = arith.constant 0.254829586 : f32
    %395 = vector.broadcast %cst_165 : f32 to vector<8x64xf32>
    %396 = arith.addf %394, %395 : vector<8x64xf32>
    %397 = arith.mulf %396, %383 : vector<8x64xf32>
    %398 = arith.mulf %377, %377 : vector<8x64xf32>
    %cst_166 = arith.constant 0.000000e+00 : f32
    %399 = vector.broadcast %cst_166 : f32 to vector<8x64xf32>
    %400 = arith.subf %399, %398 : vector<8x64xf32>
    %401 = math.exp %400 : vector<8x64xf32>
    %402 = arith.mulf %397, %401 : vector<8x64xf32>
    %cst_167 = arith.constant 1.000000e+00 : f32
    %403 = vector.broadcast %cst_167 : f32 to vector<8x64xf32>
    %404 = arith.subf %403, %402 : vector<8x64xf32>
    %cst_168 = arith.constant 0.000000e+00 : f32
    %405 = vector.broadcast %cst_168 : f32 to vector<8x64xf32>
    %406 = arith.cmpf olt, %376, %405 : vector<8x64xf32>
    %cst_169 = arith.constant 0.000000e+00 : f32
    %407 = vector.broadcast %cst_169 : f32 to vector<8x64xf32>
    %408 = arith.subf %407, %404 : vector<8x64xf32>
    %409 = arith.select %406, %408, %404 : vector<8x64xi1>, vector<8x64xf32>
    %cst_170 = arith.constant 1.000000e+00 : f32
    %410 = vector.broadcast %cst_170 : f32 to vector<8x64xf32>
    %411 = arith.addf %410, %409 : vector<8x64xf32>
    %412 = arith.mulf %374, %411 : vector<8x64xf32>
    %c1_171 = arith.constant 1 : index
    %c0_172 = arith.constant 0 : index
    %c0_173 = arith.constant 0 : index
    %413 = vector.load %arg13[%c1_171, %c0_172, %c0_173] : memref<2x64x32xf32, #tpu.memory_space<vmem>>, vector<1x64x32xf32>
    %414 = vector.shape_cast %413 : vector<1x64x32xf32> to vector<64x32xf32>
    %cst_174 = arith.constant dense<0.000000e+00> : vector<8x32xf32>
    %415 = tpu.matmul %412, %414, %cst_174 {dimension_numbers = #tpu.dot_dimension_numbers<[1], [0], [0], [1], [0, 0, 1, 1], [], []>} : vector<8x64xf32>, vector<64x32xf32>, vector<8x32xf32> -> vector<8x32xf32>
    %c1_175 = arith.constant 1 : index
    %c0_176 = arith.constant 0 : index
    %c0_177 = arith.constant 0 : index
    %416 = vector.load %arg14[%c1_175, %c0_176, %c0_177] : memref<2x1x32xf32, #tpu.memory_space<vmem>>, vector<1x1x32xf32>
    %417 = vector.shape_cast %416 : vector<1x1x32xf32> to vector<1x32xf32>
    %418 = vector.broadcast %417 : vector<1x32xf32> to vector<8x32xf32>
    %419 = arith.addf %415, %418 : vector<8x32xf32>
    %420 = arith.addf %419, %365 : vector<8x32xf32>
    %c1_178 = arith.constant 1 : index
    %c0_179 = arith.constant 0 : index
    %c0_180 = arith.constant 0 : index
    %421 = vector.load %arg15[%c1_178, %c0_179, %c0_180] : memref<2x1x32xf32, #tpu.memory_space<vmem>>, vector<1x1x32xf32>
    %422 = vector.shape_cast %421 : vector<1x1x32xf32> to vector<1x32xf32>
    %c1_181 = arith.constant 1 : index
    %c0_182 = arith.constant 0 : index
    %c0_183 = arith.constant 0 : index
    %423 = vector.load %arg16[%c1_181, %c0_182, %c0_183] : memref<2x1x32xf32, #tpu.memory_space<vmem>>, vector<1x1x32xf32>
    %424 = vector.shape_cast %423 : vector<1x1x32xf32> to vector<1x32xf32>
    %cst_184 = arith.constant dense<0.000000e+00> : vector<8xf32>
    %425 = vector.multi_reduction <add>, %420, %cst_184 [1] : vector<8x32xf32> to vector<8xf32>
    %426 = vector.shape_cast %425 : vector<8xf32> to vector<8x1xf32>
    %cst_185 = arith.constant 3.200000e+01 : f32
    %427 = vector.broadcast %cst_185 : f32 to vector<8x1xf32>
    %428 = arith.divf %426, %427 : vector<8x1xf32>
    %429 = vector.broadcast %428 : vector<8x1xf32> to vector<8x32xf32>
    %430 = arith.subf %420, %429 : vector<8x32xf32>
    %431 = arith.mulf %430, %430 : vector<8x32xf32>
    %cst_186 = arith.constant dense<0.000000e+00> : vector<8xf32>
    %432 = vector.multi_reduction <add>, %431, %cst_186 [1] : vector<8x32xf32> to vector<8xf32>
    %433 = vector.shape_cast %432 : vector<8xf32> to vector<8x1xf32>
    %cst_187 = arith.constant 3.200000e+01 : f32
    %434 = vector.broadcast %cst_187 : f32 to vector<8x1xf32>
    %435 = arith.divf %433, %434 : vector<8x1xf32>
    %436 = vector.broadcast %428 : vector<8x1xf32> to vector<8x32xf32>
    %437 = arith.subf %420, %436 : vector<8x32xf32>
    %cst_188 = arith.constant 9.99999974E-6 : f32
    %438 = vector.broadcast %cst_188 : f32 to vector<8x1xf32>
    %439 = arith.addf %435, %438 : vector<8x1xf32>
    %440 = math.rsqrt %439 : vector<8x1xf32>
    %441 = vector.broadcast %440 : vector<8x1xf32> to vector<8x32xf32>
    %442 = arith.mulf %437, %441 : vector<8x32xf32>
    %443 = vector.broadcast %422 : vector<1x32xf32> to vector<8x32xf32>
    %444 = arith.mulf %442, %443 : vector<8x32xf32>
    %445 = vector.broadcast %424 : vector<1x32xf32> to vector<8x32xf32>
    %446 = arith.addf %444, %445 : vector<8x32xf32>
    %447 = vector.extract_strided_slice %446 {offsets = [0, 0], sizes = [1, 32], strides = [1, 1]} : vector<8x32xf32> to vector<1x32xf32>
    %c0_189 = arith.constant 0 : index
    %c0_190 = arith.constant 0 : index
    %448 = vector.load %arg17[%c0_189, %c0_190] : memref<32x1xf32, #tpu.memory_space<vmem>>, vector<32x1xf32>
    %cst_191 = arith.constant dense<0.000000e+00> : vector<1x1xf32>
    %449 = tpu.matmul %447, %448, %cst_191 {dimension_numbers = #tpu.dot_dimension_numbers<[1], [0], [0], [1], [0, 0, 1, 1], [], []>} : vector<1x32xf32>, vector<32x1xf32>, vector<1x1xf32> -> vector<1x1xf32>
    %c0_192 = arith.constant 0 : index
    %c0_193 = arith.constant 0 : index
    %450 = vector.load %arg18[%c0_192, %c0_193] : memref<1x1xf32, #tpu.memory_space<vmem>>, vector<1x1xf32>
    %451 = arith.addf %449, %450 : vector<1x1xf32>
    %c0_194 = arith.constant 0 : index
    %c0_195 = arith.constant 0 : index
    %c0_196 = arith.constant 0 : index
    %452 = vector.load %arg19[%c0_194, %c0_195, %c0_196] : memref<1x1x1xf32, #tpu.memory_space<vmem>>, vector<1x1x1xf32>
    %453 = vector.shape_cast %452 : vector<1x1x1xf32> to vector<1x1xf32>
    %454 = vector.shape_cast %451 : vector<1x1xf32> to vector<1x1x1xf32>
    tpu.vector_store %arg19[%c0_194, %c0_195, %c0_196], %454 {strides = array<i32>} : memref<1x1x1xf32, #tpu.memory_space<vmem>>, vector<1x1x1xf32>,
    return
  }
  func.func @transform_0(%arg0: i32) -> (i32, i32) {
    %c0_i32 = arith.constant 0 : i32
    %c0_i32_0 = arith.constant 0 : i32
    return %arg0, %c0_i32 : i32, i32
  }
  func.func @transform_1(%arg0: i32) -> (i32, i32, i32) {
    %c0_i32 = arith.constant 0 : i32
    %c0_i32_0 = arith.constant 0 : i32
    %c0_i32_1 = arith.constant 0 : i32
    return %arg0, %c0_i32, %c0_i32_0 : i32, i32, i32
  }
  func.func @transform_2(%arg0: i32) -> (i32, i32) {
    %c0_i32 = arith.constant 0 : i32
    %c0_i32_0 = arith.constant 0 : i32
    %c0_i32_1 = arith.constant 0 : i32
    return %c0_i32, %c0_i32_0 : i32, i32
  }
  func.func @transform_3(%arg0: i32) -> (i32, i32) {
    %c0_i32 = arith.constant 0 : i32
    %c0_i32_0 = arith.constant 0 : i32
    %c0_i32_1 = arith.constant 0 : i32
    return %c0_i32, %c0_i32_0 : i32, i32
  }
  func.func @transform_4(%arg0: i32) -> (i32, i32, i32) {
    %c0_i32 = arith.constant 0 : i32
    %c0_i32_0 = arith.constant 0 : i32
    %c0_i32_1 = arith.constant 0 : i32
    %c0_i32_2 = arith.constant 0 : i32
    return %c0_i32, %c0_i32_0, %c0_i32_1 : i32, i32, i32
  }
  func.func @transform_5(%arg0: i32) -> (i32, i32, i32) {
    %c0_i32 = arith.constant 0 : i32
    %c0_i32_0 = arith.constant 0 : i32
    %c0_i32_1 = arith.constant 0 : i32
    %c0_i32_2 = arith.constant 0 : i32
    return %c0_i32, %c0_i32_0, %c0_i32_1 : i32, i32, i32
  }
  func.func @transform_6(%arg0: i32) -> (i32, i32, i32) {
    %c0_i32 = arith.constant 0 : i32
    %c0_i32_0 = arith.constant 0 : i32
    %c0_i32_1 = arith.constant 0 : i32
    %c0_i32_2 = arith.constant 0 : i32
    return %c0_i32, %c0_i32_0, %c0_i32_1 : i32, i32, i32
  }
  func.func @transform_7(%arg0: i32) -> (i32, i32, i32) {
    %c0_i32 = arith.constant 0 : i32
    %c0_i32_0 = arith.constant 0 : i32
    %c0_i32_1 = arith.constant 0 : i32
    %c0_i32_2 = arith.constant 0 : i32
    return %c0_i32, %c0_i32_0, %c0_i32_1 : i32, i32, i32
  }
  func.func @transform_8(%arg0: i32) -> (i32, i32, i32) {
    %c0_i32 = arith.constant 0 : i32
    %c0_i32_0 = arith.constant 0 : i32
    %c0_i32_1 = arith.constant 0 : i32
    %c0_i32_2 = arith.constant 0 : i32
    return %c0_i32, %c0_i32_0, %c0_i32_1 : i32, i32, i32
  }
  func.func @transform_9(%arg0: i32) -> (i32, i32, i32) {
    %c0_i32 = arith.constant 0 : i32
    %c0_i32_0 = arith.constant 0 : i32
    %c0_i32_1 = arith.constant 0 : i32
    %c0_i32_2 = arith.constant 0 : i32
    return %c0_i32, %c0_i32_0, %c0_i32_1 : i32, i32, i32
  }
  func.func @transform_10(%arg0: i32) -> (i32, i32, i32) {
    %c0_i32 = arith.constant 0 : i32
    %c0_i32_0 = arith.constant 0 : i32
    %c0_i32_1 = arith.constant 0 : i32
    %c0_i32_2 = arith.constant 0 : i32
    return %c0_i32, %c0_i32_0, %c0_i32_1 : i32, i32, i32
  }
  func.func @transform_11(%arg0: i32) -> (i32, i32, i32) {
    %c0_i32 = arith.constant 0 : i32
    %c0_i32_0 = arith.constant 0 : i32
    %c0_i32_1 = arith.constant 0 : i32
    %c0_i32_2 = arith.constant 0 : i32
    return %c0_i32, %c0_i32_0, %c0_i32_1 : i32, i32, i32
  }
  func.func @transform_12(%arg0: i32) -> (i32, i32, i32) {
    %c0_i32 = arith.constant 0 : i32
    %c0_i32_0 = arith.constant 0 : i32
    %c0_i32_1 = arith.constant 0 : i32
    %c0_i32_2 = arith.constant 0 : i32
    return %c0_i32, %c0_i32_0, %c0_i32_1 : i32, i32, i32
  }
  func.func @transform_13(%arg0: i32) -> (i32, i32, i32) {
    %c0_i32 = arith.constant 0 : i32
    %c0_i32_0 = arith.constant 0 : i32
    %c0_i32_1 = arith.constant 0 : i32
    %c0_i32_2 = arith.constant 0 : i32
    return %c0_i32, %c0_i32_0, %c0_i32_1 : i32, i32, i32
  }
  func.func @transform_14(%arg0: i32) -> (i32, i32, i32) {
    %c0_i32 = arith.constant 0 : i32
    %c0_i32_0 = arith.constant 0 : i32
    %c0_i32_1 = arith.constant 0 : i32
    %c0_i32_2 = arith.constant 0 : i32
    return %c0_i32, %c0_i32_0, %c0_i32_1 : i32, i32, i32
  }
  func.func @transform_15(%arg0: i32) -> (i32, i32, i32) {
    %c0_i32 = arith.constant 0 : i32
    %c0_i32_0 = arith.constant 0 : i32
    %c0_i32_1 = arith.constant 0 : i32
    %c0_i32_2 = arith.constant 0 : i32
    return %c0_i32, %c0_i32_0, %c0_i32_1 : i32, i32, i32
  }
  func.func @transform_16(%arg0: i32) -> (i32, i32) {
    %c0_i32 = arith.constant 0 : i32
    %c0_i32_0 = arith.constant 0 : i32
    %c0_i32_1 = arith.constant 0 : i32
    return %c0_i32, %c0_i32_0 : i32, i32
  }
  func.func @transform_17(%arg0: i32) -> (i32, i32) {
    %c0_i32 = arith.constant 0 : i32
    %c0_i32_0 = arith.constant 0 : i32
    %c0_i32_1 = arith.constant 0 : i32
    return %c0_i32, %c0_i32_0 : i32, i32
  }
  func.func @transform_18(%arg0: i32) -> (i32, i32, i32) {
    %c0_i32 = arith.constant 0 : i32
    %c0_i32_0 = arith.constant 0 : i32
    %c0_i32_1 = arith.constant 0 : i32
    return %arg0, %c0_i32, %c0_i32_0 : i32, i32, i32
  }
}

</mosaic_0001>

<llo_original>
// kernel: bert_small_forward.1
$region0: #{bert_small_forward.1}
  #allocation0 [shape = 'u32[]', space=smem, size = 0x4, offset = 0x4, fixed_abs, tag = 'smem constant byte address 0x4 - core index']
  #allocation1 [shape = 'u32[144,128]{1,0:T(1,128)}', space=vmem, size = 0x12000, scoped, tag = 'internal scratch']
  #allocation2 [shape = 'f32[1,1]{1,0:T(1,128)S(1)}', space=vmem, size = 0x200, scoped, tag = 'scoped memory for bert_small_forward.1']
  %s0 = inlined_call_operand.vmem [shape: f32[16,32], index: 0, kind: input, shape index: {}]
  %s1 = inlined_call_operand.vmem [shape: f32[2,1,8], index: 1, kind: input, shape index: {}]
  %s2 = inlined_call_operand.vmem [shape: f32[1,32], index: 2, kind: input, shape index: {}]
  %s3 = inlined_call_operand.vmem [shape: f32[1,32], index: 3, kind: input, shape index: {}]
  %s4 = inlined_call_operand.vmem [shape: f32[2,32,96], index: 4, kind: input, shape index: {}]
  %s5 = inlined_call_operand.vmem [shape: f32[2,1,96], index: 5, kind: input, shape index: {}]
  %s6 = inlined_call_operand.vmem [shape: f32[2,32,32], index: 6, kind: input, shape index: {}]
  %s7 = inlined_call_operand.vmem [shape: f32[2,1,32], index: 7, kind: input, shape index: {}]
  %s8 = inlined_call_operand.vmem [shape: f32[2,1,32], index: 8, kind: input, shape index: {}]
  %s9 = inlined_call_operand.vmem [shape: f32[2,1,32], index: 9, kind: input, shape index: {}]
  %s10 = inlined_call_operand.vmem [shape: f32[2,32,64], index: 10, kind: input, shape index: {}]
  %s11 = inlined_call_operand.vmem [shape: f32[2,1,64], index: 11, kind: input, shape index: {}]
  %s12 = inlined_call_operand.vmem [shape: f32[2,64,32], index: 12, kind: input, shape index: {}]
  %s13 = inlined_call_operand.vmem [shape: f32[2,1,32], index: 13, kind: input, shape index: {}]
  %s14 = inlined_call_operand.vmem [shape: f32[2,1,32], index: 14, kind: input, shape index: {}]
  %s15 = inlined_call_operand.vmem [shape: f32[2,1,32], index: 15, kind: input, shape index: {}]
  %s16 = inlined_call_operand.vmem [shape: f32[32,1], index: 16, kind: input, shape index: {}]
  %s17 = inlined_call_operand.<no memory space> [shape: f32[1,1], index: 17, kind: input, shape index: {}]
  %s18 = inlined_call_operand.vmem [shape: f32[2,1,1], index: 18, kind: output, shape index: {}]
  %s19 = sld [smem:[#allocation0]]
  $region105: #{bert_small_forward.1} parent=0
    _
  %s21 = ssub.s32 1, %s19
  %s22 = scalar_select 0, %s21, %s19
  %v23 = vstv %s17
  %24 = vst [vmem:[#allocation2] sm:$0x1] %v23
  loop: start=0, step=1, limit=4
  $region2: #{bert_small_forward.1} parent=0 // loop_pre_header
    _
  $region3: #{bert_small_forward.1} parent=0 // loop_header
    %s26 = sphi 0, %s30
    %p27 = scmp.ge.s32.totalorder %s26, 4
    %s36 = sphi 0, %s38
    %s39 = sphi 0, %s36
    %s40 = sphi 0, %s39
    %s56 = sphi 0, %s40
    %s62 = sphi 0, %s64
    %s65 = sphi 0, %s62
    %s66 = sphi 0, %s65
    %s82 = sphi 0, %s66
    %s86 = sphi 0, %s86
    %s88 = sphi 0, %s86
    %s89 = sphi 0, %s88
    %s103 = sphi 0, %s89
    %s107 = sphi 0, %s107
    %s109 = sphi 0, %s107
    %s110 = sphi 0, %s109
    %s124 = sphi 0, %s110
    %s128 = sphi 0, %s128
    %s130 = sphi 0, %s128
    %s131 = sphi 0, %s130
    %s145 = sphi 0, %s131
    %s149 = sphi 0, %s149
    %s151 = sphi 0, %s149
    %s152 = sphi 0, %s151
    %s166 = sphi 0, %s152
    %s170 = sphi 0, %s170
    %s172 = sphi 0, %s170
    %s173 = sphi 0, %s172
    %s187 = sphi 0, %s173
    %s191 = sphi 0, %s191
    %s193 = sphi 0, %s191
    %s194 = sphi 0, %s193
    %s208 = sphi 0, %s194
    %s212 = sphi 0, %s212
    %s214 = sphi 0, %s212
    %s215 = sphi 0, %s214
    %s229 = sphi 0, %s215
    %s233 = sphi 0, %s233
    %s235 = sphi 0, %s233
    %s236 = sphi 0, %s235
    %s250 = sphi 0, %s236
    %s254 = sphi 0, %s254
    %s256 = sphi 0, %s254
    %s257 = sphi 0, %s256
    %s271 = sphi 0, %s257
    %s275 = sphi 0, %s275
    %s277 = sphi 0, %s275
    %s278 = sphi 0, %s277
    %s292 = sphi 0, %s278
    %s296 = sphi 0, %s296
    %s298 = sphi 0, %s296
    %s299 = sphi 0, %s298
    %s313 = sphi 0, %s299
    %s317 = sphi 0, %s317
    %s319 = sphi 0, %s317
    %s320 = sphi 0, %s319
    %s334 = sphi 0, %s320
    %s338 = sphi 0, %s338
    %s340 = sphi 0, %s338
    %s341 = sphi 0, %s340
    %s355 = sphi 0, %s341
    %s359 = sphi 0, %s359
    %s361 = sphi 0, %s359
    %s362 = sphi 0, %s361
    %s376 = sphi 0, %s362
    %s380 = sphi 0, %s380
    %s382 = sphi 0, %s380
    %s383 = sphi 0, %s382
    %s397 = sphi 0, %s383
    %s401 = sphi 0, %s401
    %s403 = sphi 0, %s401
    %s404 = sphi 0, %s403
    %s418 = sphi 0, %s404
    %s424 = sphi 0, %s426
    %s427 = sphi 0, %s424
    %s428 = sphi 0, %s427
    %s444 = sphi 0, %s428
  $region4: #{bert_small_forward.1} parent=0 // loop_header_branch
    %29 = sbr.rel (%p27) target = $region8
  $region5: #{bert_small_forward.1} parent=0 // loop_body
    %s31 = ssub.s32 %s26, 1
    %s32 = ssub.s32 %s26, 2
    %s33 = sadd.s32 %s26, 1
    %s34 = ssub.s32 %s26, %s33
    %p35 = scmp.eq.s32.totalorder %s34, 0
    %s37 = sadd.s32 %s36, 1
    %s38 = scalar_select %p35, %s36, %s37
    %p41 = pneg %p35
    %p42 = scmp.eq.s32.totalorder %s26, 1
    %p43 = por %p41, %p42
    %p44 = scmp.ne.s32.totalorder %s36, %s39
    %p45 = scmp.eq.s32.totalorder %s26, 0
    %p46 = por %p44, %p45
    %p47 = scmp.ne.s32.totalorder %s36, %s39
    %p48 = scmp.eq.s32.totalorder %s31, 1
    %p49 = por %p47, %p48
    %p50 = scmp.ne.s32.totalorder %s39, %s40
    %p51 = scmp.eq.s32.totalorder %s31, 0
    %p52 = por %p50, %p51
    %p53 = scmp.ne.s32.totalorder %s39, %s40
    %p54 = scmp.eq.s32.totalorder %s32, 1
    %p55 = por %p53, %p54
    %p57 = scmp.ne.s32.totalorder %s40, %s56
    %p58 = scmp.eq.s32.totalorder %s32, 0
    %p59 = por %p57, %p58
    %s60 = ssub.s32 %s26, %s33
    %p61 = scmp.eq.s32.totalorder %s60, 0
    %s63 = sadd.s32 %s62, 1
    %s64 = scalar_select %p61, %s62, %s63
    %p67 = pneg %p61
    %p68 = scmp.eq.s32.totalorder %s26, 1
    %p69 = por %p67, %p68
    %p70 = scmp.ne.s32.totalorder %s62, %s65
    %p71 = scmp.eq.s32.totalorder %s26, 0
    %p72 = por %p70, %p71
    %p73 = scmp.ne.s32.totalorder %s62, %s65
    %p74 = scmp.eq.s32.totalorder %s31, 1
    %p75 = por %p73, %p74
    %p76 = scmp.ne.s32.totalorder %s65, %s66
    %p77 = scmp.eq.s32.totalorder %s31, 0
    %p78 = por %p76, %p77
    %p79 = scmp.ne.s32.totalorder %s65, %s66
    %p80 = scmp.eq.s32.totalorder %s32, 1
    %p81 = por %p79, %p80
    %p83 = scmp.ne.s32.totalorder %s66, %s82
    %p84 = scmp.eq.s32.totalorder %s32, 0
    %p85 = por %p83, %p84
    %s87 = sadd.s32 %s86, 1
    %p90 = scmp.eq.s32.totalorder %s26, 1
    %p91 = scmp.ne.s32.totalorder %s86, %s88
    %p92 = scmp.eq.s32.totalorder %s26, 0
    %p93 = por %p91, %p92
    %p94 = scmp.ne.s32.totalorder %s86, %s88
    %p95 = scmp.eq.s32.totalorder %s31, 1
    %p96 = por %p94, %p95
    %p97 = scmp.ne.s32.totalorder %s88, %s89
    %p98 = scmp.eq.s32.totalorder %s31, 0
    %p99 = por %p97, %p98
    %p100 = scmp.ne.s32.totalorder %s88, %s89
    %p101 = scmp.eq.s32.totalorder %s32, 1
    %p102 = por %p100, %p101
    %p104 = scmp.ne.s32.totalorder %s89, %s103
    %p105 = scmp.eq.s32.totalorder %s32, 0
    %p106 = por %p104, %p105
    %s108 = sadd.s32 %s107, 1
    %p111 = scmp.eq.s32.totalorder %s26, 1
    %p112 = scmp.ne.s32.totalorder %s107, %s109
    %p113 = scmp.eq.s32.totalorder %s26, 0
    %p114 = por %p112, %p113
    %p115 = scmp.ne.s32.totalorder %s107, %s109
    %p116 = scmp.eq.s32.totalorder %s31, 1
    %p117 = por %p115, %p116
    %p118 = scmp.ne.s32.totalorder %s109, %s110
    %p119 = scmp.eq.s32.totalorder %s31, 0
    %p120 = por %p118, %p119
    %p121 = scmp.ne.s32.totalorder %s109, %s110
    %p122 = scmp.eq.s32.totalorder %s32, 1
    %p123 = por %p121, %p122
    %p125 = scmp.ne.s32.totalorder %s110, %s124
    %p126 = scmp.eq.s32.totalorder %s32, 0
    %p127 = por %p125, %p126
    %s129 = sadd.s32 %s128, 1
    %p132 = scmp.eq.s32.totalorder %s26, 1
    %p133 = scmp.ne.s32.totalorder %s128, %s130
    %p134 = scmp.eq.s32.totalorder %s26, 0
    %p135 = por %p133, %p134
    %p136 = scmp.ne.s32.totalorder %s128, %s130
    %p137 = scmp.eq.s32.totalorder %s31, 1
    %p138 = por %p136, %p137
    %p139 = scmp.ne.s32.totalorder %s130, %s131
    %p140 = scmp.eq.s32.totalorder %s31, 0
    %p141 = por %p139, %p140
    %p142 = scmp.ne.s32.totalorder %s130, %s131
    %p143 = scmp.eq.s32.totalorder %s32, 1
    %p144 = por %p142, %p143
    %p146 = scmp.ne.s32.totalorder %s131, %s145
    %p147 = scmp.eq.s32.totalorder %s32, 0
    %p148 = por %p146, %p147
    %s150 = sadd.s32 %s149, 1
    %p153 = scmp.eq.s32.totalorder %s26, 1
    %p154 = scmp.ne.s32.totalorder %s149, %s151
    %p155 = scmp.eq.s32.totalorder %s26, 0
    %p156 = por %p154, %p155
    %p157 = scmp.ne.s32.totalorder %s149, %s151
    %p158 = scmp.eq.s32.totalorder %s31, 1
    %p159 = por %p157, %p158
    %p160 = scmp.ne.s32.totalorder %s151, %s152
    %p161 = scmp.eq.s32.totalorder %s31, 0
    %p162 = por %p160, %p161
    %p163 = scmp.ne.s32.totalorder %s151, %s152
    %p164 = scmp.eq.s32.totalorder %s32, 1
    %p165 = por %p163, %p164
    %p167 = scmp.ne.s32.totalorder %s152, %s166
    %p168 = scmp.eq.s32.totalorder %s32, 0
    %p169 = por %p167, %p168
    %s171 = sadd.s32 %s170, 1
    %p174 = scmp.eq.s32.totalorder %s26, 1
    %p175 = scmp.ne.s32.totalorder %s170, %s172
    %p176 = scmp.eq.s32.totalorder %s26, 0
    %p177 = por %p175, %p176
    %p178 = scmp.ne.s32.totalorder %s170, %s172
    %p179 = scmp.eq.s32.totalorder %s31, 1
    %p180 = por %p178, %p179
    %p181 = scmp.ne.s32.totalorder %s172, %s173
    %p182 = scmp.eq.s32.totalorder %s31, 0
    %p183 = por %p181, %p182
    %p184 = scmp.ne.s32.totalorder %s172, %s173
    %p185 = scmp.eq.s32.totalorder %s32, 1
    %p186 = por %p184, %p185
    %p188 = scmp.ne.s32.totalorder %s173, %s187
    %p189 = scmp.eq.s32.totalorder %s32, 0
    %p190 = por %p188, %p189
    %s192 = sadd.s32 %s191, 1
    %p195 = scmp.eq.s32.totalorder %s26, 1
    %p196 = scmp.ne.s32.totalorder %s191, %s193
    %p197 = scmp.eq.s32.totalorder %s26, 0
    %p198 = por %p196, %p197
    %p199 = scmp.ne.s32.totalorder %s191, %s193
    %p200 = scmp.eq.s32.totalorder %s31, 1
    %p201 = por %p199, %p200
    %p202 = scmp.ne.s32.totalorder %s193, %s194
    %p203 = scmp.eq.s32.totalorder %s31, 0
    %p204 = por %p202, %p203
    %p205 = scmp.ne.s32.totalorder %s193, %s194
    %p206 = scmp.eq.s32.totalorder %s32, 1
    %p207 = por %p205, %p206
    %p209 = scmp.ne.s32.totalorder %s194, %s208
    %p210 = scmp.eq.s32.totalorder %s32, 0
    %p211 = por %p209, %p210
    %s213 = sadd.s32 %s212, 1
    %p216 = scmp.eq.s32.totalorder %s26, 1
    %p217 = scmp.ne.s32.totalorder %s212, %s214
    %p218 = scmp.eq.s32.totalorder %s26, 0
    %p219 = por %p217, %p218
    %p220 = scmp.ne.s32.totalorder %s212, %s214
    %p221 = scmp.eq.s32.totalorder %s31, 1
    %p222 = por %p220, %p221
    %p223 = scmp.ne.s32.totalorder %s214, %s215
    %p224 = scmp.eq.s32.totalorder %s31, 0
    %p225 = por %p223, %p224
    %p226 = scmp.ne.s32.totalorder %s214, %s215
    %p227 = scmp.eq.s32.totalorder %s32, 1
    %p228 = por %p226, %p227
    %p230 = scmp.ne.s32.totalorder %s215, %s229
    %p231 = scmp.eq.s32.totalorder %s32, 0
    %p232 = por %p230, %p231
    %s234 = sadd.s32 %s233, 1
    %p237 = scmp.eq.s32.totalorder %s26, 1
    %p238 = scmp.ne.s32.totalorder %s233, %s235
    %p239 = scmp.eq.s32.totalorder %s26, 0
    %p240 = por %p238, %p239
    %p241 = scmp.ne.s32.totalorder %s233, %s235
    %p242 = scmp.eq.s32.totalorder %s31, 1
    %p243 = por %p241, %p242
    %p244 = scmp.ne.s32.totalorder %s235, %s236
    %p245 = scmp.eq.s32.totalorder %s31, 0
    %p246 = por %p244, %p245
    %p247 = scmp.ne.s32.totalorder %s235, %s236
    %p248 = scmp.eq.s32.totalorder %s32, 1
    %p249 = por %p247, %p248
    %p251 = scmp.ne.s32.totalorder %s236, %s250
    %p252 = scmp.eq.s32.totalorder %s32, 0
    %p253 = por %p251, %p252
    %s255 = sadd.s32 %s254, 1
    %p258 = scmp.eq.s32.totalorder %s26, 1
    %p259 = scmp.ne.s32.totalorder %s254, %s256
    %p260 = scmp.eq.s32.totalorder %s26, 0
    %p261 = por %p259, %p260
    %p262 = scmp.ne.s32.totalorder %s254, %s256
    %p263 = scmp.eq.s32.totalorder %s31, 1
    %p264 = por %p262, %p263
    %p265 = scmp.ne.s32.totalorder %s256, %s257
    %p266 = scmp.eq.s32.totalorder %s31, 0
    %p267 = por %p265, %p266
    %p268 = scmp.ne.s32.totalorder %s256, %s257
    %p269 = scmp.eq.s32.totalorder %s32, 1
    %p270 = por %p268, %p269
    %p272 = scmp.ne.s32.totalorder %s257, %s271
    %p273 = scmp.eq.s32.totalorder %s32, 0
    %p274 = por %p272, %p273
    %s276 = sadd.s32 %s275, 1
    %p279 = scmp.eq.s32.totalorder %s26, 1
    %p280 = scmp.ne.s32.totalorder %s275, %s277
    %p281 = scmp.eq.s32.totalorder %s26, 0
    %p282 = por %p280, %p281
    %p283 = scmp.ne.s32.totalorder %s275, %s277
    %p284 = scmp.eq.s32.totalorder %s31, 1
    %p285 = por %p283, %p284
    %p286 = scmp.ne.s32.totalorder %s277, %s278
    %p287 = scmp.eq.s32.totalorder %s31, 0
    %p288 = por %p286, %p287
    %p289 = scmp.ne.s32.totalorder %s277, %s278
    %p290 = scmp.eq.s32.totalorder %s32, 1
    %p291 = por %p289, %p290
    %p293 = scmp.ne.s32.totalorder %s278, %s292
    %p294 = scmp.eq.s32.totalorder %s32, 0
    %p295 = por %p293, %p294
    %s297 = sadd.s32 %s296, 1
    %p300 = scmp.eq.s32.totalorder %s26, 1
    %p301 = scmp.ne.s32.totalorder %s296, %s298
    %p302 = scmp.eq.s32.totalorder %s26, 0
    %p303 = por %p301, %p302
    %p304 = scmp.ne.s32.totalorder %s296, %s298
    %p305 = scmp.eq.s32.totalorder %s31, 1
    %p306 = por %p304, %p305
    %p307 = scmp.ne.s32.totalorder %s298, %s299
    %p308 = scmp.eq.s32.totalorder %s31, 0
    %p309 = por %p307, %p308
    %p310 = scmp.ne.s32.totalorder %s298, %s299
    %p311 = scmp.eq.s32.totalorder %s32, 1
    %p312 = por %p310, %p311
    %p314 = scmp.ne.s32.totalorder %s299, %s313
    %p315 = scmp.eq.s32.totalorder %s32, 0
    %p316 = por %p314, %p315
    %s318 = sadd.s32 %s317, 1
    %p321 = scmp.eq.s32.totalorder %s26, 1
    %p322 = scmp.ne.s32.totalorder %s317, %s319
    %p323 = scmp.eq.s32.totalorder %s26, 0
    %p324 = por %p322, %p323
    %p325 = scmp.ne.s32.totalorder %s317, %s319
    %p326 = scmp.eq.s32.totalorder %s31, 1
    %p327 = por %p325, %p326
    %p328 = scmp.ne.s32.totalorder %s319, %s320
    %p329 = scmp.eq.s32.totalorder %s31, 0
    %p330 = por %p328, %p329
    %p331 = scmp.ne.s32.totalorder %s319, %s320
    %p332 = scmp.eq.s32.totalorder %s32, 1
    %p333 = por %p331, %p332
    %p335 = scmp.ne.s32.totalorder %s320, %s334
    %p336 = scmp.eq.s32.totalorder %s32, 0
    %p337 = por %p335, %p336
    %s339 = sadd.s32 %s338, 1
    %p342 = scmp.eq.s32.totalorder %s26, 1
    %p343 = scmp.ne.s32.totalorder %s338, %s340
    %p344 = scmp.eq.s32.totalorder %s26, 0
    %p345 = por %p343, %p344
    %p346 = scmp.ne.s32.totalorder %s338, %s340
    %p347 = scmp.eq.s32.totalorder %s31, 1
    %p348 = por %p346, %p347
    %p349 = scmp.ne.s32.totalorder %s340, %s341
    %p350 = scmp.eq.s32.totalorder %s31, 0
    %p351 = por %p349, %p350
    %p352 = scmp.ne.s32.totalorder %s340, %s341
    %p353 = scmp.eq.s32.totalorder %s32, 1
    %p354 = por %p352, %p353
    %p356 = scmp.ne.s32.totalorder %s341, %s355
    %p357 = scmp.eq.s32.totalorder %s32, 0
    %p358 = por %p356, %p357
    %s360 = sadd.s32 %s359, 1
    %p363 = scmp.eq.s32.totalorder %s26, 1
    %p364 = scmp.ne.s32.totalorder %s359, %s361
    %p365 = scmp.eq.s32.totalorder %s26, 0
    %p366 = por %p364, %p365
    %p367 = scmp.ne.s32.totalorder %s359, %s361
    %p368 = scmp.eq.s32.totalorder %s31, 1
    %p369 = por %p367, %p368
    %p370 = scmp.ne.s32.totalorder %s361, %s362
    %p371 = scmp.eq.s32.totalorder %s31, 0
    %p372 = por %p370, %p371
    %p373 = scmp.ne.s32.totalorder %s361, %s362
    %p374 = scmp.eq.s32.totalorder %s32, 1
    %p375 = por %p373, %p374
    %p377 = scmp.ne.s32.totalorder %s362, %s376
    %p378 = scmp.eq.s32.totalorder %s32, 0
    %p379 = por %p377, %p378
    %s381 = sadd.s32 %s380, 1
    %p384 = scmp.eq.s32.totalorder %s26, 1
    %p385 = scmp.ne.s32.totalorder %s380, %s382
    %p386 = scmp.eq.s32.totalorder %s26, 0
    %p387 = por %p385, %p386
    %p388 = scmp.ne.s32.totalorder %s380, %s382
    %p389 = scmp.eq.s32.totalorder %s31, 1
    %p390 = por %p388, %p389
    %p391 = scmp.ne.s32.totalorder %s382, %s383
    %p392 = scmp.eq.s32.totalorder %s31, 0
    %p393 = por %p391, %p392
    %p394 = scmp.ne.s32.totalorder %s382, %s383
    %p395 = scmp.eq.s32.totalorder %s32, 1
    %p396 = por %p394, %p395
    %p398 = scmp.ne.s32.totalorder %s383, %s397
    %p399 = scmp.eq.s32.totalorder %s32, 0
    %p400 = por %p398, %p399
    %s402 = sadd.s32 %s401, 1
    %p405 = scmp.eq.s32.totalorder %s26, 1
    %p406 = scmp.ne.s32.totalorder %s401, %s403
    %p407 = scmp.eq.s32.totalorder %s26, 0
    %p408 = por %p406, %p407
    %p409 = scmp.ne.s32.totalorder %s401, %s403
    %p410 = scmp.eq.s32.totalorder %s31, 1
    %p411 = por %p409, %p410
    %p412 = scmp.ne.s32.totalorder %s403, %s404
    %p413 = scmp.eq.s32.totalorder %s31, 0
    %p414 = por %p412, %p413
    %p415 = scmp.ne.s32.totalorder %s403, %s404
    %p416 = scmp.eq.s32.totalorder %s32, 1
    %p417 = por %p415, %p416
    %p419 = scmp.ne.s32.totalorder %s404, %s418
    %p420 = scmp.eq.s32.totalorder %s32, 0
    %p421 = por %p419, %p420
    %s422 = ssub.s32 %s26, %s33
    %p423 = scmp.eq.s32.totalorder %s422, 0
    %s425 = sadd.s32 %s424, 1
    %s426 = scalar_select %p423, %s424, %s425
    %p429 = pneg %p423
    %p430 = scmp.eq.s32.totalorder %s26, 1
    %p431 = por %p429, %p430
    %p432 = scmp.ne.s32.totalorder %s424, %s427
    %p433 = scmp.eq.s32.totalorder %s26, 0
    %p434 = por %p432, %p433
    %p435 = scmp.ne.s32.totalorder %s424, %s427
    %p436 = scmp.eq.s32.totalorder %s31, 1
    %p437 = por %p435, %p436
    %p438 = scmp.ne.s32.totalorder %s427, %s428
    %p439 = scmp.eq.s32.totalorder %s31, 0
    %p440 = por %p438, %p439
    %p441 = scmp.ne.s32.totalorder %s427, %s428
    %p442 = scmp.eq.s32.totalorder %s32, 1
    %p443 = por %p441, %p442
    %p445 = scmp.ne.s32.totalorder %s428, %s444
    %p446 = scmp.eq.s32.totalorder %s32, 0
    %p447 = por %p445, %p446
    %p448 = scmp.le.s32.totalorder 1, %s26
    %p449 = scmp.lt.s32.totalorder %s26, 3
    %p450 = pnand %p448, %p449
    %p451 = pneg %p450
    // Predicated region
    $region9: #{bert_small_forward.1} parent=5 // pred_check
      _
    $region10: #{bert_small_forward.1} parent=5 // pred_check_branch
      %453 = sbr.rel (%p450) target = $region12
    $region11: #{bert_small_forward.1} parent=5 // pred_region
      %s454 = ssub.s32 %s26, 1
      // Predicated region
      $region13: #{bert_small_forward.1} parent=11 // pred_check
        %p455 = pneg %p99
      $region14: #{bert_small_forward.1} parent=11 // pred_check_branch
        %457 = sbr.rel (%p455) target = $region16
      $region15: #{bert_small_forward.1} parent=11 // pred_region
        _
      $region16: #{bert_small_forward.1} parent=11 // pred_fallthru
        _
      // Predicated region
      $region17: #{bert_small_forward.1} parent=11 // pred_check
        %p458 = pneg %p120
      $region18: #{bert_small_forward.1} parent=11 // pred_check_branch
        %460 = sbr.rel (%p458) target = $region20
      $region19: #{bert_small_forward.1} parent=11 // pred_region
        _
      $region20: #{bert_small_forward.1} parent=11 // pred_fallthru
        _
      // Predicated region
      $region21: #{bert_small_forward.1} parent=11 // pred_check
        %p461 = pneg %p141
      $region22: #{bert_small_forward.1} parent=11 // pred_check_branch
        %463 = sbr.rel (%p461) target = $region24
      $region23: #{bert_small_forward.1} parent=11 // pred_region
        _
      $region24: #{bert_small_forward.1} parent=11 // pred_fallthru
        _
      // Predicated region
      $region25: #{bert_small_forward.1} parent=11 // pred_check
        %p464 = pneg %p162
      $region26: #{bert_small_forward.1} parent=11 // pred_check_branch
        %466 = sbr.rel (%p464) target = $region28
      $region27: #{bert_small_forward.1} parent=11 // pred_region
        _
      $region28: #{bert_small_forward.1} parent=11 // pred_fallthru
        _
      // Predicated region
      $region29: #{bert_small_forward.1} parent=11 // pred_check
        %p467 = pneg %p183
      $region30: #{bert_small_forward.1} parent=11 // pred_check_branch
        %469 = sbr.rel (%p467) target = $region32
      $region31: #{bert_small_forward.1} parent=11 // pred_region
        _
      $region32: #{bert_small_forward.1} parent=11 // pred_fallthru
        _
      // Predicated region
      $region33: #{bert_small_forward.1} parent=11 // pred_check
        %p470 = pneg %p204
      $region34: #{bert_small_forward.1} parent=11 // pred_check_branch
        %472 = sbr.rel (%p470) target = $region36
      $region35: #{bert_small_forward.1} parent=11 // pred_region
        _
      $region36: #{bert_small_forward.1} parent=11 // pred_fallthru
        _
      // Predicated region
      $region37: #{bert_small_forward.1} parent=11 // pred_check
        %p473 = pneg %p225
      $region38: #{bert_small_forward.1} parent=11 // pred_check_branch
        %475 = sbr.rel (%p473) target = $region40
      $region39: #{bert_small_forward.1} parent=11 // pred_region
        _
      $region40: #{bert_small_forward.1} parent=11 // pred_fallthru
        _
      // Predicated region
      $region41: #{bert_small_forward.1} parent=11 // pred_check
        %p476 = pneg %p246
      $region42: #{bert_small_forward.1} parent=11 // pred_check_branch
        %478 = sbr.rel (%p476) target = $region44
      $region43: #{bert_small_forward.1} parent=11 // pred_region
        _
      $region44: #{bert_small_forward.1} parent=11 // pred_fallthru
        _
      // Predicated region
      $region45: #{bert_small_forward.1} parent=11 // pred_check
        %p479 = pneg %p267
      $region46: #{bert_small_forward.1} parent=11 // pred_check_branch
        %481 = sbr.rel (%p479) target = $region48
      $region47: #{bert_small_forward.1} parent=11 // pred_region
        _
      $region48: #{bert_small_forward.1} parent=11 // pred_fallthru
        _
      // Predicated region
      $region49: #{bert_small_forward.1} parent=11 // pred_check
        %p482 = pneg %p288
      $region50: #{bert_small_forward.1} parent=11 // pred_check_branch
        %484 = sbr.rel (%p482) target = $region52
      $region51: #{bert_small_forward.1} parent=11 // pred_region
        _
      $region52: #{bert_small_forward.1} parent=11 // pred_fallthru
        _
      // Predicated region
      $region53: #{bert_small_forward.1} parent=11 // pred_check
        %p485 = pneg %p309
      $region54: #{bert_small_forward.1} parent=11 // pred_check_branch
        %487 = sbr.rel (%p485) target = $region56
      $region55: #{bert_small_forward.1} parent=11 // pred_region
        _
      $region56: #{bert_small_forward.1} parent=11 // pred_fallthru
        _
      // Predicated region
      $region57: #{bert_small_forward.1} parent=11 // pred_check
        %p488 = pneg %p330
      $region58: #{bert_small_forward.1} parent=11 // pred_check_branch
        %490 = sbr.rel (%p488) target = $region60
      $region59: #{bert_small_forward.1} parent=11 // pred_region
        _
      $region60: #{bert_small_forward.1} parent=11 // pred_fallthru
        _
      // Predicated region
      $region61: #{bert_small_forward.1} parent=11 // pred_check
        %p491 = pneg %p351
      $region62: #{bert_small_forward.1} parent=11 // pred_check_branch
        %493 = sbr.rel (%p491) target = $region64
      $region63: #{bert_small_forward.1} parent=11 // pred_region
        _
      $region64: #{bert_small_forward.1} parent=11 // pred_fallthru
        _
      // Predicated region
      $region65: #{bert_small_forward.1} parent=11 // pred_check
        %p494 = pneg %p372
      $region66: #{bert_small_forward.1} parent=11 // pred_check_branch
        %496 = sbr.rel (%p494) target = $region68
      $region67: #{bert_small_forward.1} parent=11 // pred_region
        _
      $region68: #{bert_small_forward.1} parent=11 // pred_fallthru
        _
      // Predicated region
      $region69: #{bert_small_forward.1} parent=11 // pred_check
        %p497 = pneg %p393
      $region70: #{bert_small_forward.1} parent=11 // pred_check_branch
        %499 = sbr.rel (%p497) target = $region72
      $region71: #{bert_small_forward.1} parent=11 // pred_region
        _
      $region72: #{bert_small_forward.1} parent=11 // pred_fallthru
        _
      // Predicated region
      $region73: #{bert_small_forward.1} parent=11 // pred_check
        %p500 = pneg %p414
      $region74: #{bert_small_forward.1} parent=11 // pred_check_branch
        %502 = sbr.rel (%p500) target = $region76
      $region75: #{bert_small_forward.1} parent=11 // pred_region
        _
      $region76: #{bert_small_forward.1} parent=11 // pred_fallthru
        _
    $region12: #{bert_small_forward.1} parent=5 // pred_fallthru
      _
    %p503 = scmp.lt.s32.totalorder %s26, 2
    // Predicated region
    $region77: #{bert_small_forward.1} parent=5 // pred_check
      %p504 = pneg %p503
    $region78: #{bert_small_forward.1} parent=5 // pred_check_branch
      %506 = sbr.rel (%p504) target = $region80
    $region79: #{bert_small_forward.1} parent=5 // pred_region
      // Predicated region
      $region81: #{bert_small_forward.1} parent=79 // pred_check
        %p507 = pneg %p46
      $region82: #{bert_small_forward.1} parent=79 // pred_check_branch
        %509 = sbr.rel (%p507) target = $region84
      $region83: #{bert_small_forward.1} parent=79 // pred_region
        %p510 = scmp.lt.s32.totalorder %s26, 1
        %s511 = scalar_select %p510, %s26, 1
        %s512 = smul.addr %s511, 8
        %s513 = scalar_lea.vmem %s0, %s512
      $region84: #{bert_small_forward.1} parent=79 // pred_fallthru
        _
      // Predicated region
      $region85: #{bert_small_forward.1} parent=79 // pred_check
        %p514 = pneg %p72
      $region86: #{bert_small_forward.1} parent=79 // pred_check_branch
        %516 = sbr.rel (%p514) target = $region88
      $region87: #{bert_small_forward.1} parent=79 // pred_region
        %p517 = scmp.lt.s32.totalorder %s26, 1
        %s518 = scalar_select %p517, %s26, 1
        %s519 = scalar_lea.vmem %s1, %s518
      $region88: #{bert_small_forward.1} parent=79 // pred_fallthru
        _
    $region80: #{bert_small_forward.1} parent=5 // pred_fallthru
      _
    %p520 = scmp.le.s32.totalorder 1, %s26
    %p521 = scmp.lt.s32.totalorder %s26, 3
    %p522 = pnand %p520, %p521
    %p523 = pneg %p522
    // Predicated region
    $region89: #{bert_small_forward.1} parent=5 // pred_check
      _
    $region90: #{bert_small_forward.1} parent=5 // pred_check_branch
      %525 = sbr.rel (%p522) target = $region92
    $region91: #{bert_small_forward.1} parent=5 // pred_region
      %s526 = ssub.s32 %s26, 1
      %p527 = scmp.lt.s32.totalorder %s31, 1
      %s528 = scalar_select %p527, %s31, 1
      %s529 = smul.addr %s528, 8
      %s530 = scalar_lea.vmem %s0, %s529
      %p531 = pneg %p52
      %p532 = pneg %p49
      %p533 = scmp.lt.s32.totalorder %s31, 1
      %s534 = scalar_select %p533, %s31, 1
      %s535 = scalar_lea.vmem %s1, %s534
      %p536 = pneg %p78
      %p537 = pneg %p75
      %p538 = pneg %p99
      %p539 = pneg %p96
      %p540 = pneg %p120
      %p541 = pneg %p117
      %p542 = pneg %p141
      %p543 = pneg %p138
      %p544 = pneg %p162
      %p545 = pneg %p159
      %p546 = pneg %p183
      %p547 = pneg %p180
      %p548 = pneg %p204
      %p549 = pneg %p201
      %p550 = pneg %p225
      %p551 = pneg %p222
      %p552 = pneg %p246
      %p553 = pneg %p243
      %p554 = pneg %p267
      %p555 = pneg %p264
      %p556 = pneg %p288
      %p557 = pneg %p285
      %p558 = pneg %p309
      %p559 = pneg %p306
      %p560 = pneg %p330
      %p561 = pneg %p327
      %p562 = pneg %p351
      %p563 = pneg %p348
      %p564 = pneg %p372
      %p565 = pneg %p369
      %p566 = pneg %p393
      %p567 = pneg %p390
      %p568 = pneg %p414
      %p569 = pneg %p411
      %p570 = pneg %p440
      %p571 = pneg %p437
      %p572 = scmp.lt.s32.totalorder %s31, 1
      %s573 = scalar_select %p572, %s31, 1
      %s574 = scalar_lea.vmem %s18, %s573
      %p575 = scmp.lt.s32.totalorder %s31, 1
      %s576 = scalar_select %p575, %s31, 1
      %s577 = smul.addr %s576, 8
      %s578 = scalar_lea.vmem %s0, %s577
      %p579 = scmp.lt.s32.totalorder %s31, 1
      %s580 = scalar_select %p579, %s31, 1
      %s581 = scalar_lea.vmem %s1, %s580
      %p582 = scmp.lt.s32.totalorder %s31, 1
      %s583 = scalar_select %p582, %s31, 1
      %s584 = scalar_lea.vmem %s18, %s583
      %v585 = vld [vmem:[%s578] sm:$0xff]
      %v586 = vld [vmem:[%s2] sm:$0x1]
      %v587 = vld [vmem:[%s3] sm:$0x1]
      %vm588 = vcmask 261120
      %v589 = vsel %vm588, %v585, 0.0
      %590 = vadd.xlane.f32.xlu0 %v589
      %v591 = vpop.xlane.xlu0 %590
      %v592 = vrcp.pop 32.0
      %v593 = vmul.f32 %v591, %v592
      %v594 = vsub.f32 %v585, %v593
      %v595 = vmul.f32 %v594, %v594
      %v596 = vsel %vm588, %v595, 0.0
      %597 = vadd.xlane.f32.xlu0 %v596
      %v598 = vpop.xlane.xlu0 %597
      %v599 = vmul.f32 %v598, %v592
      %v600 = vadd.f32 %v599, 1e-05
      %v601 = vrsqrt.pop %v600
      %v602 = vmul.f32 %v594, %v601
      %v604 = vlaneseq
      %v605 = vshrl.u32 %v604, 7
      %v606 = vsub.s32 0, %v605
      %v607 = vrot.slane %v586, %v606
      %v609 = vmul.f32 %v602, %v607
      %v611 = vlaneseq
      %v612 = vshrl.u32 %v611, 7
      %v613 = vsub.s32 0, %v612
      %v614 = vrot.slane %v587, %v613
      %v616 = vadd.f32 %v609, %v614
      %v617 = vld [vmem:[%s581] sm:$0x1]
      %v618 = vld [vmem:[%s4] sm:$0xff]
      %v619 = vld [vmem:[%s4 + $0x8] sm:$0xff]
      %v620 = vld [vmem:[%s4 + $0x10] sm:$0xff]
      %v621 = vld [vmem:[%s4 + $0x18] sm:$0xff]
      %v622 = vld [vmem:[%s5] sm:$0x1]
      %v624 = vlaneseq
      %v625 = vshrl.u32 %v624, 7
      %v626 = vsub.s32 0, %v625
      %v627 = vrot.slane %v622, %v626
      %v630 = vsel %vm588, %v616, 0
      %632 = vmatprep.subr.mxu0 0.0
      %633 = vmatpush1.msra.mxu0 %v618
      %634 = vmatprep.subr.mxu0 0.0
      %635 = vmatpush1.msra.mxu0 %v619
      %636 = vmatprep.subr.mxu0 0.0
      %637 = vmatpush1.msra.mxu0 %v620
      %638 = vmatprep.subr.mxu0 0.0
      %639 = vmatpush1.msra.mxu0 %v621
      %640 = vmatprep.subr.mxu0 0.0
      %641 = vmatpush1.msra.mxu0 0.0
      %642 = vmatprep.subr.mxu0 0.0
      %643 = vmatpush1.msra.mxu0 0.0
      %644 = vmatprep.subr.mxu0 0.0
      %645 = vmatpush1.msra.mxu0 0.0
      %646 = vmatprep.subr.mxu0 0.0
      %647 = vmatpush1.msra.mxu0 0.0
      %648 = vmatprep.subr.mxu0 0.0
      %649 = vmatpush1.msra.mxu0 0.0
      %650 = vmatprep.subr.mxu0 0.0
      %651 = vmatpush1.msra.mxu0 0.0
      %652 = vmatprep.subr.mxu0 0.0
      %653 = vmatpush1.msra.mxu0 0.0
      %654 = vmatprep.subr.mxu0 0.0
      %655 = vmatpush1.msra.mxu0 0.0
      %656 = vmatprep.subr.mxu0 0.0
      %657 = vmatpush1.msra.mxu0 0.0
      %658 = vmatprep.subr.mxu0 0.0
      %659 = vmatpush1.msra.mxu0 0.0
      %660 = vmatprep.subr.mxu0 0.0
      %661 = vmatpush1.msra.mxu0 0.0
      %662 = vmatprep.subr.mxu0 0.0
      %663 = vmatpush1.msra.mxu0 0.0
      %664 = vmatprep.subr.mxu0 0.0
      %665 = vmatpush1.msra.mxu0 0.0
      %666 = vmatprep.subr.mxu0 0.0
      %667 = vmatpush1.msra.mxu0 0.0
      %668 = vmatprep.subr.mxu0 0.0
      %669 = vmatpush1.msra.mxu0 0.0
      %670 = vmatprep.subr.mxu0 0.0
      %671 = vmatpush1.msra.mxu0 0.0
      %672 = vmatprep.subr.mxu0 0.0
      %673 = vmatpush1.msra.mxu0 0.0
      %674 = vmatprep.subr.mxu0 0.0
      %675 = vmatpush1.msra.mxu0 0.0
      %676 = vmatprep.subr.mxu0 0.0
      %677 = vmatpush1.msra.mxu0 0.0
      %678 = vmatprep.subr.mxu0 0.0
      %679 = vmatpush1.msra.mxu0 0.0
      %680 = vmatprep.subr.mxu0 0.0
      %681 = vmatpush1.msra.mxu0 0.0
      %682 = vmatprep.subr.mxu0 0.0
      %683 = vmatpush1.msra.mxu0 0.0
      %684 = vmatprep.subr.mxu0 0.0
      %685 = vmatpush1.msra.mxu0 0.0
      %686 = vmatprep.subr.mxu0 0.0
      %687 = vmatpush1.msra.mxu0 0.0
      %688 = vmatprep.subr.mxu0 0.0
      %689 = vmatpush1.msra.mxu0 0.0
      %690 = vmatprep.subr.mxu0 0.0
      %691 = vmatpush1.msra.mxu0 0.0
      %692 = vmatprep.subr.mxu0 0.0
      %693 = vmatpush1.msra.mxu0 0.0
      %694 = vmatprep.subr.mxu0 0.0
      %695 = vmatpush1.msra.mxu0 0.0
      %696 = vmatprep.mubr.f32.mxu0 0.0
      %697 = vmatmul.mubr.f32.gmra.mrb[0].mxu0 %v630
      %v698 = vpop.f32.mrb[0].mxu0
      %v699 = vadd.f32 %v627, %v698
      %v700 = vpop.f32.mrb[0].mxu0
      %701 = vdwg.mxu0
      %v702 = vld [vmem:[%s6] sm:$0xff]
      %v703 = vld [vmem:[%s6 + $0x8] sm:$0xff]
      %v704 = vld [vmem:[%s6 + $0x10] sm:$0xff]
      %v705 = vld [vmem:[%s6 + $0x18] sm:$0xff]
      %707 = vrot.lane.b32.xlu0 %v699, 96
      %v708 = vpop.permute.xlu0 %707
      %vm709 = vcmask 64512
      %v710 = vsel %vm709, %v699, 0
      %v712 = vsel %vm709, %v708, 0
      %714 = vmatprep.subr.mxu0 0.0
      %715 = vmatpush1.xpose.msra.mxu0 %v712
      %716 = vmatprep.subr.mxu0 0.0
      %717 = vmatpush1.xpose.msra.mxu0 0.0
      %718 = vmatprep.subr.mxu0 0.0
      %719 = vmatpush1.xpose.msra.mxu0 0.0
      %720 = vmatprep.subr.mxu0 0.0
      %721 = vmatpush1.xpose.msra.mxu0 0.0
      %722 = vmatprep.subr.mxu0 0.0
      %723 = vmatpush1.xpose.msra.mxu0 0.0
      %724 = vmatprep.subr.mxu0 0.0
      %725 = vmatpush1.xpose.msra.mxu0 0.0
      %726 = vmatprep.subr.mxu0 0.0
      %727 = vmatpush1.xpose.msra.mxu0 0.0
      %728 = vmatprep.subr.mxu0 0.0
      %729 = vmatpush1.xpose.msra.mxu0 0.0
      %730 = vmatprep.subr.mxu0 0.0
      %731 = vmatpush1.xpose.msra.mxu0 0.0
      %732 = vmatprep.subr.mxu0 0.0
      %733 = vmatpush1.xpose.msra.mxu0 0.0
      %734 = vmatprep.subr.mxu0 0.0
      %735 = vmatpush1.xpose.msra.mxu0 0.0
      %736 = vmatprep.subr.mxu0 0.0
      %737 = vmatpush1.xpose.msra.mxu0 0.0
      %738 = vmatprep.subr.mxu0 0.0
      %739 = vmatpush1.xpose.msra.mxu0 0.0
      %740 = vmatprep.subr.mxu0 0.0
      %741 = vmatpush1.xpose.msra.mxu0 0.0
      %742 = vmatprep.subr.mxu0 0.0
      %743 = vmatpush1.xpose.msra.mxu0 0.0
      %744 = vmatprep.subr.mxu0 0.0
      %745 = vmatpush1.xpose.msra.mxu0 0.0
      %746 = vmatprep.subr.mxu0 0.0
      %747 = vmatpush1.xpose.msra.mxu0 0.0
      %748 = vmatprep.subr.mxu0 0.0
      %749 = vmatpush1.xpose.msra.mxu0 0.0
      %750 = vmatprep.subr.mxu0 0.0
      %751 = vmatpush1.xpose.msra.mxu0 0.0
      %752 = vmatprep.subr.mxu0 0.0
      %753 = vmatpush1.xpose.msra.mxu0 0.0
      %754 = vmatprep.subr.mxu0 0.0
      %755 = vmatpush1.xpose.msra.mxu0 0.0
      %756 = vmatprep.subr.mxu0 0.0
      %757 = vmatpush1.xpose.msra.mxu0 0.0
      %758 = vmatprep.subr.mxu0 0.0
      %759 = vmatpush1.xpose.msra.mxu0 0.0
      %760 = vmatprep.subr.mxu0 0.0
      %761 = vmatpush1.xpose.msra.mxu0 0.0
      %762 = vmatprep.subr.mxu0 0.0
      %763 = vmatpush1.xpose.msra.mxu0 0.0
      %764 = vmatprep.subr.mxu0 0.0
      %765 = vmatpush1.xpose.msra.mxu0 0.0
      %766 = vmatprep.subr.mxu0 0.0
      %767 = vmatpush1.xpose.msra.mxu0 0.0
      %768 = vmatprep.subr.mxu0 0.0
      %769 = vmatpush1.xpose.msra.mxu0 0.0
      %770 = vmatprep.subr.mxu0 0.0
      %771 = vmatpush1.xpose.msra.mxu0 0.0
      %772 = vmatprep.subr.mxu0 0.0
      %773 = vmatpush1.xpose.msra.mxu0 0.0
      %774 = vmatprep.subr.mxu0 0.0
      %775 = vmatpush1.xpose.msra.mxu0 0.0
      %776 = vmatprep.subr.mxu0 0.0
      %777 = vmatpush1.xpose.msra.mxu0 0.0
      %778 = vmatprep.mubr.f32.mxu0 0.0
      %779 = vmatmul.mubr.f32.gmra.mrb[0].mxu0 %v710
      %v780 = vpop.f32.mrb[0].mxu0
      %v781 = vadd.f32 0.0, %v780
      %v782 = vpop.f32.mrb[0].mxu0
      %783 = vdwg.mxu0
      %v784 = vmul.f32 %v781, 0.35355338
      %v786 = vlaneseq
      %v787 = vshrl.u32 %v786, 7
      %v788 = vsub.s32 0, %v787
      %v789 = vrot.slane %v617, %v788
      %v791 = vadd.f32 %v784, %v789
      %v792 = vsel %vm709, %v791, -inf
      %793 = vmax.xlane.f32.xlu0 %v792
      %v794 = vpop.xlane.xlu0 %793
      %v795 = vsub.f32 %v791, %v794
      %v796 = vmul.f32 %v795, 1.442695
      %v797 = vpow.pop %v796
      %v798 = vsel %vm709, %v797, 0.0
      %799 = vadd.xlane.f32.xlu0 %v798
      %v800 = vpop.xlane.xlu0 %799
      %v801 = vrcp.pop %v800
      %v802 = vmul.f32 %v797, %v801
      %803 = vrot.lane.b32.xlu0 %v699, 64
      %v804 = vpop.permute.xlu0 %803
      %v807 = vsel %vm709, %v802, 0
      %809 = vmatprep.subr.mxu0 0.0
      %810 = vmatpush1.msra.mxu0 %v804
      %811 = vmatprep.subr.mxu0 0.0
      %812 = vmatpush1.msra.mxu0 0.0
      %813 = vmatprep.subr.mxu0 0.0
      %814 = vmatpush1.msra.mxu0 0.0
      %815 = vmatprep.subr.mxu0 0.0
      %816 = vmatpush1.msra.mxu0 0.0
      %817 = vmatprep.subr.mxu0 0.0
      %818 = vmatpush1.msra.mxu0 0.0
      %819 = vmatprep.subr.mxu0 0.0
      %820 = vmatpush1.msra.mxu0 0.0
      %821 = vmatprep.subr.mxu0 0.0
      %822 = vmatpush1.msra.mxu0 0.0
      %823 = vmatprep.subr.mxu0 0.0
      %824 = vmatpush1.msra.mxu0 0.0
      %825 = vmatprep.subr.mxu0 0.0
      %826 = vmatpush1.msra.mxu0 0.0
      %827 = vmatprep.subr.mxu0 0.0
      %828 = vmatpush1.msra.mxu0 0.0
      %829 = vmatprep.subr.mxu0 0.0
      %830 = vmatpush1.msra.mxu0 0.0
      %831 = vmatprep.subr.mxu0 0.0
      %832 = vmatpush1.msra.mxu0 0.0
      %833 = vmatprep.subr.mxu0 0.0
      %834 = vmatpush1.msra.mxu0 0.0
      %835 = vmatprep.subr.mxu0 0.0
      %836 = vmatpush1.msra.mxu0 0.0
      %837 = vmatprep.subr.mxu0 0.0
      %838 = vmatpush1.msra.mxu0 0.0
      %839 = vmatprep.subr.mxu0 0.0
      %840 = vmatpush1.msra.mxu0 0.0
      %841 = vmatprep.subr.mxu0 0.0
      %842 = vmatpush1.msra.mxu0 0.0
      %843 = vmatprep.subr.mxu0 0.0
      %844 = vmatpush1.msra.mxu0 0.0
      %845 = vmatprep.subr.mxu0 0.0
      %846 = vmatpush1.msra.mxu0 0.0
      %847 = vmatprep.subr.mxu0 0.0
      %848 = vmatpush1.msra.mxu0 0.0
      %849 = vmatprep.subr.mxu0 0.0
      %850 = vmatpush1.msra.mxu0 0.0
      %851 = vmatprep.subr.mxu0 0.0
      %852 = vmatpush1.msra.mxu0 0.0
      %853 = vmatprep.subr.mxu0 0.0
      %854 = vmatpush1.msra.mxu0 0.0
      %855 = vmatprep.subr.mxu0 0.0
      %856 = vmatpush1.msra.mxu0 0.0
      %857 = vmatprep.subr.mxu0 0.0
      %858 = vmatpush1.msra.mxu0 0.0
      %859 = vmatprep.subr.mxu0 0.0
      %860 = vmatpush1.msra.mxu0 0.0
      %861 = vmatprep.subr.mxu0 0.0
      %862 = vmatpush1.msra.mxu0 0.0
      %863 = vmatprep.subr.mxu0 0.0
      %864 = vmatpush1.msra.mxu0 0.0
      %865 = vmatprep.subr.mxu0 0.0
      %866 = vmatpush1.msra.mxu0 0.0
      %867 = vmatprep.subr.mxu0 0.0
      %868 = vmatpush1.msra.mxu0 0.0
      %869 = vmatprep.subr.mxu0 0.0
      %870 = vmatpush1.msra.mxu0 0.0
      %871 = vmatprep.subr.mxu0 0.0
      %872 = vmatpush1.msra.mxu0 0.0
      %873 = vmatprep.mubr.f32.mxu0 0.0
      %874 = vmatmul.mubr.f32.gmra.mrb[0].mxu0 %v807
      %v875 = vpop.f32.mrb[0].mxu0
      %v876 = vadd.f32 0.0, %v875
      %v877 = vpop.f32.mrb[0].mxu0
      %878 = vdwg.mxu0
      %879 = vrot.lane.b32.xlu0 %v699, 120
      %v880 = vpop.permute.xlu0 %879
      %881 = vrot.lane.b32.xlu0 %v699, 88
      %v882 = vpop.permute.xlu0 %881
      %v883 = vsel %vm709, %v880, 0
      %v885 = vsel %vm709, %v882, 0
      %887 = vmatprep.subr.mxu0 0.0
      %888 = vmatpush1.xpose.msra.mxu0 %v885
      %889 = vmatprep.subr.mxu0 0.0
      %890 = vmatpush1.xpose.msra.mxu0 0.0
      %891 = vmatprep.subr.mxu0 0.0
      %892 = vmatpush1.xpose.msra.mxu0 0.0
      %893 = vmatprep.subr.mxu0 0.0
      %894 = vmatpush1.xpose.msra.mxu0 0.0
      %895 = vmatprep.subr.mxu0 0.0
      %896 = vmatpush1.xpose.msra.mxu0 0.0
      %897 = vmatprep.subr.mxu0 0.0
      %898 = vmatpush1.xpose.msra.mxu0 0.0
      %899 = vmatprep.subr.mxu0 0.0
      %900 = vmatpush1.xpose.msra.mxu0 0.0
      %901 = vmatprep.subr.mxu0 0.0
      %902 = vmatpush1.xpose.msra.mxu0 0.0
      %903 = vmatprep.subr.mxu0 0.0
      %904 = vmatpush1.xpose.msra.mxu0 0.0
      %905 = vmatprep.subr.mxu0 0.0
      %906 = vmatpush1.xpose.msra.mxu0 0.0
      %907 = vmatprep.subr.mxu0 0.0
      %908 = vmatpush1.xpose.msra.mxu0 0.0
      %909 = vmatprep.subr.mxu0 0.0
      %910 = vmatpush1.xpose.msra.mxu0 0.0
      %911 = vmatprep.subr.mxu0 0.0
      %912 = vmatpush1.xpose.msra.mxu0 0.0
      %913 = vmatprep.subr.mxu0 0.0
      %914 = vmatpush1.xpose.msra.mxu0 0.0
      %915 = vmatprep.subr.mxu0 0.0
      %916 = vmatpush1.xpose.msra.mxu0 0.0
      %917 = vmatprep.subr.mxu0 0.0
      %918 = vmatpush1.xpose.msra.mxu0 0.0
      %919 = vmatprep.subr.mxu0 0.0
      %920 = vmatpush1.xpose.msra.mxu0 0.0
      %921 = vmatprep.subr.mxu0 0.0
      %922 = vmatpush1.xpose.msra.mxu0 0.0
      %923 = vmatprep.subr.mxu0 0.0
      %924 = vmatpush1.xpose.msra.mxu0 0.0
      %925 = vmatprep.subr.mxu0 0.0
      %926 = vmatpush1.xpose.msra.mxu0 0.0
      %927 = vmatprep.subr.mxu0 0.0
      %928 = vmatpush1.xpose.msra.mxu0 0.0
      %929 = vmatprep.subr.mxu0 0.0
      %930 = vmatpush1.xpose.msra.mxu0 0.0
      %931 = vmatprep.subr.mxu0 0.0
      %932 = vmatpush1.xpose.msra.mxu0 0.0
      %933 = vmatprep.subr.mxu0 0.0
      %934 = vmatpush1.xpose.msra.mxu0 0.0
      %935 = vmatprep.subr.mxu0 0.0
      %936 = vmatpush1.xpose.msra.mxu0 0.0
      %937 = vmatprep.subr.mxu0 0.0
      %938 = vmatpush1.xpose.msra.mxu0 0.0
      %939 = vmatprep.subr.mxu0 0.0
      %940 = vmatpush1.xpose.msra.mxu0 0.0
      %941 = vmatprep.subr.mxu0 0.0
      %942 = vmatpush1.xpose.msra.mxu0 0.0
      %943 = vmatprep.subr.mxu0 0.0
      %944 = vmatpush1.xpose.msra.mxu0 0.0
      %945 = vmatprep.subr.mxu0 0.0
      %946 = vmatpush1.xpose.msra.mxu0 0.0
      %947 = vmatprep.subr.mxu0 0.0
      %948 = vmatpush1.xpose.msra.mxu0 0.0
      %949 = vmatprep.subr.mxu0 0.0
      %950 = vmatpush1.xpose.msra.mxu0 0.0
      %951 = vmatprep.mubr.f32.mxu0 0.0
      %952 = vmatmul.mubr.f32.gmra.mrb[0].mxu0 %v883
      %v953 = vpop.f32.mrb[0].mxu0
      %v954 = vadd.f32 0.0, %v953
      %v955 = vpop.f32.mrb[0].mxu0
      %956 = vdwg.mxu0
      %v957 = vmul.f32 %v954, 0.35355338
      %v958 = vadd.f32 %v957, %v789
      %v959 = vsel %vm709, %v958, -inf
      %960 = vmax.xlane.f32.xlu0 %v959
      %v961 = vpop.xlane.xlu0 %960
      %v962 = vsub.f32 %v958, %v961
      %v963 = vmul.f32 %v962, 1.442695
      %v964 = vpow.pop %v963
      %v965 = vsel %vm709, %v964, 0.0
      %966 = vadd.xlane.f32.xlu0 %v965
      %v967 = vpop.xlane.xlu0 %966
      %v968 = vrcp.pop %v967
      %v969 = vmul.f32 %v964, %v968
      %970 = vrot.lane.b32.xlu0 %v699, 56
      %v971 = vpop.permute.xlu0 %970
      %v974 = vsel %vm709, %v969, 0
      %976 = vmatprep.subr.mxu0 0.0
      %977 = vmatpush1.msra.mxu0 %v971
      %978 = vmatprep.subr.mxu0 0.0
      %979 = vmatpush1.msra.mxu0 0.0
      %980 = vmatprep.subr.mxu0 0.0
      %981 = vmatpush1.msra.mxu0 0.0
      %982 = vmatprep.subr.mxu0 0.0
      %983 = vmatpush1.msra.mxu0 0.0
      %984 = vmatprep.subr.mxu0 0.0
      %985 = vmatpush1.msra.mxu0 0.0
      %986 = vmatprep.subr.mxu0 0.0
      %987 = vmatpush1.msra.mxu0 0.0
      %988 = vmatprep.subr.mxu0 0.0
      %989 = vmatpush1.msra.mxu0 0.0
      %990 = vmatprep.subr.mxu0 0.0
      %991 = vmatpush1.msra.mxu0 0.0
      %992 = vmatprep.subr.mxu0 0.0
      %993 = vmatpush1.msra.mxu0 0.0
      %994 = vmatprep.subr.mxu0 0.0
      %995 = vmatpush1.msra.mxu0 0.0
      %996 = vmatprep.subr.mxu0 0.0
      %997 = vmatpush1.msra.mxu0 0.0
      %998 = vmatprep.subr.mxu0 0.0
      %999 = vmatpush1.msra.mxu0 0.0
      %1000 = vmatprep.subr.mxu0 0.0
      %1001 = vmatpush1.msra.mxu0 0.0
      %1002 = vmatprep.subr.mxu0 0.0
      %1003 = vmatpush1.msra.mxu0 0.0
      %1004 = vmatprep.subr.mxu0 0.0
      %1005 = vmatpush1.msra.mxu0 0.0
      %1006 = vmatprep.subr.mxu0 0.0
      %1007 = vmatpush1.msra.mxu0 0.0
      %1008 = vmatprep.subr.mxu0 0.0
      %1009 = vmatpush1.msra.mxu0 0.0
      %1010 = vmatprep.subr.mxu0 0.0
      %1011 = vmatpush1.msra.mxu0 0.0
      %1012 = vmatprep.subr.mxu0 0.0
      %1013 = vmatpush1.msra.mxu0 0.0
      %1014 = vmatprep.subr.mxu0 0.0
      %1015 = vmatpush1.msra.mxu0 0.0
      %1016 = vmatprep.subr.mxu0 0.0
      %1017 = vmatpush1.msra.mxu0 0.0
      %1018 = vmatprep.subr.mxu0 0.0
      %1019 = vmatpush1.msra.mxu0 0.0
      %1020 = vmatprep.subr.mxu0 0.0
      %1021 = vmatpush1.msra.mxu0 0.0
      %1022 = vmatprep.subr.mxu0 0.0
      %1023 = vmatpush1.msra.mxu0 0.0
      %1024 = vmatprep.subr.mxu0 0.0
      %1025 = vmatpush1.msra.mxu0 0.0
      %1026 = vmatprep.subr.mxu0 0.0
      %1027 = vmatpush1.msra.mxu0 0.0
      %1028 = vmatprep.subr.mxu0 0.0
      %1029 = vmatpush1.msra.mxu0 0.0
      %1030 = vmatprep.subr.mxu0 0.0
      %1031 = vmatpush1.msra.mxu0 0.0
      %1032 = vmatprep.subr.mxu0 0.0
      %1033 = vmatpush1.msra.mxu0 0.0
      %1034 = vmatprep.subr.mxu0 0.0
      %1035 = vmatpush1.msra.mxu0 0.0
      %1036 = vmatprep.subr.mxu0 0.0
      %1037 = vmatpush1.msra.mxu0 0.0
      %1038 = vmatprep.subr.mxu0 0.0
      %1039 = vmatpush1.msra.mxu0 0.0
      %1040 = vmatprep.mubr.f32.mxu0 0.0
      %1041 = vmatmul.mubr.f32.gmra.mrb[0].mxu0 %v974
      %v1042 = vpop.f32.mrb[0].mxu0
      %v1043 = vadd.f32 0.0, %v1042
      %v1044 = vpop.f32.mrb[0].mxu0
      %1045 = vdwg.mxu0
      %v1047 = vsel %vm709, %v1043, 0
      %1049 = vmatprep.subr.mxu0 0.0
      %1050 = vmatpush1.msra.mxu0 %v703
      %1051 = vmatprep.subr.mxu0 0.0
      %1052 = vmatpush1.msra.mxu0 0.0
      %1053 = vmatprep.subr.mxu0 0.0
      %1054 = vmatpush1.msra.mxu0 0.0
      %1055 = vmatprep.subr.mxu0 0.0
      %1056 = vmatpush1.msra.mxu0 0.0
      %1057 = vmatprep.subr.mxu0 0.0
      %1058 = vmatpush1.msra.mxu0 0.0
      %1059 = vmatprep.subr.mxu0 0.0
      %1060 = vmatpush1.msra.mxu0 0.0
      %1061 = vmatprep.subr.mxu0 0.0
      %1062 = vmatpush1.msra.mxu0 0.0
      %1063 = vmatprep.subr.mxu0 0.0
      %1064 = vmatpush1.msra.mxu0 0.0
      %1065 = vmatprep.subr.mxu0 0.0
      %1066 = vmatpush1.msra.mxu0 0.0
      %1067 = vmatprep.subr.mxu0 0.0
      %1068 = vmatpush1.msra.mxu0 0.0
      %1069 = vmatprep.subr.mxu0 0.0
      %1070 = vmatpush1.msra.mxu0 0.0
      %1071 = vmatprep.subr.mxu0 0.0
      %1072 = vmatpush1.msra.mxu0 0.0
      %1073 = vmatprep.subr.mxu0 0.0
      %1074 = vmatpush1.msra.mxu0 0.0
      %1075 = vmatprep.subr.mxu0 0.0
      %1076 = vmatpush1.msra.mxu0 0.0
      %1077 = vmatprep.subr.mxu0 0.0
      %1078 = vmatpush1.msra.mxu0 0.0
      %1079 = vmatprep.subr.mxu0 0.0
      %1080 = vmatpush1.msra.mxu0 0.0
      %1081 = vmatprep.subr.mxu0 0.0
      %1082 = vmatpush1.msra.mxu0 0.0
      %1083 = vmatprep.subr.mxu0 0.0
      %1084 = vmatpush1.msra.mxu0 0.0
      %1085 = vmatprep.subr.mxu0 0.0
      %1086 = vmatpush1.msra.mxu0 0.0
      %1087 = vmatprep.subr.mxu0 0.0
      %1088 = vmatpush1.msra.mxu0 0.0
      %1089 = vmatprep.subr.mxu0 0.0
      %1090 = vmatpush1.msra.mxu0 0.0
      %1091 = vmatprep.subr.mxu0 0.0
      %1092 = vmatpush1.msra.mxu0 0.0
      %1093 = vmatprep.subr.mxu0 0.0
      %1094 = vmatpush1.msra.mxu0 0.0
      %1095 = vmatprep.subr.mxu0 0.0
      %1096 = vmatpush1.msra.mxu0 0.0
      %1097 = vmatprep.subr.mxu0 0.0
      %1098 = vmatpush1.msra.mxu0 0.0
      %1099 = vmatprep.subr.mxu0 0.0
      %1100 = vmatpush1.msra.mxu0 0.0
      %1101 = vmatprep.subr.mxu0 0.0
      %1102 = vmatpush1.msra.mxu0 0.0
      %1103 = vmatprep.subr.mxu0 0.0
      %1104 = vmatpush1.msra.mxu0 0.0
      %1105 = vmatprep.subr.mxu0 0.0
      %1106 = vmatpush1.msra.mxu0 0.0
      %1107 = vmatprep.subr.mxu0 0.0
      %1108 = vmatpush1.msra.mxu0 0.0
      %1109 = vmatprep.subr.mxu0 0.0
      %1110 = vmatpush1.msra.mxu0 0.0
      %1111 = vmatprep.subr.mxu0 0.0
      %1112 = vmatpush1.msra.mxu0 0.0
      %1113 = vmatprep.mubr.f32.mxu0 0.0
      %1114 = vmatmul.mubr.f32.gmra.mrb[0].mxu0 %v1047
      %v1115 = vpop.f32.mrb[0].mxu0
      %v1116 = vadd.f32 0.0, %v1115
      %v1117 = vpop.f32.mrb[0].mxu0
      %1118 = vdwg.mxu0
      %v1120 = vsel %vm709, %v876, 0
      %1122 = vmatprep.subr.mxu0 0.0
      %1123 = vmatpush1.msra.mxu0 %v702
      %1124 = vmatprep.subr.mxu0 0.0
      %1125 = vmatpush1.msra.mxu0 0.0
      %1126 = vmatprep.subr.mxu0 0.0
      %1127 = vmatpush1.msra.mxu0 0.0
      %1128 = vmatprep.subr.mxu0 0.0
      %1129 = vmatpush1.msra.mxu0 0.0
      %1130 = vmatprep.subr.mxu0 0.0
      %1131 = vmatpush1.msra.mxu0 0.0
      %1132 = vmatprep.subr.mxu0 0.0
      %1133 = vmatpush1.msra.mxu0 0.0
      %1134 = vmatprep.subr.mxu0 0.0
      %1135 = vmatpush1.msra.mxu0 0.0
      %1136 = vmatprep.subr.mxu0 0.0
      %1137 = vmatpush1.msra.mxu0 0.0
      %1138 = vmatprep.subr.mxu0 0.0
      %1139 = vmatpush1.msra.mxu0 0.0
      %1140 = vmatprep.subr.mxu0 0.0
      %1141 = vmatpush1.msra.mxu0 0.0
      %1142 = vmatprep.subr.mxu0 0.0
      %1143 = vmatpush1.msra.mxu0 0.0
      %1144 = vmatprep.subr.mxu0 0.0
      %1145 = vmatpush1.msra.mxu0 0.0
      %1146 = vmatprep.subr.mxu0 0.0
      %1147 = vmatpush1.msra.mxu0 0.0
      %1148 = vmatprep.subr.mxu0 0.0
      %1149 = vmatpush1.msra.mxu0 0.0
      %1150 = vmatprep.subr.mxu0 0.0
      %1151 = vmatpush1.msra.mxu0 0.0
      %1152 = vmatprep.subr.mxu0 0.0
      %1153 = vmatpush1.msra.mxu0 0.0
      %1154 = vmatprep.subr.mxu0 0.0
      %1155 = vmatpush1.msra.mxu0 0.0
      %1156 = vmatprep.subr.mxu0 0.0
      %1157 = vmatpush1.msra.mxu0 0.0
      %1158 = vmatprep.subr.mxu0 0.0
      %1159 = vmatpush1.msra.mxu0 0.0
      %1160 = vmatprep.subr.mxu0 0.0
      %1161 = vmatpush1.msra.mxu0 0.0
      %1162 = vmatprep.subr.mxu0 0.0
      %1163 = vmatpush1.msra.mxu0 0.0
      %1164 = vmatprep.subr.mxu0 0.0
      %1165 = vmatpush1.msra.mxu0 0.0
      %1166 = vmatprep.subr.mxu0 0.0
      %1167 = vmatpush1.msra.mxu0 0.0
      %1168 = vmatprep.subr.mxu0 0.0
      %1169 = vmatpush1.msra.mxu0 0.0
      %1170 = vmatprep.subr.mxu0 0.0
      %1171 = vmatpush1.msra.mxu0 0.0
      %1172 = vmatprep.subr.mxu0 0.0
      %1173 = vmatpush1.msra.mxu0 0.0
      %1174 = vmatprep.subr.mxu0 0.0
      %1175 = vmatpush1.msra.mxu0 0.0
      %1176 = vmatprep.subr.mxu0 0.0
      %1177 = vmatpush1.msra.mxu0 0.0
      %1178 = vmatprep.subr.mxu0 0.0
      %1179 = vmatpush1.msra.mxu0 0.0
      %1180 = vmatprep.subr.mxu0 0.0
      %1181 = vmatpush1.msra.mxu0 0.0
      %1182 = vmatprep.subr.mxu0 0.0
      %1183 = vmatpush1.msra.mxu0 0.0
      %1184 = vmatprep.subr.mxu0 0.0
      %1185 = vmatpush1.msra.mxu0 0.0
      %1186 = vmatprep.mubr.f32.mxu0 0.0
      %1187 = vmatmul.mubr.f32.gmra.mrb[0].mxu0 %v1120
      %v1188 = vpop.f32.mrb[0].mxu0
      %v1189 = vadd.f32 %v1116, %v1188
      %v1190 = vpop.f32.mrb[0].mxu0
      %1191 = vdwg.mxu0
      %1192 = vrot.lane.b32.xlu0 %v699, 112
      %v1193 = vpop.permute.xlu0 %1192
      %1194 = vrot.lane.b32.xlu0 %v699, 80
      %v1195 = vpop.permute.xlu0 %1194
      %v1196 = vsel %vm709, %v1193, 0
      %v1198 = vsel %vm709, %v1195, 0
      %1200 = vmatprep.subr.mxu0 0.0
      %1201 = vmatpush1.xpose.msra.mxu0 %v1198
      %1202 = vmatprep.subr.mxu0 0.0
      %1203 = vmatpush1.xpose.msra.mxu0 0.0
      %1204 = vmatprep.subr.mxu0 0.0
      %1205 = vmatpush1.xpose.msra.mxu0 0.0
      %1206 = vmatprep.subr.mxu0 0.0
      %1207 = vmatpush1.xpose.msra.mxu0 0.0
      %1208 = vmatprep.subr.mxu0 0.0
      %1209 = vmatpush1.xpose.msra.mxu0 0.0
      %1210 = vmatprep.subr.mxu0 0.0
      %1211 = vmatpush1.xpose.msra.mxu0 0.0
      %1212 = vmatprep.subr.mxu0 0.0
      %1213 = vmatpush1.xpose.msra.mxu0 0.0
      %1214 = vmatprep.subr.mxu0 0.0
      %1215 = vmatpush1.xpose.msra.mxu0 0.0
      %1216 = vmatprep.subr.mxu0 0.0
      %1217 = vmatpush1.xpose.msra.mxu0 0.0
      %1218 = vmatprep.subr.mxu0 0.0
      %1219 = vmatpush1.xpose.msra.mxu0 0.0
      %1220 = vmatprep.subr.mxu0 0.0
      %1221 = vmatpush1.xpose.msra.mxu0 0.0
      %1222 = vmatprep.subr.mxu0 0.0
      %1223 = vmatpush1.xpose.msra.mxu0 0.0
      %1224 = vmatprep.subr.mxu0 0.0
      %1225 = vmatpush1.xpose.msra.mxu0 0.0
      %1226 = vmatprep.subr.mxu0 0.0
      %1227 = vmatpush1.xpose.msra.mxu0 0.0
      %1228 = vmatprep.subr.mxu0 0.0
      %1229 = vmatpush1.xpose.msra.mxu0 0.0
      %1230 = vmatprep.subr.mxu0 0.0
      %1231 = vmatpush1.xpose.msra.mxu0 0.0
      %1232 = vmatprep.subr.mxu0 0.0
      %1233 = vmatpush1.xpose.msra.mxu0 0.0
      %1234 = vmatprep.subr.mxu0 0.0
      %1235 = vmatpush1.xpose.msra.mxu0 0.0
      %1236 = vmatprep.subr.mxu0 0.0
      %1237 = vmatpush1.xpose.msra.mxu0 0.0
      %1238 = vmatprep.subr.mxu0 0.0
      %1239 = vmatpush1.xpose.msra.mxu0 0.0
      %1240 = vmatprep.subr.mxu0 0.0
      %1241 = vmatpush1.xpose.msra.mxu0 0.0
      %1242 = vmatprep.subr.mxu0 0.0
      %1243 = vmatpush1.xpose.msra.mxu0 0.0
      %1244 = vmatprep.subr.mxu0 0.0
      %1245 = vmatpush1.xpose.msra.mxu0 0.0
      %1246 = vmatprep.subr.mxu0 0.0
      %1247 = vmatpush1.xpose.msra.mxu0 0.0
      %1248 = vmatprep.subr.mxu0 0.0
      %1249 = vmatpush1.xpose.msra.mxu0 0.0
      %1250 = vmatprep.subr.mxu0 0.0
      %1251 = vmatpush1.xpose.msra.mxu0 0.0
      %1252 = vmatprep.subr.mxu0 0.0
      %1253 = vmatpush1.xpose.msra.mxu0 0.0
      %1254 = vmatprep.subr.mxu0 0.0
      %1255 = vmatpush1.xpose.msra.mxu0 0.0
      %1256 = vmatprep.subr.mxu0 0.0
      %1257 = vmatpush1.xpose.msra.mxu0 0.0
      %1258 = vmatprep.subr.mxu0 0.0
      %1259 = vmatpush1.xpose.msra.mxu0 0.0
      %1260 = vmatprep.subr.mxu0 0.0
      %1261 = vmatpush1.xpose.msra.mxu0 0.0
      %1262 = vmatprep.subr.mxu0 0.0
      %1263 = vmatpush1.xpose.msra.mxu0 0.0
      %1264 = vmatprep.mubr.f32.mxu0 0.0
      %1265 = vmatmul.mubr.f32.gmra.mrb[0].mxu0 %v1196
      %v1266 = vpop.f32.mrb[0].mxu0
      %v1267 = vadd.f32 0.0, %v1266
      %v1268 = vpop.f32.mrb[0].mxu0
      %1269 = vdwg.mxu0
      %v1270 = vmul.f32 %v1267, 0.35355338
      %v1271 = vadd.f32 %v1270, %v789
      %v1272 = vsel %vm709, %v1271, -inf
      %1273 = vmax.xlane.f32.xlu0 %v1272
      %v1274 = vpop.xlane.xlu0 %1273
      %v1275 = vsub.f32 %v1271, %v1274
      %v1276 = vmul.f32 %v1275, 1.442695
      %v1277 = vpow.pop %v1276
      %v1278 = vsel %vm709, %v1277, 0.0
      %1279 = vadd.xlane.f32.xlu0 %v1278
      %v1280 = vpop.xlane.xlu0 %1279
      %v1281 = vrcp.pop %v1280
      %v1282 = vmul.f32 %v1277, %v1281
      %1283 = vrot.lane.b32.xlu0 %v699, 48
      %v1284 = vpop.permute.xlu0 %1283
      %v1287 = vsel %vm709, %v1282, 0
      %1289 = vmatprep.subr.mxu0 0.0
      %1290 = vmatpush1.msra.mxu0 %v1284
      %1291 = vmatprep.subr.mxu0 0.0
      %1292 = vmatpush1.msra.mxu0 0.0
      %1293 = vmatprep.subr.mxu0 0.0
      %1294 = vmatpush1.msra.mxu0 0.0
      %1295 = vmatprep.subr.mxu0 0.0
      %1296 = vmatpush1.msra.mxu0 0.0
      %1297 = vmatprep.subr.mxu0 0.0
      %1298 = vmatpush1.msra.mxu0 0.0
      %1299 = vmatprep.subr.mxu0 0.0
      %1300 = vmatpush1.msra.mxu0 0.0
      %1301 = vmatprep.subr.mxu0 0.0
      %1302 = vmatpush1.msra.mxu0 0.0
      %1303 = vmatprep.subr.mxu0 0.0
      %1304 = vmatpush1.msra.mxu0 0.0
      %1305 = vmatprep.subr.mxu0 0.0
      %1306 = vmatpush1.msra.mxu0 0.0
      %1307 = vmatprep.subr.mxu0 0.0
      %1308 = vmatpush1.msra.mxu0 0.0
      %1309 = vmatprep.subr.mxu0 0.0
      %1310 = vmatpush1.msra.mxu0 0.0
      %1311 = vmatprep.subr.mxu0 0.0
      %1312 = vmatpush1.msra.mxu0 0.0
      %1313 = vmatprep.subr.mxu0 0.0
      %1314 = vmatpush1.msra.mxu0 0.0
      %1315 = vmatprep.subr.mxu0 0.0
      %1316 = vmatpush1.msra.mxu0 0.0
      %1317 = vmatprep.subr.mxu0 0.0
      %1318 = vmatpush1.msra.mxu0 0.0
      %1319 = vmatprep.subr.mxu0 0.0
      %1320 = vmatpush1.msra.mxu0 0.0
      %1321 = vmatprep.subr.mxu0 0.0
      %1322 = vmatpush1.msra.mxu0 0.0
      %1323 = vmatprep.subr.mxu0 0.0
      %1324 = vmatpush1.msra.mxu0 0.0
      %1325 = vmatprep.subr.mxu0 0.0
      %1326 = vmatpush1.msra.mxu0 0.0
      %1327 = vmatprep.subr.mxu0 0.0
      %1328 = vmatpush1.msra.mxu0 0.0
      %1329 = vmatprep.subr.mxu0 0.0
      %1330 = vmatpush1.msra.mxu0 0.0
      %1331 = vmatprep.subr.mxu0 0.0
      %1332 = vmatpush1.msra.mxu0 0.0
      %1333 = vmatprep.subr.mxu0 0.0
      %1334 = vmatpush1.msra.mxu0 0.0
      %1335 = vmatprep.subr.mxu0 0.0
      %1336 = vmatpush1.msra.mxu0 0.0
      %1337 = vmatprep.subr.mxu0 0.0
      %1338 = vmatpush1.msra.mxu0 0.0
      %1339 = vmatprep.subr.mxu0 0.0
      %1340 = vmatpush1.msra.mxu0 0.0
      %1341 = vmatprep.subr.mxu0 0.0
      %1342 = vmatpush1.msra.mxu0 0.0
      %1343 = vmatprep.subr.mxu0 0.0
      %1344 = vmatpush1.msra.mxu0 0.0
      %1345 = vmatprep.subr.mxu0 0.0
      %1346 = vmatpush1.msra.mxu0 0.0
      %1347 = vmatprep.subr.mxu0 0.0
      %1348 = vmatpush1.msra.mxu0 0.0
      %1349 = vmatprep.subr.mxu0 0.0
      %1350 = vmatpush1.msra.mxu0 0.0
      %1351 = vmatprep.subr.mxu0 0.0
      %1352 = vmatpush1.msra.mxu0 0.0
      %1353 = vmatprep.mubr.f32.mxu0 0.0
      %1354 = vmatmul.mubr.f32.gmra.mrb[0].mxu0 %v1287
      %v1355 = vpop.f32.mrb[0].mxu0
      %v1356 = vadd.f32 0.0, %v1355
      %v1357 = vpop.f32.mrb[0].mxu0
      %1358 = vdwg.mxu0
      %v1360 = vsel %vm709, %v1356, 0
      %1362 = vmatprep.subr.mxu0 0.0
      %1363 = vmatpush1.msra.mxu0 %v704
      %1364 = vmatprep.subr.mxu0 0.0
      %1365 = vmatpush1.msra.mxu0 0.0
      %1366 = vmatprep.subr.mxu0 0.0
      %1367 = vmatpush1.msra.mxu0 0.0
      %1368 = vmatprep.subr.mxu0 0.0
      %1369 = vmatpush1.msra.mxu0 0.0
      %1370 = vmatprep.subr.mxu0 0.0
      %1371 = vmatpush1.msra.mxu0 0.0
      %1372 = vmatprep.subr.mxu0 0.0
      %1373 = vmatpush1.msra.mxu0 0.0
      %1374 = vmatprep.subr.mxu0 0.0
      %1375 = vmatpush1.msra.mxu0 0.0
      %1376 = vmatprep.subr.mxu0 0.0
      %1377 = vmatpush1.msra.mxu0 0.0
      %1378 = vmatprep.subr.mxu0 0.0
      %1379 = vmatpush1.msra.mxu0 0.0
      %1380 = vmatprep.subr.mxu0 0.0
      %1381 = vmatpush1.msra.mxu0 0.0
      %1382 = vmatprep.subr.mxu0 0.0
      %1383 = vmatpush1.msra.mxu0 0.0
      %1384 = vmatprep.subr.mxu0 0.0
      %1385 = vmatpush1.msra.mxu0 0.0
      %1386 = vmatprep.subr.mxu0 0.0
      %1387 = vmatpush1.msra.mxu0 0.0
      %1388 = vmatprep.subr.mxu0 0.0
      %1389 = vmatpush1.msra.mxu0 0.0
      %1390 = vmatprep.subr.mxu0 0.0
      %1391 = vmatpush1.msra.mxu0 0.0
      %1392 = vmatprep.subr.mxu0 0.0
      %1393 = vmatpush1.msra.mxu0 0.0
      %1394 = vmatprep.subr.mxu0 0.0
      %1395 = vmatpush1.msra.mxu0 0.0
      %1396 = vmatprep.subr.mxu0 0.0
      %1397 = vmatpush1.msra.mxu0 0.0
      %1398 = vmatprep.subr.mxu0 0.0
      %1399 = vmatpush1.msra.mxu0 0.0
      %1400 = vmatprep.subr.mxu0 0.0
      %1401 = vmatpush1.msra.mxu0 0.0
      %1402 = vmatprep.subr.mxu0 0.0
      %1403 = vmatpush1.msra.mxu0 0.0
      %1404 = vmatprep.subr.mxu0 0.0
      %1405 = vmatpush1.msra.mxu0 0.0
      %1406 = vmatprep.subr.mxu0 0.0
      %1407 = vmatpush1.msra.mxu0 0.0
      %1408 = vmatprep.subr.mxu0 0.0
      %1409 = vmatpush1.msra.mxu0 0.0
      %1410 = vmatprep.subr.mxu0 0.0
      %1411 = vmatpush1.msra.mxu0 0.0
      %1412 = vmatprep.subr.mxu0 0.0
      %1413 = vmatpush1.msra.mxu0 0.0
      %1414 = vmatprep.subr.mxu0 0.0
      %1415 = vmatpush1.msra.mxu0 0.0
      %1416 = vmatprep.subr.mxu0 0.0
      %1417 = vmatpush1.msra.mxu0 0.0
      %1418 = vmatprep.subr.mxu0 0.0
      %1419 = vmatpush1.msra.mxu0 0.0
      %1420 = vmatprep.subr.mxu0 0.0
      %1421 = vmatpush1.msra.mxu0 0.0
      %1422 = vmatprep.subr.mxu0 0.0
      %1423 = vmatpush1.msra.mxu0 0.0
      %1424 = vmatprep.subr.mxu0 0.0
      %1425 = vmatpush1.msra.mxu0 0.0
      %1426 = vmatprep.mubr.f32.mxu0 0.0
      %1427 = vmatmul.mubr.f32.gmra.mrb[0].mxu0 %v1360
      %v1428 = vpop.f32.mrb[0].mxu0
      %v1429 = vadd.f32 0.0, %v1428
      %v1430 = vpop.f32.mrb[0].mxu0
      %1431 = vdwg.mxu0
      %v1432 = vadd.f32 %v1189, %v1429
      %1433 = vrot.lane.b32.xlu0 %v699, 104
      %v1434 = vpop.permute.xlu0 %1433
      %1435 = vrot.lane.b32.xlu0 %v699, 72
      %v1436 = vpop.permute.xlu0 %1435
      %v1437 = vsel %vm709, %v1434, 0
      %v1439 = vsel %vm709, %v1436, 0
      %1441 = vmatprep.subr.mxu0 0.0
      %1442 = vmatpush1.xpose.msra.mxu0 %v1439
      %1443 = vmatprep.subr.mxu0 0.0
      %1444 = vmatpush1.xpose.msra.mxu0 0.0
      %1445 = vmatprep.subr.mxu0 0.0
      %1446 = vmatpush1.xpose.msra.mxu0 0.0
      %1447 = vmatprep.subr.mxu0 0.0
      %1448 = vmatpush1.xpose.msra.mxu0 0.0
      %1449 = vmatprep.subr.mxu0 0.0
      %1450 = vmatpush1.xpose.msra.mxu0 0.0
      %1451 = vmatprep.subr.mxu0 0.0
      %1452 = vmatpush1.xpose.msra.mxu0 0.0
      %1453 = vmatprep.subr.mxu0 0.0
      %1454 = vmatpush1.xpose.msra.mxu0 0.0
      %1455 = vmatprep.subr.mxu0 0.0
      %1456 = vmatpush1.xpose.msra.mxu0 0.0
      %1457 = vmatprep.subr.mxu0 0.0
      %1458 = vmatpush1.xpose.msra.mxu0 0.0
      %1459 = vmatprep.subr.mxu0 0.0
      %1460 = vmatpush1.xpose.msra.mxu0 0.0
      %1461 = vmatprep.subr.mxu0 0.0
      %1462 = vmatpush1.xpose.msra.mxu0 0.0
      %1463 = vmatprep.subr.mxu0 0.0
      %1464 = vmatpush1.xpose.msra.mxu0 0.0
      %1465 = vmatprep.subr.mxu0 0.0
      %1466 = vmatpush1.xpose.msra.mxu0 0.0
      %1467 = vmatprep.subr.mxu0 0.0
      %1468 = vmatpush1.xpose.msra.mxu0 0.0
      %1469 = vmatprep.subr.mxu0 0.0
      %1470 = vmatpush1.xpose.msra.mxu0 0.0
      %1471 = vmatprep.subr.mxu0 0.0
      %1472 = vmatpush1.xpose.msra.mxu0 0.0
      %1473 = vmatprep.subr.mxu0 0.0
      %1474 = vmatpush1.xpose.msra.mxu0 0.0
      %1475 = vmatprep.subr.mxu0 0.0
      %1476 = vmatpush1.xpose.msra.mxu0 0.0
      %1477 = vmatprep.subr.mxu0 0.0
      %1478 = vmatpush1.xpose.msra.mxu0 0.0
      %1479 = vmatprep.subr.mxu0 0.0
      %1480 = vmatpush1.xpose.msra.mxu0 0.0
      %1481 = vmatprep.subr.mxu0 0.0
      %1482 = vmatpush1.xpose.msra.mxu0 0.0
      %1483 = vmatprep.subr.mxu0 0.0
      %1484 = vmatpush1.xpose.msra.mxu0 0.0
      %1485 = vmatprep.subr.mxu0 0.0
      %1486 = vmatpush1.xpose.msra.mxu0 0.0
      %1487 = vmatprep.subr.mxu0 0.0
      %1488 = vmatpush1.xpose.msra.mxu0 0.0
      %1489 = vmatprep.subr.mxu0 0.0
      %1490 = vmatpush1.xpose.msra.mxu0 0.0
      %1491 = vmatprep.subr.mxu0 0.0
      %1492 = vmatpush1.xpose.msra.mxu0 0.0
      %1493 = vmatprep.subr.mxu0 0.0
      %1494 = vmatpush1.xpose.msra.mxu0 0.0
      %1495 = vmatprep.subr.mxu0 0.0
      %1496 = vmatpush1.xpose.msra.mxu0 0.0
      %1497 = vmatprep.subr.mxu0 0.0
      %1498 = vmatpush1.xpose.msra.mxu0 0.0
      %1499 = vmatprep.subr.mxu0 0.0
      %1500 = vmatpush1.xpose.msra.mxu0 0.0
      %1501 = vmatprep.subr.mxu0 0.0
      %1502 = vmatpush1.xpose.msra.mxu0 0.0
      %1503 = vmatprep.subr.mxu0 0.0
      %1504 = vmatpush1.xpose.msra.mxu0 0.0
      %1505 = vmatprep.mubr.f32.mxu0 0.0
      %1506 = vmatmul.mubr.f32.gmra.mrb[0].mxu0 %v1437
      %v1507 = vpop.f32.mrb[0].mxu0
      %v1508 = vadd.f32 0.0, %v1507
      %v1509 = vpop.f32.mrb[0].mxu0
      %1510 = vdwg.mxu0
      %v1511 = vmul.f32 %v1508, 0.35355338
      %v1512 = vadd.f32 %v1511, %v789
      %v1513 = vsel %vm709, %v1512, -inf
      %1514 = vmax.xlane.f32.xlu0 %v1513
      %v1515 = vpop.xlane.xlu0 %1514
      %v1516 = vsub.f32 %v1512, %v1515
      %v1517 = vmul.f32 %v1516, 1.442695
      %v1518 = vpow.pop %v1517
      %v1519 = vsel %vm709, %v1518, 0.0
      %1520 = vadd.xlane.f32.xlu0 %v1519
      %v1521 = vpop.xlane.xlu0 %1520
      %v1522 = vrcp.pop %v1521
      %v1523 = vmul.f32 %v1518, %v1522
      %1524 = vrot.lane.b32.xlu0 %v699, 40
      %v1525 = vpop.permute.xlu0 %1524
      %v1528 = vsel %vm709, %v1523, 0
      %1530 = vmatprep.subr.mxu0 0.0
      %1531 = vmatpush1.msra.mxu0 %v1525
      %1532 = vmatprep.subr.mxu0 0.0
      %1533 = vmatpush1.msra.mxu0 0.0
      %1534 = vmatprep.subr.mxu0 0.0
      %1535 = vmatpush1.msra.mxu0 0.0
      %1536 = vmatprep.subr.mxu0 0.0
      %1537 = vmatpush1.msra.mxu0 0.0
      %1538 = vmatprep.subr.mxu0 0.0
      %1539 = vmatpush1.msra.mxu0 0.0
      %1540 = vmatprep.subr.mxu0 0.0
      %1541 = vmatpush1.msra.mxu0 0.0
      %1542 = vmatprep.subr.mxu0 0.0
      %1543 = vmatpush1.msra.mxu0 0.0
      %1544 = vmatprep.subr.mxu0 0.0
      %1545 = vmatpush1.msra.mxu0 0.0
      %1546 = vmatprep.subr.mxu0 0.0
      %1547 = vmatpush1.msra.mxu0 0.0
      %1548 = vmatprep.subr.mxu0 0.0
      %1549 = vmatpush1.msra.mxu0 0.0
      %1550 = vmatprep.subr.mxu0 0.0
      %1551 = vmatpush1.msra.mxu0 0.0
      %1552 = vmatprep.subr.mxu0 0.0
      %1553 = vmatpush1.msra.mxu0 0.0
      %1554 = vmatprep.subr.mxu0 0.0
      %1555 = vmatpush1.msra.mxu0 0.0
      %1556 = vmatprep.subr.mxu0 0.0
      %1557 = vmatpush1.msra.mxu0 0.0
      %1558 = vmatprep.subr.mxu0 0.0
      %1559 = vmatpush1.msra.mxu0 0.0
      %1560 = vmatprep.subr.mxu0 0.0
      %1561 = vmatpush1.msra.mxu0 0.0
      %1562 = vmatprep.subr.mxu0 0.0
      %1563 = vmatpush1.msra.mxu0 0.0
      %1564 = vmatprep.subr.mxu0 0.0
      %1565 = vmatpush1.msra.mxu0 0.0
      %1566 = vmatprep.subr.mxu0 0.0
      %1567 = vmatpush1.msra.mxu0 0.0
      %1568 = vmatprep.subr.mxu0 0.0
      %1569 = vmatpush1.msra.mxu0 0.0
      %1570 = vmatprep.subr.mxu0 0.0
      %1571 = vmatpush1.msra.mxu0 0.0
      %1572 = vmatprep.subr.mxu0 0.0
      %1573 = vmatpush1.msra.mxu0 0.0
      %1574 = vmatprep.subr.mxu0 0.0
      %1575 = vmatpush1.msra.mxu0 0.0
      %1576 = vmatprep.subr.mxu0 0.0
      %1577 = vmatpush1.msra.mxu0 0.0
      %1578 = vmatprep.subr.mxu0 0.0
      %1579 = vmatpush1.msra.mxu0 0.0
      %1580 = vmatprep.subr.mxu0 0.0
      %1581 = vmatpush1.msra.mxu0 0.0
      %1582 = vmatprep.subr.mxu0 0.0
      %1583 = vmatpush1.msra.mxu0 0.0
      %1584 = vmatprep.subr.mxu0 0.0
      %1585 = vmatpush1.msra.mxu0 0.0
      %1586 = vmatprep.subr.mxu0 0.0
      %1587 = vmatpush1.msra.mxu0 0.0
      %1588 = vmatprep.subr.mxu0 0.0
      %1589 = vmatpush1.msra.mxu0 0.0
      %1590 = vmatprep.subr.mxu0 0.0
      %1591 = vmatpush1.msra.mxu0 0.0
      %1592 = vmatprep.subr.mxu0 0.0
      %1593 = vmatpush1.msra.mxu0 0.0
      %1594 = vmatprep.mubr.f32.mxu0 0.0
      %1595 = vmatmul.mubr.f32.gmra.mrb[0].mxu0 %v1528
      %v1596 = vpop.f32.mrb[0].mxu0
      %v1597 = vadd.f32 0.0, %v1596
      %v1598 = vpop.f32.mrb[0].mxu0
      %1599 = vdwg.mxu0
      %v1601 = vsel %vm709, %v1597, 0
      %1603 = vmatprep.subr.mxu0 0.0
      %1604 = vmatpush1.msra.mxu0 %v705
      %1605 = vmatprep.subr.mxu0 0.0
      %1606 = vmatpush1.msra.mxu0 0.0
      %1607 = vmatprep.subr.mxu0 0.0
      %1608 = vmatpush1.msra.mxu0 0.0
      %1609 = vmatprep.subr.mxu0 0.0
      %1610 = vmatpush1.msra.mxu0 0.0
      %1611 = vmatprep.subr.mxu0 0.0
      %1612 = vmatpush1.msra.mxu0 0.0
      %1613 = vmatprep.subr.mxu0 0.0
      %1614 = vmatpush1.msra.mxu0 0.0
      %1615 = vmatprep.subr.mxu0 0.0
      %1616 = vmatpush1.msra.mxu0 0.0
      %1617 = vmatprep.subr.mxu0 0.0
      %1618 = vmatpush1.msra.mxu0 0.0
      %1619 = vmatprep.subr.mxu0 0.0
      %1620 = vmatpush1.msra.mxu0 0.0
      %1621 = vmatprep.subr.mxu0 0.0
      %1622 = vmatpush1.msra.mxu0 0.0
      %1623 = vmatprep.subr.mxu0 0.0
      %1624 = vmatpush1.msra.mxu0 0.0
      %1625 = vmatprep.subr.mxu0 0.0
      %1626 = vmatpush1.msra.mxu0 0.0
      %1627 = vmatprep.subr.mxu0 0.0
      %1628 = vmatpush1.msra.mxu0 0.0
      %1629 = vmatprep.subr.mxu0 0.0
      %1630 = vmatpush1.msra.mxu0 0.0
      %1631 = vmatprep.subr.mxu0 0.0
      %1632 = vmatpush1.msra.mxu0 0.0
      %1633 = vmatprep.subr.mxu0 0.0
      %1634 = vmatpush1.msra.mxu0 0.0
      %1635 = vmatprep.subr.mxu0 0.0
      %1636 = vmatpush1.msra.mxu0 0.0
      %1637 = vmatprep.subr.mxu0 0.0
      %1638 = vmatpush1.msra.mxu0 0.0
      %1639 = vmatprep.subr.mxu0 0.0
      %1640 = vmatpush1.msra.mxu0 0.0
      %1641 = vmatprep.subr.mxu0 0.0
      %1642 = vmatpush1.msra.mxu0 0.0
      %1643 = vmatprep.subr.mxu0 0.0
      %1644 = vmatpush1.msra.mxu0 0.0
      %1645 = vmatprep.subr.mxu0 0.0
      %1646 = vmatpush1.msra.mxu0 0.0
      %1647 = vmatprep.subr.mxu0 0.0
      %1648 = vmatpush1.msra.mxu0 0.0
      %1649 = vmatprep.subr.mxu0 0.0
      %1650 = vmatpush1.msra.mxu0 0.0
      %1651 = vmatprep.subr.mxu0 0.0
      %1652 = vmatpush1.msra.mxu0 0.0
      %1653 = vmatprep.subr.mxu0 0.0
      %1654 = vmatpush1.msra.mxu0 0.0
      %1655 = vmatprep.subr.mxu0 0.0
      %1656 = vmatpush1.msra.mxu0 0.0
      %1657 = vmatprep.subr.mxu0 0.0
      %1658 = vmatpush1.msra.mxu0 0.0
      %1659 = vmatprep.subr.mxu0 0.0
      %1660 = vmatpush1.msra.mxu0 0.0
      %1661 = vmatprep.subr.mxu0 0.0
      %1662 = vmatpush1.msra.mxu0 0.0
      %1663 = vmatprep.subr.mxu0 0.0
      %1664 = vmatpush1.msra.mxu0 0.0
      %1665 = vmatprep.subr.mxu0 0.0
      %1666 = vmatpush1.msra.mxu0 0.0
      %1667 = vmatprep.mubr.f32.mxu0 0.0
      %1668 = vmatmul.mubr.f32.gmra.mrb[0].mxu0 %v1601
      %v1669 = vpop.f32.mrb[0].mxu0
      %v1670 = vadd.f32 0.0, %v1669
      %v1671 = vpop.f32.mrb[0].mxu0
      %1672 = vdwg.mxu0
      %v1673 = vadd.f32 %v1432, %v1670
      %v1674 = vld [vmem:[%s7] sm:$0x1]
      %v1676 = vlaneseq
      %v1677 = vshrl.u32 %v1676, 7
      %v1678 = vsub.s32 0, %v1677
      %v1679 = vrot.slane %v1674, %v1678
      %v1681 = vadd.f32 %v1673, %v1679
      %v1682 = vadd.f32 %v1681, %v616
      %v1683 = vld [vmem:[%s8] sm:$0x1]
      %v1684 = vld [vmem:[%s9] sm:$0x1]
      %v1685 = vsel %vm588, %v1682, 0.0
      %1686 = vadd.xlane.f32.xlu0 %v1685
      %v1687 = vpop.xlane.xlu0 %1686
      %v1688 = vmul.f32 %v1687, %v592
      %v1689 = vsub.f32 %v1682, %v1688
      %v1690 = vmul.f32 %v1689, %v1689
      %v1691 = vsel %vm588, %v1690, 0.0
      %1692 = vadd.xlane.f32.xlu0 %v1691
      %v1693 = vpop.xlane.xlu0 %1692
      %v1694 = vmul.f32 %v1693, %v592
      %v1695 = vadd.f32 %v1694, 1e-05
      %v1696 = vrsqrt.pop %v1695
      %v1697 = vmul.f32 %v1689, %v1696
      %v1699 = vlaneseq
      %v1700 = vshrl.u32 %v1699, 7
      %v1701 = vsub.s32 0, %v1700
      %v1702 = vrot.slane %v1683, %v1701
      %v1704 = vmul.f32 %v1697, %v1702
      %v1706 = vlaneseq
      %v1707 = vshrl.u32 %v1706, 7
      %v1708 = vsub.s32 0, %v1707
      %v1709 = vrot.slane %v1684, %v1708
      %v1711 = vadd.f32 %v1704, %v1709
      %v1712 = vld [vmem:[%s10] sm:$0xff]
      %v1713 = vld [vmem:[%s10 + $0x8] sm:$0xff]
      %v1714 = vld [vmem:[%s10 + $0x10] sm:$0xff]
      %v1715 = vld [vmem:[%s10 + $0x18] sm:$0xff]
      %v1716 = vld [vmem:[%s11] sm:$0x1]
      %v1718 = vlaneseq
      %v1719 = vshrl.u32 %v1718, 7
      %v1720 = vsub.s32 0, %v1719
      %v1721 = vrot.slane %v1716, %v1720
      %v1724 = vsel %vm588, %v1711, 0
      %1726 = vmatprep.subr.mxu0 0.0
      %1727 = vmatpush1.msra.mxu0 %v1712
      %1728 = vmatprep.subr.mxu0 0.0
      %1729 = vmatpush1.msra.mxu0 %v1713
      %1730 = vmatprep.subr.mxu0 0.0
      %1731 = vmatpush1.msra.mxu0 %v1714
      %1732 = vmatprep.subr.mxu0 0.0
      %1733 = vmatpush1.msra.mxu0 %v1715
      %1734 = vmatprep.subr.mxu0 0.0
      %1735 = vmatpush1.msra.mxu0 0.0
      %1736 = vmatprep.subr.mxu0 0.0
      %1737 = vmatpush1.msra.mxu0 0.0
      %1738 = vmatprep.subr.mxu0 0.0
      %1739 = vmatpush1.msra.mxu0 0.0
      %1740 = vmatprep.subr.mxu0 0.0
      %1741 = vmatpush1.msra.mxu0 0.0
      %1742 = vmatprep.subr.mxu0 0.0
      %1743 = vmatpush1.msra.mxu0 0.0
      %1744 = vmatprep.subr.mxu0 0.0
      %1745 = vmatpush1.msra.mxu0 0.0
      %1746 = vmatprep.subr.mxu0 0.0
      %1747 = vmatpush1.msra.mxu0 0.0
      %1748 = vmatprep.subr.mxu0 0.0
      %1749 = vmatpush1.msra.mxu0 0.0
      %1750 = vmatprep.subr.mxu0 0.0
      %1751 = vmatpush1.msra.mxu0 0.0
      %1752 = vmatprep.subr.mxu0 0.0
      %1753 = vmatpush1.msra.mxu0 0.0
      %1754 = vmatprep.subr.mxu0 0.0
      %1755 = vmatpush1.msra.mxu0 0.0
      %1756 = vmatprep.subr.mxu0 0.0
      %1757 = vmatpush1.msra.mxu0 0.0
      %1758 = vmatprep.subr.mxu0 0.0
      %1759 = vmatpush1.msra.mxu0 0.0
      %1760 = vmatprep.subr.mxu0 0.0
      %1761 = vmatpush1.msra.mxu0 0.0
      %1762 = vmatprep.subr.mxu0 0.0
      %1763 = vmatpush1.msra.mxu0 0.0
      %1764 = vmatprep.subr.mxu0 0.0
      %1765 = vmatpush1.msra.mxu0 0.0
      %1766 = vmatprep.subr.mxu0 0.0
      %1767 = vmatpush1.msra.mxu0 0.0
      %1768 = vmatprep.subr.mxu0 0.0
      %1769 = vmatpush1.msra.mxu0 0.0
      %1770 = vmatprep.subr.mxu0 0.0
      %1771 = vmatpush1.msra.mxu0 0.0
      %1772 = vmatprep.subr.mxu0 0.0
      %1773 = vmatpush1.msra.mxu0 0.0
      %1774 = vmatprep.subr.mxu0 0.0
      %1775 = vmatpush1.msra.mxu0 0.0
      %1776 = vmatprep.subr.mxu0 0.0
      %1777 = vmatpush1.msra.mxu0 0.0
      %1778 = vmatprep.subr.mxu0 0.0
      %1779 = vmatpush1.msra.mxu0 0.0
      %1780 = vmatprep.subr.mxu0 0.0
      %1781 = vmatpush1.msra.mxu0 0.0
      %1782 = vmatprep.subr.mxu0 0.0
      %1783 = vmatpush1.msra.mxu0 0.0
      %1784 = vmatprep.subr.mxu0 0.0
      %1785 = vmatpush1.msra.mxu0 0.0
      %1786 = vmatprep.subr.mxu0 0.0
      %1787 = vmatpush1.msra.mxu0 0.0
      %1788 = vmatprep.subr.mxu0 0.0
      %1789 = vmatpush1.msra.mxu0 0.0
      %1790 = vmatprep.mubr.f32.mxu0 0.0
      %1791 = vmatmul.mubr.f32.gmra.mrb[0].mxu0 %v1724
      %v1792 = vpop.f32.mrb[0].mxu0
      %v1793 = vadd.f32 %v1721, %v1792
      %v1794 = vpop.f32.mrb[0].mxu0
      %1795 = vdwg.mxu0
      %v1796 = vmul.f32 %v1793, 0.5
      %v1797 = vmul.f32 %v1793, 0.70710677
      %v1798 = vand.u32 2147483647, %v1797
      %v1799 = vmul.f32 %v1798, 0.3275911
      %v1800 = vadd.f32 %v1799, 1.0
      %v1801 = vrcp.pop %v1800
      %v1802 = vmul.f32 1.0, %v1801
      %v1803 = vmul.f32 %v1802, 1.0614054
      %v1804 = vadd.f32 %v1803, -1.4531521
      %v1805 = vmul.f32 %v1804, %v1802
      %v1806 = vadd.f32 %v1805, 1.4214138
      %v1807 = vmul.f32 %v1806, %v1802
      %v1808 = vadd.f32 %v1807, -0.28449672
      %v1809 = vmul.f32 %v1808, %v1802
      %v1810 = vadd.f32 %v1809, 0.2548296
      %v1811 = vmul.f32 %v1810, %v1802
      %v1812 = vmul.f32 %v1798, %v1798
      %v1813 = vsub.f32 0.0, %v1812
      %v1814 = vmul.f32 %v1813, 1.442695
      %v1815 = vpow.pop %v1814
      %v1816 = vmul.f32 %v1811, %v1815
      %v1817 = vsub.f32 1.0, %v1816
      %vm1818 = vcmp.lt.f32.partialorder %v1797, 0.0
      %v1819 = vsub.f32 0.0, %v1817
      %v1820 = vsel %vm1818, %v1819, %v1817
      %v1821 = vadd.f32 %v1820, 1.0
      %v1822 = vmul.f32 %v1796, %v1821
      %v1823 = vld [vmem:[%s12] sm:$0xff]
      %v1824 = vld [vmem:[%s12 + $0x8] sm:$0xff]
      %v1825 = vld [vmem:[%s12 + $0x10] sm:$0xff]
      %v1826 = vld [vmem:[%s12 + $0x18] sm:$0xff]
      %v1827 = vld [vmem:[%s12 + $0x20] sm:$0xff]
      %v1828 = vld [vmem:[%s12 + $0x28] sm:$0xff]
      %v1829 = vld [vmem:[%s12 + $0x30] sm:$0xff]
      %v1830 = vld [vmem:[%s12 + $0x38] sm:$0xff]
      %v1831 = vld [vmem:[%s13] sm:$0x1]
      %v1833 = vlaneseq
      %v1834 = vshrl.u32 %v1833, 7
      %v1835 = vsub.s32 0, %v1834
      %v1836 = vrot.slane %v1831, %v1835
      %vm1838 = vcmask 523264
      %v1840 = vsel %vm1838, %v1822, 0
      %1842 = vmatprep.subr.mxu0 0.0
      %1843 = vmatpush1.msra.mxu0 %v1823
      %1844 = vmatprep.subr.mxu0 0.0
      %1845 = vmatpush1.msra.mxu0 %v1824
      %1846 = vmatprep.subr.mxu0 0.0
      %1847 = vmatpush1.msra.mxu0 %v1825
      %1848 = vmatprep.subr.mxu0 0.0
      %1849 = vmatpush1.msra.mxu0 %v1826
      %1850 = vmatprep.subr.mxu0 0.0
      %1851 = vmatpush1.msra.mxu0 %v1827
      %1852 = vmatprep.subr.mxu0 0.0
      %1853 = vmatpush1.msra.mxu0 %v1828
      %1854 = vmatprep.subr.mxu0 0.0
      %1855 = vmatpush1.msra.mxu0 %v1829
      %1856 = vmatprep.subr.mxu0 0.0
      %1857 = vmatpush1.msra.mxu0 %v1830
      %1858 = vmatprep.subr.mxu0 0.0
      %1859 = vmatpush1.msra.mxu0 0.0
      %1860 = vmatprep.subr.mxu0 0.0
      %1861 = vmatpush1.msra.mxu0 0.0
      %1862 = vmatprep.subr.mxu0 0.0
      %1863 = vmatpush1.msra.mxu0 0.0
      %1864 = vmatprep.subr.mxu0 0.0
      %1865 = vmatpush1.msra.mxu0 0.0
      %1866 = vmatprep.subr.mxu0 0.0
      %1867 = vmatpush1.msra.mxu0 0.0
      %1868 = vmatprep.subr.mxu0 0.0
      %1869 = vmatpush1.msra.mxu0 0.0
      %1870 = vmatprep.subr.mxu0 0.0
      %1871 = vmatpush1.msra.mxu0 0.0
      %1872 = vmatprep.subr.mxu0 0.0
      %1873 = vmatpush1.msra.mxu0 0.0
      %1874 = vmatprep.subr.mxu0 0.0
      %1875 = vmatpush1.msra.mxu0 0.0
      %1876 = vmatprep.subr.mxu0 0.0
      %1877 = vmatpush1.msra.mxu0 0.0
      %1878 = vmatprep.subr.mxu0 0.0
      %1879 = vmatpush1.msra.mxu0 0.0
      %1880 = vmatprep.subr.mxu0 0.0
      %1881 = vmatpush1.msra.mxu0 0.0
      %1882 = vmatprep.subr.mxu0 0.0
      %1883 = vmatpush1.msra.mxu0 0.0
      %1884 = vmatprep.subr.mxu0 0.0
      %1885 = vmatpush1.msra.mxu0 0.0
      %1886 = vmatprep.subr.mxu0 0.0
      %1887 = vmatpush1.msra.mxu0 0.0
      %1888 = vmatprep.subr.mxu0 0.0
      %1889 = vmatpush1.msra.mxu0 0.0
      %1890 = vmatprep.subr.mxu0 0.0
      %1891 = vmatpush1.msra.mxu0 0.0
      %1892 = vmatprep.subr.mxu0 0.0
      %1893 = vmatpush1.msra.mxu0 0.0
      %1894 = vmatprep.subr.mxu0 0.0
      %1895 = vmatpush1.msra.mxu0 0.0
      %1896 = vmatprep.subr.mxu0 0.0
      %1897 = vmatpush1.msra.mxu0 0.0
      %1898 = vmatprep.subr.mxu0 0.0
      %1899 = vmatpush1.msra.mxu0 0.0
      %1900 = vmatprep.subr.mxu0 0.0
      %1901 = vmatpush1.msra.mxu0 0.0
      %1902 = vmatprep.subr.mxu0 0.0
      %1903 = vmatpush1.msra.mxu0 0.0
      %1904 = vmatprep.subr.mxu0 0.0
      %1905 = vmatpush1.msra.mxu0 0.0
      %1906 = vmatprep.mubr.f32.mxu0 0.0
      %1907 = vmatmul.mubr.f32.gmra.mrb[0].mxu0 %v1840
      %v1908 = vpop.f32.mrb[0].mxu0
      %v1909 = vadd.f32 %v1836, %v1908
      %v1910 = vpop.f32.mrb[0].mxu0
      %1911 = vdwg.mxu0
      %v1912 = vadd.f32 %v1909, %v1711
      %v1913 = vld [vmem:[%s14] sm:$0x1]
      %v1914 = vld [vmem:[%s15] sm:$0x1]
      %v1915 = vsel %vm588, %v1912, 0.0
      %1916 = vadd.xlane.f32.xlu0 %v1915
      %v1917 = vpop.xlane.xlu0 %1916
      %v1918 = vmul.f32 %v1917, %v592
      %v1919 = vsub.f32 %v1912, %v1918
      %v1920 = vmul.f32 %v1919, %v1919
      %v1921 = vsel %vm588, %v1920, 0.0
      %1922 = vadd.xlane.f32.xlu0 %v1921
      %v1923 = vpop.xlane.xlu0 %1922
      %v1924 = vmul.f32 %v1923, %v592
      %v1925 = vadd.f32 %v1924, 1e-05
      %v1926 = vrsqrt.pop %v1925
      %v1927 = vmul.f32 %v1919, %v1926
      %v1929 = vlaneseq
      %v1930 = vshrl.u32 %v1929, 7
      %v1931 = vsub.s32 0, %v1930
      %v1932 = vrot.slane %v1913, %v1931
      %v1934 = vmul.f32 %v1927, %v1932
      %v1936 = vlaneseq
      %v1937 = vshrl.u32 %v1936, 7
      %v1938 = vsub.s32 0, %v1937
      %v1939 = vrot.slane %v1914, %v1938
      %v1941 = vadd.f32 %v1934, %v1939
      %s1942 = scalar_lea.vmem %s4, 32
      %v1943 = vld [vmem:[%s1942] sm:$0xff]
      %v1944 = vld [vmem:[%s1942 + $0x8] sm:$0xff]
      %v1945 = vld [vmem:[%s1942 + $0x10] sm:$0xff]
      %v1946 = vld [vmem:[%s1942 + $0x18] sm:$0xff]
      %s1947 = scalar_lea.vmem %s5, 1
      %v1948 = vld [vmem:[%s1947] sm:$0x1]
      %v1950 = vlaneseq
      %v1951 = vshrl.u32 %v1950, 7
      %v1952 = vsub.s32 0, %v1951
      %v1953 = vrot.slane %v1948, %v1952
      %v1956 = vsel %vm588, %v1941, 0
      %1958 = vmatprep.subr.mxu0 0.0
      %1959 = vmatpush1.msra.mxu0 %v1943
      %1960 = vmatprep.subr.mxu0 0.0
      %1961 = vmatpush1.msra.mxu0 %v1944
      %1962 = vmatprep.subr.mxu0 0.0
      %1963 = vmatpush1.msra.mxu0 %v1945
      %1964 = vmatprep.subr.mxu0 0.0
      %1965 = vmatpush1.msra.mxu0 %v1946
      %1966 = vmatprep.subr.mxu0 0.0
      %1967 = vmatpush1.msra.mxu0 0.0
      %1968 = vmatprep.subr.mxu0 0.0
      %1969 = vmatpush1.msra.mxu0 0.0
      %1970 = vmatprep.subr.mxu0 0.0
      %1971 = vmatpush1.msra.mxu0 0.0
      %1972 = vmatprep.subr.mxu0 0.0
      %1973 = vmatpush1.msra.mxu0 0.0
      %1974 = vmatprep.subr.mxu0 0.0
      %1975 = vmatpush1.msra.mxu0 0.0
      %1976 = vmatprep.subr.mxu0 0.0
      %1977 = vmatpush1.msra.mxu0 0.0
      %1978 = vmatprep.subr.mxu0 0.0
      %1979 = vmatpush1.msra.mxu0 0.0
      %1980 = vmatprep.subr.mxu0 0.0
      %1981 = vmatpush1.msra.mxu0 0.0
      %1982 = vmatprep.subr.mxu0 0.0
      %1983 = vmatpush1.msra.mxu0 0.0
      %1984 = vmatprep.subr.mxu0 0.0
      %1985 = vmatpush1.msra.mxu0 0.0
      %1986 = vmatprep.subr.mxu0 0.0
      %1987 = vmatpush1.msra.mxu0 0.0
      %1988 = vmatprep.subr.mxu0 0.0
      %1989 = vmatpush1.msra.mxu0 0.0
      %1990 = vmatprep.subr.mxu0 0.0
      %1991 = vmatpush1.msra.mxu0 0.0
      %1992 = vmatprep.subr.mxu0 0.0
      %1993 = vmatpush1.msra.mxu0 0.0
      %1994 = vmatprep.subr.mxu0 0.0
      %1995 = vmatpush1.msra.mxu0 0.0
      %1996 = vmatprep.subr.mxu0 0.0
      %1997 = vmatpush1.msra.mxu0 0.0
      %1998 = vmatprep.subr.mxu0 0.0
      %1999 = vmatpush1.msra.mxu0 0.0
      %2000 = vmatprep.subr.mxu0 0.0
      %2001 = vmatpush1.msra.mxu0 0.0
      %2002 = vmatprep.subr.mxu0 0.0
      %2003 = vmatpush1.msra.mxu0 0.0
      %2004 = vmatprep.subr.mxu0 0.0
      %2005 = vmatpush1.msra.mxu0 0.0
      %2006 = vmatprep.subr.mxu0 0.0
      %2007 = vmatpush1.msra.mxu0 0.0
      %2008 = vmatprep.subr.mxu0 0.0
      %2009 = vmatpush1.msra.mxu0 0.0
      %2010 = vmatprep.subr.mxu0 0.0
      %2011 = vmatpush1.msra.mxu0 0.0
      %2012 = vmatprep.subr.mxu0 0.0
      %2013 = vmatpush1.msra.mxu0 0.0
      %2014 = vmatprep.subr.mxu0 0.0
      %2015 = vmatpush1.msra.mxu0 0.0
      %2016 = vmatprep.subr.mxu0 0.0
      %2017 = vmatpush1.msra.mxu0 0.0
      %2018 = vmatprep.subr.mxu0 0.0
      %2019 = vmatpush1.msra.mxu0 0.0
      %2020 = vmatprep.subr.mxu0 0.0
      %2021 = vmatpush1.msra.mxu0 0.0
      %2022 = vmatprep.mubr.f32.mxu0 0.0
      %2023 = vmatmul.mubr.f32.gmra.mrb[0].mxu0 %v1956
      %v2024 = vpop.f32.mrb[0].mxu0
      %v2025 = vadd.f32 %v1953, %v2024
      %v2026 = vpop.f32.mrb[0].mxu0
      %2027 = vdwg.mxu0
      %s2028 = scalar_lea.vmem %s6, 32
      %v2029 = vld [vmem:[%s2028] sm:$0xff]
      %v2030 = vld [vmem:[%s2028 + $0x8] sm:$0xff]
      %v2031 = vld [vmem:[%s2028 + $0x10] sm:$0xff]
      %v2032 = vld [vmem:[%s2028 + $0x18] sm:$0xff]
      %2034 = vrot.lane.b32.xlu0 %v2025, 96
      %v2035 = vpop.permute.xlu0 %2034
      %v2036 = vsel %vm709, %v2025, 0
      %v2038 = vsel %vm709, %v2035, 0
      %2040 = vmatprep.subr.mxu0 0.0
      %2041 = vmatpush1.xpose.msra.mxu0 %v2038
      %2042 = vmatprep.subr.mxu0 0.0
      %2043 = vmatpush1.xpose.msra.mxu0 0.0
      %2044 = vmatprep.subr.mxu0 0.0
      %2045 = vmatpush1.xpose.msra.mxu0 0.0
      %2046 = vmatprep.subr.mxu0 0.0
      %2047 = vmatpush1.xpose.msra.mxu0 0.0
      %2048 = vmatprep.subr.mxu0 0.0
      %2049 = vmatpush1.xpose.msra.mxu0 0.0
      %2050 = vmatprep.subr.mxu0 0.0
      %2051 = vmatpush1.xpose.msra.mxu0 0.0
      %2052 = vmatprep.subr.mxu0 0.0
      %2053 = vmatpush1.xpose.msra.mxu0 0.0
      %2054 = vmatprep.subr.mxu0 0.0
      %2055 = vmatpush1.xpose.msra.mxu0 0.0
      %2056 = vmatprep.subr.mxu0 0.0
      %2057 = vmatpush1.xpose.msra.mxu0 0.0
      %2058 = vmatprep.subr.mxu0 0.0
      %2059 = vmatpush1.xpose.msra.mxu0 0.0
      %2060 = vmatprep.subr.mxu0 0.0
      %2061 = vmatpush1.xpose.msra.mxu0 0.0
      %2062 = vmatprep.subr.mxu0 0.0
      %2063 = vmatpush1.xpose.msra.mxu0 0.0
      %2064 = vmatprep.subr.mxu0 0.0
      %2065 = vmatpush1.xpose.msra.mxu0 0.0
      %2066 = vmatprep.subr.mxu0 0.0
      %2067 = vmatpush1.xpose.msra.mxu0 0.0
      %2068 = vmatprep.subr.mxu0 0.0
      %2069 = vmatpush1.xpose.msra.mxu0 0.0
      %2070 = vmatprep.subr.mxu0 0.0
      %2071 = vmatpush1.xpose.msra.mxu0 0.0
      %2072 = vmatprep.subr.mxu0 0.0
      %2073 = vmatpush1.xpose.msra.mxu0 0.0
      %2074 = vmatprep.subr.mxu0 0.0
      %2075 = vmatpush1.xpose.msra.mxu0 0.0
      %2076 = vmatprep.subr.mxu0 0.0
      %2077 = vmatpush1.xpose.msra.mxu0 0.0
      %2078 = vmatprep.subr.mxu0 0.0
      %2079 = vmatpush1.xpose.msra.mxu0 0.0
      %2080 = vmatprep.subr.mxu0 0.0
      %2081 = vmatpush1.xpose.msra.mxu0 0.0
      %2082 = vmatprep.subr.mxu0 0.0
      %2083 = vmatpush1.xpose.msra.mxu0 0.0
      %2084 = vmatprep.subr.mxu0 0.0
      %2085 = vmatpush1.xpose.msra.mxu0 0.0
      %2086 = vmatprep.subr.mxu0 0.0
      %2087 = vmatpush1.xpose.msra.mxu0 0.0
      %2088 = vmatprep.subr.mxu0 0.0
      %2089 = vmatpush1.xpose.msra.mxu0 0.0
      %2090 = vmatprep.subr.mxu0 0.0
      %2091 = vmatpush1.xpose.msra.mxu0 0.0
      %2092 = vmatprep.subr.mxu0 0.0
      %2093 = vmatpush1.xpose.msra.mxu0 0.0
      %2094 = vmatprep.subr.mxu0 0.0
      %2095 = vmatpush1.xpose.msra.mxu0 0.0
      %2096 = vmatprep.subr.mxu0 0.0
      %2097 = vmatpush1.xpose.msra.mxu0 0.0
      %2098 = vmatprep.subr.mxu0 0.0
      %2099 = vmatpush1.xpose.msra.mxu0 0.0
      %2100 = vmatprep.subr.mxu0 0.0
      %2101 = vmatpush1.xpose.msra.mxu0 0.0
      %2102 = vmatprep.subr.mxu0 0.0
      %2103 = vmatpush1.xpose.msra.mxu0 0.0
      %2104 = vmatprep.mubr.f32.mxu0 0.0
      %2105 = vmatmul.mubr.f32.gmra.mrb[0].mxu0 %v2036
      %v2106 = vpop.f32.mrb[0].mxu0
      %v2107 = vadd.f32 0.0, %v2106
      %v2108 = vpop.f32.mrb[0].mxu0
      %2109 = vdwg.mxu0
      %v2110 = vmul.f32 %v2107, 0.35355338
      %v2111 = vadd.f32 %v2110, %v789
      %v2112 = vsel %vm709, %v2111, -inf
      %2113 = vmax.xlane.f32.xlu0 %v2112
      %v2114 = vpop.xlane.xlu0 %2113
      %v2115 = vsub.f32 %v2111, %v2114
      %v2116 = vmul.f32 %v2115, 1.442695
      %v2117 = vpow.pop %v2116
      %v2118 = vsel %vm709, %v2117, 0.0
      %2119 = vadd.xlane.f32.xlu0 %v2118
      %v2120 = vpop.xlane.xlu0 %2119
      %v2121 = vrcp.pop %v2120
      %v2122 = vmul.f32 %v2117, %v2121
      %2123 = vrot.lane.b32.xlu0 %v2025, 64
      %v2124 = vpop.permute.xlu0 %2123
      %v2127 = vsel %vm709, %v2122, 0
      %2129 = vmatprep.subr.mxu0 0.0
      %2130 = vmatpush1.msra.mxu0 %v2124
      %2131 = vmatprep.subr.mxu0 0.0
      %2132 = vmatpush1.msra.mxu0 0.0
      %2133 = vmatprep.subr.mxu0 0.0
      %2134 = vmatpush1.msra.mxu0 0.0
      %2135 = vmatprep.subr.mxu0 0.0
      %2136 = vmatpush1.msra.mxu0 0.0
      %2137 = vmatprep.subr.mxu0 0.0
      %2138 = vmatpush1.msra.mxu0 0.0
      %2139 = vmatprep.subr.mxu0 0.0
      %2140 = vmatpush1.msra.mxu0 0.0
      %2141 = vmatprep.subr.mxu0 0.0
      %2142 = vmatpush1.msra.mxu0 0.0
      %2143 = vmatprep.subr.mxu0 0.0
      %2144 = vmatpush1.msra.mxu0 0.0
      %2145 = vmatprep.subr.mxu0 0.0
      %2146 = vmatpush1.msra.mxu0 0.0
      %2147 = vmatprep.subr.mxu0 0.0
      %2148 = vmatpush1.msra.mxu0 0.0
      %2149 = vmatprep.subr.mxu0 0.0
      %2150 = vmatpush1.msra.mxu0 0.0
      %2151 = vmatprep.subr.mxu0 0.0
      %2152 = vmatpush1.msra.mxu0 0.0
      %2153 = vmatprep.subr.mxu0 0.0
      %2154 = vmatpush1.msra.mxu0 0.0
      %2155 = vmatprep.subr.mxu0 0.0
      %2156 = vmatpush1.msra.mxu0 0.0
      %2157 = vmatprep.subr.mxu0 0.0
      %2158 = vmatpush1.msra.mxu0 0.0
      %2159 = vmatprep.subr.mxu0 0.0
      %2160 = vmatpush1.msra.mxu0 0.0
      %2161 = vmatprep.subr.mxu0 0.0
      %2162 = vmatpush1.msra.mxu0 0.0
      %2163 = vmatprep.subr.mxu0 0.0
      %2164 = vmatpush1.msra.mxu0 0.0
      %2165 = vmatprep.subr.mxu0 0.0
      %2166 = vmatpush1.msra.mxu0 0.0
      %2167 = vmatprep.subr.mxu0 0.0
      %2168 = vmatpush1.msra.mxu0 0.0
      %2169 = vmatprep.subr.mxu0 0.0
      %2170 = vmatpush1.msra.mxu0 0.0
      %2171 = vmatprep.subr.mxu0 0.0
      %2172 = vmatpush1.msra.mxu0 0.0
      %2173 = vmatprep.subr.mxu0 0.0
      %2174 = vmatpush1.msra.mxu0 0.0
      %2175 = vmatprep.subr.mxu0 0.0
      %2176 = vmatpush1.msra.mxu0 0.0
      %2177 = vmatprep.subr.mxu0 0.0
      %2178 = vmatpush1.msra.mxu0 0.0
      %2179 = vmatprep.subr.mxu0 0.0
      %2180 = vmatpush1.msra.mxu0 0.0
      %2181 = vmatprep.subr.mxu0 0.0
      %2182 = vmatpush1.msra.mxu0 0.0
      %2183 = vmatprep.subr.mxu0 0.0
      %2184 = vmatpush1.msra.mxu0 0.0
      %2185 = vmatprep.subr.mxu0 0.0
      %2186 = vmatpush1.msra.mxu0 0.0
      %2187 = vmatprep.subr.mxu0 0.0
      %2188 = vmatpush1.msra.mxu0 0.0
      %2189 = vmatprep.subr.mxu0 0.0
      %2190 = vmatpush1.msra.mxu0 0.0
      %2191 = vmatprep.subr.mxu0 0.0
      %2192 = vmatpush1.msra.mxu0 0.0
      %2193 = vmatprep.mubr.f32.mxu0 0.0
      %2194 = vmatmul.mubr.f32.gmra.mrb[0].mxu0 %v2127
      %v2195 = vpop.f32.mrb[0].mxu0
      %v2196 = vadd.f32 0.0, %v2195
      %v2197 = vpop.f32.mrb[0].mxu0
      %2198 = vdwg.mxu0
      %2199 = vrot.lane.b32.xlu0 %v2025, 120
      %v2200 = vpop.permute.xlu0 %2199
      %2201 = vrot.lane.b32.xlu0 %v2025, 88
      %v2202 = vpop.permute.xlu0 %2201
      %v2203 = vsel %vm709, %v2200, 0
      %v2205 = vsel %vm709, %v2202, 0
      %2207 = vmatprep.subr.mxu0 0.0
      %2208 = vmatpush1.xpose.msra.mxu0 %v2205
      %2209 = vmatprep.subr.mxu0 0.0
      %2210 = vmatpush1.xpose.msra.mxu0 0.0
      %2211 = vmatprep.subr.mxu0 0.0
      %2212 = vmatpush1.xpose.msra.mxu0 0.0
      %2213 = vmatprep.subr.mxu0 0.0
      %2214 = vmatpush1.xpose.msra.mxu0 0.0
      %2215 = vmatprep.subr.mxu0 0.0
      %2216 = vmatpush1.xpose.msra.mxu0 0.0
      %2217 = vmatprep.subr.mxu0 0.0
      %2218 = vmatpush1.xpose.msra.mxu0 0.0
      %2219 = vmatprep.subr.mxu0 0.0
      %2220 = vmatpush1.xpose.msra.mxu0 0.0
      %2221 = vmatprep.subr.mxu0 0.0
      %2222 = vmatpush1.xpose.msra.mxu0 0.0
      %2223 = vmatprep.subr.mxu0 0.0
      %2224 = vmatpush1.xpose.msra.mxu0 0.0
      %2225 = vmatprep.subr.mxu0 0.0
      %2226 = vmatpush1.xpose.msra.mxu0 0.0
      %2227 = vmatprep.subr.mxu0 0.0
      %2228 = vmatpush1.xpose.msra.mxu0 0.0
      %2229 = vmatprep.subr.mxu0 0.0
      %2230 = vmatpush1.xpose.msra.mxu0 0.0
      %2231 = vmatprep.subr.mxu0 0.0
      %2232 = vmatpush1.xpose.msra.mxu0 0.0
      %2233 = vmatprep.subr.mxu0 0.0
      %2234 = vmatpush1.xpose.msra.mxu0 0.0
      %2235 = vmatprep.subr.mxu0 0.0
      %2236 = vmatpush1.xpose.msra.mxu0 0.0
      %2237 = vmatprep.subr.mxu0 0.0
      %2238 = vmatpush1.xpose.msra.mxu0 0.0
      %2239 = vmatprep.subr.mxu0 0.0
      %2240 = vmatpush1.xpose.msra.mxu0 0.0
      %2241 = vmatprep.subr.mxu0 0.0
      %2242 = vmatpush1.xpose.msra.mxu0 0.0
      %2243 = vmatprep.subr.mxu0 0.0
      %2244 = vmatpush1.xpose.msra.mxu0 0.0
      %2245 = vmatprep.subr.mxu0 0.0
      %2246 = vmatpush1.xpose.msra.mxu0 0.0
      %2247 = vmatprep.subr.mxu0 0.0
      %2248 = vmatpush1.xpose.msra.mxu0 0.0
      %2249 = vmatprep.subr.mxu0 0.0
      %2250 = vmatpush1.xpose.msra.mxu0 0.0
      %2251 = vmatprep.subr.mxu0 0.0
      %2252 = vmatpush1.xpose.msra.mxu0 0.0
      %2253 = vmatprep.subr.mxu0 0.0
      %2254 = vmatpush1.xpose.msra.mxu0 0.0
      %2255 = vmatprep.subr.mxu0 0.0
      %2256 = vmatpush1.xpose.msra.mxu0 0.0
      %2257 = vmatprep.subr.mxu0 0.0
      %2258 = vmatpush1.xpose.msra.mxu0 0.0
      %2259 = vmatprep.subr.mxu0 0.0
      %2260 = vmatpush1.xpose.msra.mxu0 0.0
      %2261 = vmatprep.subr.mxu0 0.0
      %2262 = vmatpush1.xpose.msra.mxu0 0.0
      %2263 = vmatprep.subr.mxu0 0.0
      %2264 = vmatpush1.xpose.msra.mxu0 0.0
      %2265 = vmatprep.subr.mxu0 0.0
      %2266 = vmatpush1.xpose.msra.mxu0 0.0
      %2267 = vmatprep.subr.mxu0 0.0
      %2268 = vmatpush1.xpose.msra.mxu0 0.0
      %2269 = vmatprep.subr.mxu0 0.0
      %2270 = vmatpush1.xpose.msra.mxu0 0.0
      %2271 = vmatprep.mubr.f32.mxu0 0.0
      %2272 = vmatmul.mubr.f32.gmra.mrb[0].mxu0 %v2203
      %v2273 = vpop.f32.mrb[0].mxu0
      %v2274 = vadd.f32 0.0, %v2273
      %v2275 = vpop.f32.mrb[0].mxu0
      %2276 = vdwg.mxu0
      %v2277 = vmul.f32 %v2274, 0.35355338
      %v2278 = vadd.f32 %v2277, %v789
      %v2279 = vsel %vm709, %v2278, -inf
      %2280 = vmax.xlane.f32.xlu0 %v2279
      %v2281 = vpop.xlane.xlu0 %2280
      %v2282 = vsub.f32 %v2278, %v2281
      %v2283 = vmul.f32 %v2282, 1.442695
      %v2284 = vpow.pop %v2283
      %v2285 = vsel %vm709, %v2284, 0.0
      %2286 = vadd.xlane.f32.xlu0 %v2285
      %v2287 = vpop.xlane.xlu0 %2286
      %v2288 = vrcp.pop %v2287
      %v2289 = vmul.f32 %v2284, %v2288
      %2290 = vrot.lane.b32.xlu0 %v2025, 56
      %v2291 = vpop.permute.xlu0 %2290
      %v2294 = vsel %vm709, %v2289, 0
      %2296 = vmatprep.subr.mxu0 0.0
      %2297 = vmatpush1.msra.mxu0 %v2291
      %2298 = vmatprep.subr.mxu0 0.0
      %2299 = vmatpush1.msra.mxu0 0.0
      %2300 = vmatprep.subr.mxu0 0.0
      %2301 = vmatpush1.msra.mxu0 0.0
      %2302 = vmatprep.subr.mxu0 0.0
      %2303 = vmatpush1.msra.mxu0 0.0
      %2304 = vmatprep.subr.mxu0 0.0
      %2305 = vmatpush1.msra.mxu0 0.0
      %2306 = vmatprep.subr.mxu0 0.0
      %2307 = vmatpush1.msra.mxu0 0.0
      %2308 = vmatprep.subr.mxu0 0.0
      %2309 = vmatpush1.msra.mxu0 0.0
      %2310 = vmatprep.subr.mxu0 0.0
      %2311 = vmatpush1.msra.mxu0 0.0
      %2312 = vmatprep.subr.mxu0 0.0
      %2313 = vmatpush1.msra.mxu0 0.0
      %2314 = vmatprep.subr.mxu0 0.0
      %2315 = vmatpush1.msra.mxu0 0.0
      %2316 = vmatprep.subr.mxu0 0.0
      %2317 = vmatpush1.msra.mxu0 0.0
      %2318 = vmatprep.subr.mxu0 0.0
      %2319 = vmatpush1.msra.mxu0 0.0
      %2320 = vmatprep.subr.mxu0 0.0
      %2321 = vmatpush1.msra.mxu0 0.0
      %2322 = vmatprep.subr.mxu0 0.0
      %2323 = vmatpush1.msra.mxu0 0.0
      %2324 = vmatprep.subr.mxu0 0.0
      %2325 = vmatpush1.msra.mxu0 0.0
      %2326 = vmatprep.subr.mxu0 0.0
      %2327 = vmatpush1.msra.mxu0 0.0
      %2328 = vmatprep.subr.mxu0 0.0
      %2329 = vmatpush1.msra.mxu0 0.0
      %2330 = vmatprep.subr.mxu0 0.0
      %2331 = vmatpush1.msra.mxu0 0.0
      %2332 = vmatprep.subr.mxu0 0.0
      %2333 = vmatpush1.msra.mxu0 0.0
      %2334 = vmatprep.subr.mxu0 0.0
      %2335 = vmatpush1.msra.mxu0 0.0
      %2336 = vmatprep.subr.mxu0 0.0
      %2337 = vmatpush1.msra.mxu0 0.0
      %2338 = vmatprep.subr.mxu0 0.0
      %2339 = vmatpush1.msra.mxu0 0.0
      %2340 = vmatprep.subr.mxu0 0.0
      %2341 = vmatpush1.msra.mxu0 0.0
      %2342 = vmatprep.subr.mxu0 0.0
      %2343 = vmatpush1.msra.mxu0 0.0
      %2344 = vmatprep.subr.mxu0 0.0
      %2345 = vmatpush1.msra.mxu0 0.0
      %2346 = vmatprep.subr.mxu0 0.0
      %2347 = vmatpush1.msra.mxu0 0.0
      %2348 = vmatprep.subr.mxu0 0.0
      %2349 = vmatpush1.msra.mxu0 0.0
      %2350 = vmatprep.subr.mxu0 0.0
      %2351 = vmatpush1.msra.mxu0 0.0
      %2352 = vmatprep.subr.mxu0 0.0
      %2353 = vmatpush1.msra.mxu0 0.0
      %2354 = vmatprep.subr.mxu0 0.0
      %2355 = vmatpush1.msra.mxu0 0.0
      %2356 = vmatprep.subr.mxu0 0.0
      %2357 = vmatpush1.msra.mxu0 0.0
      %2358 = vmatprep.subr.mxu0 0.0
      %2359 = vmatpush1.msra.mxu0 0.0
      %2360 = vmatprep.mubr.f32.mxu0 0.0
      %2361 = vmatmul.mubr.f32.gmra.mrb[0].mxu0 %v2294
      %v2362 = vpop.f32.mrb[0].mxu0
      %v2363 = vadd.f32 0.0, %v2362
      %v2364 = vpop.f32.mrb[0].mxu0
      %2365 = vdwg.mxu0
      %v2367 = vsel %vm709, %v2363, 0
      %2369 = vmatprep.subr.mxu0 0.0
      %2370 = vmatpush1.msra.mxu0 %v2030
      %2371 = vmatprep.subr.mxu0 0.0
      %2372 = vmatpush1.msra.mxu0 0.0
      %2373 = vmatprep.subr.mxu0 0.0
      %2374 = vmatpush1.msra.mxu0 0.0
      %2375 = vmatprep.subr.mxu0 0.0
      %2376 = vmatpush1.msra.mxu0 0.0
      %2377 = vmatprep.subr.mxu0 0.0
      %2378 = vmatpush1.msra.mxu0 0.0
      %2379 = vmatprep.subr.mxu0 0.0
      %2380 = vmatpush1.msra.mxu0 0.0
      %2381 = vmatprep.subr.mxu0 0.0
      %2382 = vmatpush1.msra.mxu0 0.0
      %2383 = vmatprep.subr.mxu0 0.0
      %2384 = vmatpush1.msra.mxu0 0.0
      %2385 = vmatprep.subr.mxu0 0.0
      %2386 = vmatpush1.msra.mxu0 0.0
      %2387 = vmatprep.subr.mxu0 0.0
      %2388 = vmatpush1.msra.mxu0 0.0
      %2389 = vmatprep.subr.mxu0 0.0
      %2390 = vmatpush1.msra.mxu0 0.0
      %2391 = vmatprep.subr.mxu0 0.0
      %2392 = vmatpush1.msra.mxu0 0.0
      %2393 = vmatprep.subr.mxu0 0.0
      %2394 = vmatpush1.msra.mxu0 0.0
      %2395 = vmatprep.subr.mxu0 0.0
      %2396 = vmatpush1.msra.mxu0 0.0
      %2397 = vmatprep.subr.mxu0 0.0
      %2398 = vmatpush1.msra.mxu0 0.0
      %2399 = vmatprep.subr.mxu0 0.0
      %2400 = vmatpush1.msra.mxu0 0.0
      %2401 = vmatprep.subr.mxu0 0.0
      %2402 = vmatpush1.msra.mxu0 0.0
      %2403 = vmatprep.subr.mxu0 0.0
      %2404 = vmatpush1.msra.mxu0 0.0
      %2405 = vmatprep.subr.mxu0 0.0
      %2406 = vmatpush1.msra.mxu0 0.0
      %2407 = vmatprep.subr.mxu0 0.0
      %2408 = vmatpush1.msra.mxu0 0.0
      %2409 = vmatprep.subr.mxu0 0.0
      %2410 = vmatpush1.msra.mxu0 0.0
      %2411 = vmatprep.subr.mxu0 0.0
      %2412 = vmatpush1.msra.mxu0 0.0
      %2413 = vmatprep.subr.mxu0 0.0
      %2414 = vmatpush1.msra.mxu0 0.0
      %2415 = vmatprep.subr.mxu0 0.0
      %2416 = vmatpush1.msra.mxu0 0.0
      %2417 = vmatprep.subr.mxu0 0.0
      %2418 = vmatpush1.msra.mxu0 0.0
      %2419 = vmatprep.subr.mxu0 0.0
      %2420 = vmatpush1.msra.mxu0 0.0
      %2421 = vmatprep.subr.mxu0 0.0
      %2422 = vmatpush1.msra.mxu0 0.0
      %2423 = vmatprep.subr.mxu0 0.0
      %2424 = vmatpush1.msra.mxu0 0.0
      %2425 = vmatprep.subr.mxu0 0.0
      %2426 = vmatpush1.msra.mxu0 0.0
      %2427 = vmatprep.subr.mxu0 0.0
      %2428 = vmatpush1.msra.mxu0 0.0
      %2429 = vmatprep.subr.mxu0 0.0
      %2430 = vmatpush1.msra.mxu0 0.0
      %2431 = vmatprep.subr.mxu0 0.0
      %2432 = vmatpush1.msra.mxu0 0.0
      %2433 = vmatprep.mubr.f32.mxu0 0.0
      %2434 = vmatmul.mubr.f32.gmra.mrb[0].mxu0 %v2367
      %v2435 = vpop.f32.mrb[0].mxu0
      %v2436 = vadd.f32 0.0, %v2435
      %v2437 = vpop.f32.mrb[0].mxu0
      %2438 = vdwg.mxu0
      %v2440 = vsel %vm709, %v2196, 0
      %2442 = vmatprep.subr.mxu0 0.0
      %2443 = vmatpush1.msra.mxu0 %v2029
      %2444 = vmatprep.subr.mxu0 0.0
      %2445 = vmatpush1.msra.mxu0 0.0
      %2446 = vmatprep.subr.mxu0 0.0
      %2447 = vmatpush1.msra.mxu0 0.0
      %2448 = vmatprep.subr.mxu0 0.0
      %2449 = vmatpush1.msra.mxu0 0.0
      %2450 = vmatprep.subr.mxu0 0.0
      %2451 = vmatpush1.msra.mxu0 0.0
      %2452 = vmatprep.subr.mxu0 0.0
      %2453 = vmatpush1.msra.mxu0 0.0
      %2454 = vmatprep.subr.mxu0 0.0
      %2455 = vmatpush1.msra.mxu0 0.0
      %2456 = vmatprep.subr.mxu0 0.0
      %2457 = vmatpush1.msra.mxu0 0.0
      %2458 = vmatprep.subr.mxu0 0.0
      %2459 = vmatpush1.msra.mxu0 0.0
      %2460 = vmatprep.subr.mxu0 0.0
      %2461 = vmatpush1.msra.mxu0 0.0
      %2462 = vmatprep.subr.mxu0 0.0
      %2463 = vmatpush1.msra.mxu0 0.0
      %2464 = vmatprep.subr.mxu0 0.0
      %2465 = vmatpush1.msra.mxu0 0.0
      %2466 = vmatprep.subr.mxu0 0.0
      %2467 = vmatpush1.msra.mxu0 0.0
      %2468 = vmatprep.subr.mxu0 0.0
      %2469 = vmatpush1.msra.mxu0 0.0
      %2470 = vmatprep.subr.mxu0 0.0
      %2471 = vmatpush1.msra.mxu0 0.0
      %2472 = vmatprep.subr.mxu0 0.0
      %2473 = vmatpush1.msra.mxu0 0.0
      %2474 = vmatprep.subr.mxu0 0.0
      %2475 = vmatpush1.msra.mxu0 0.0
      %2476 = vmatprep.subr.mxu0 0.0
      %2477 = vmatpush1.msra.mxu0 0.0
      %2478 = vmatprep.subr.mxu0 0.0
      %2479 = vmatpush1.msra.mxu0 0.0
      %2480 = vmatprep.subr.mxu0 0.0
      %2481 = vmatpush1.msra.mxu0 0.0
      %2482 = vmatprep.subr.mxu0 0.0
      %2483 = vmatpush1.msra.mxu0 0.0
      %2484 = vmatprep.subr.mxu0 0.0
      %2485 = vmatpush1.msra.mxu0 0.0
      %2486 = vmatprep.subr.mxu0 0.0
      %2487 = vmatpush1.msra.mxu0 0.0
      %2488 = vmatprep.subr.mxu0 0.0
      %2489 = vmatpush1.msra.mxu0 0.0
      %2490 = vmatprep.subr.mxu0 0.0
      %2491 = vmatpush1.msra.mxu0 0.0
      %2492 = vmatprep.subr.mxu0 0.0
      %2493 = vmatpush1.msra.mxu0 0.0
      %2494 = vmatprep.subr.mxu0 0.0
      %2495 = vmatpush1.msra.mxu0 0.0
      %2496 = vmatprep.subr.mxu0 0.0
      %2497 = vmatpush1.msra.mxu0 0.0
      %2498 = vmatprep.subr.mxu0 0.0
      %2499 = vmatpush1.msra.mxu0 0.0
      %2500 = vmatprep.subr.mxu0 0.0
      %2501 = vmatpush1.msra.mxu0 0.0
      %2502 = vmatprep.subr.mxu0 0.0
      %2503 = vmatpush1.msra.mxu0 0.0
      %2504 = vmatprep.subr.mxu0 0.0
      %2505 = vmatpush1.msra.mxu0 0.0
      %2506 = vmatprep.mubr.f32.mxu0 0.0
      %2507 = vmatmul.mubr.f32.gmra.mrb[0].mxu0 %v2440
      %v2508 = vpop.f32.mrb[0].mxu0
      %v2509 = vadd.f32 %v2436, %v2508
      %v2510 = vpop.f32.mrb[0].mxu0
      %2511 = vdwg.mxu0
      %2512 = vrot.lane.b32.xlu0 %v2025, 112
      %v2513 = vpop.permute.xlu0 %2512
      %2514 = vrot.lane.b32.xlu0 %v2025, 80
      %v2515 = vpop.permute.xlu0 %2514
      %v2516 = vsel %vm709, %v2513, 0
      %v2518 = vsel %vm709, %v2515, 0
      %2520 = vmatprep.subr.mxu0 0.0
      %2521 = vmatpush1.xpose.msra.mxu0 %v2518
      %2522 = vmatprep.subr.mxu0 0.0
      %2523 = vmatpush1.xpose.msra.mxu0 0.0
      %2524 = vmatprep.subr.mxu0 0.0
      %2525 = vmatpush1.xpose.msra.mxu0 0.0
      %2526 = vmatprep.subr.mxu0 0.0
      %2527 = vmatpush1.xpose.msra.mxu0 0.0
      %2528 = vmatprep.subr.mxu0 0.0
      %2529 = vmatpush1.xpose.msra.mxu0 0.0
      %2530 = vmatprep.subr.mxu0 0.0
      %2531 = vmatpush1.xpose.msra.mxu0 0.0
      %2532 = vmatprep.subr.mxu0 0.0
      %2533 = vmatpush1.xpose.msra.mxu0 0.0
      %2534 = vmatprep.subr.mxu0 0.0
      %2535 = vmatpush1.xpose.msra.mxu0 0.0
      %2536 = vmatprep.subr.mxu0 0.0
      %2537 = vmatpush1.xpose.msra.mxu0 0.0
      %2538 = vmatprep.subr.mxu0 0.0
      %2539 = vmatpush1.xpose.msra.mxu0 0.0
      %2540 = vmatprep.subr.mxu0 0.0
      %2541 = vmatpush1.xpose.msra.mxu0 0.0
      %2542 = vmatprep.subr.mxu0 0.0
      %2543 = vmatpush1.xpose.msra.mxu0 0.0
      %2544 = vmatprep.subr.mxu0 0.0
      %2545 = vmatpush1.xpose.msra.mxu0 0.0
      %2546 = vmatprep.subr.mxu0 0.0
      %2547 = vmatpush1.xpose.msra.mxu0 0.0
      %2548 = vmatprep.subr.mxu0 0.0
      %2549 = vmatpush1.xpose.msra.mxu0 0.0
      %2550 = vmatprep.subr.mxu0 0.0
      %2551 = vmatpush1.xpose.msra.mxu0 0.0
      %2552 = vmatprep.subr.mxu0 0.0
      %2553 = vmatpush1.xpose.msra.mxu0 0.0
      %2554 = vmatprep.subr.mxu0 0.0
      %2555 = vmatpush1.xpose.msra.mxu0 0.0
      %2556 = vmatprep.subr.mxu0 0.0
      %2557 = vmatpush1.xpose.msra.mxu0 0.0
      %2558 = vmatprep.subr.mxu0 0.0
      %2559 = vmatpush1.xpose.msra.mxu0 0.0
      %2560 = vmatprep.subr.mxu0 0.0
      %2561 = vmatpush1.xpose.msra.mxu0 0.0
      %2562 = vmatprep.subr.mxu0 0.0
      %2563 = vmatpush1.xpose.msra.mxu0 0.0
      %2564 = vmatprep.subr.mxu0 0.0
      %2565 = vmatpush1.xpose.msra.mxu0 0.0
      %2566 = vmatprep.subr.mxu0 0.0
      %2567 = vmatpush1.xpose.msra.mxu0 0.0
      %2568 = vmatprep.subr.mxu0 0.0
      %2569 = vmatpush1.xpose.msra.mxu0 0.0
      %2570 = vmatprep.subr.mxu0 0.0
      %2571 = vmatpush1.xpose.msra.mxu0 0.0
      %2572 = vmatprep.subr.mxu0 0.0
      %2573 = vmatpush1.xpose.msra.mxu0 0.0
      %2574 = vmatprep.subr.mxu0 0.0
      %2575 = vmatpush1.xpose.msra.mxu0 0.0
      %2576 = vmatprep.subr.mxu0 0.0
      %2577 = vmatpush1.xpose.msra.mxu0 0.0
      %2578 = vmatprep.subr.mxu0 0.0
      %2579 = vmatpush1.xpose.msra.mxu0 0.0
      %2580 = vmatprep.subr.mxu0 0.0
      %2581 = vmatpush1.xpose.msra.mxu0 0.0
      %2582 = vmatprep.subr.mxu0 0.0
      %2583 = vmatpush1.xpose.msra.mxu0 0.0
      %2584 = vmatprep.mubr.f32.mxu0 0.0
      %2585 = vmatmul.mubr.f32.gmra.mrb[0].mxu0 %v2516
      %v2586 = vpop.f32.mrb[0].mxu0
      %v2587 = vadd.f32 0.0, %v2586
      %v2588 = vpop.f32.mrb[0].mxu0
      %2589 = vdwg.mxu0
      %v2590 = vmul.f32 %v2587, 0.35355338
      %v2591 = vadd.f32 %v2590, %v789
      %v2592 = vsel %vm709, %v2591, -inf
      %2593 = vmax.xlane.f32.xlu0 %v2592
      %v2594 = vpop.xlane.xlu0 %2593
      %v2595 = vsub.f32 %v2591, %v2594
      %v2596 = vmul.f32 %v2595, 1.442695
      %v2597 = vpow.pop %v2596
      %v2598 = vsel %vm709, %v2597, 0.0
      %2599 = vadd.xlane.f32.xlu0 %v2598
      %v2600 = vpop.xlane.xlu0 %2599
      %v2601 = vrcp.pop %v2600
      %v2602 = vmul.f32 %v2597, %v2601
      %2603 = vrot.lane.b32.xlu0 %v2025, 48
      %v2604 = vpop.permute.xlu0 %2603
      %v2607 = vsel %vm709, %v2602, 0
      %2609 = vmatprep.subr.mxu0 0.0
      %2610 = vmatpush1.msra.mxu0 %v2604
      %2611 = vmatprep.subr.mxu0 0.0
      %2612 = vmatpush1.msra.mxu0 0.0
      %2613 = vmatprep.subr.mxu0 0.0
      %2614 = vmatpush1.msra.mxu0 0.0
      %2615 = vmatprep.subr.mxu0 0.0
      %2616 = vmatpush1.msra.mxu0 0.0
      %2617 = vmatprep.subr.mxu0 0.0
      %2618 = vmatpush1.msra.mxu0 0.0
      %2619 = vmatprep.subr.mxu0 0.0
      %2620 = vmatpush1.msra.mxu0 0.0
      %2621 = vmatprep.subr.mxu0 0.0
      %2622 = vmatpush1.msra.mxu0 0.0
      %2623 = vmatprep.subr.mxu0 0.0
      %2624 = vmatpush1.msra.mxu0 0.0
      %2625 = vmatprep.subr.mxu0 0.0
      %2626 = vmatpush1.msra.mxu0 0.0
      %2627 = vmatprep.subr.mxu0 0.0
      %2628 = vmatpush1.msra.mxu0 0.0
      %2629 = vmatprep.subr.mxu0 0.0
      %2630 = vmatpush1.msra.mxu0 0.0
      %2631 = vmatprep.subr.mxu0 0.0
      %2632 = vmatpush1.msra.mxu0 0.0
      %2633 = vmatprep.subr.mxu0 0.0
      %2634 = vmatpush1.msra.mxu0 0.0
      %2635 = vmatprep.subr.mxu0 0.0
      %2636 = vmatpush1.msra.mxu0 0.0
      %2637 = vmatprep.subr.mxu0 0.0
      %2638 = vmatpush1.msra.mxu0 0.0
      %2639 = vmatprep.subr.mxu0 0.0
      %2640 = vmatpush1.msra.mxu0 0.0
      %2641 = vmatprep.subr.mxu0 0.0
      %2642 = vmatpush1.msra.mxu0 0.0
      %2643 = vmatprep.subr.mxu0 0.0
      %2644 = vmatpush1.msra.mxu0 0.0
      %2645 = vmatprep.subr.mxu0 0.0
      %2646 = vmatpush1.msra.mxu0 0.0
      %2647 = vmatprep.subr.mxu0 0.0
      %2648 = vmatpush1.msra.mxu0 0.0
      %2649 = vmatprep.subr.mxu0 0.0
      %2650 = vmatpush1.msra.mxu0 0.0
      %2651 = vmatprep.subr.mxu0 0.0
      %2652 = vmatpush1.msra.mxu0 0.0
      %2653 = vmatprep.subr.mxu0 0.0
      %2654 = vmatpush1.msra.mxu0 0.0
      %2655 = vmatprep.subr.mxu0 0.0
      %2656 = vmatpush1.msra.mxu0 0.0
      %2657 = vmatprep.subr.mxu0 0.0
      %2658 = vmatpush1.msra.mxu0 0.0
      %2659 = vmatprep.subr.mxu0 0.0
      %2660 = vmatpush1.msra.mxu0 0.0
      %2661 = vmatprep.subr.mxu0 0.0
      %2662 = vmatpush1.msra.mxu0 0.0
      %2663 = vmatprep.subr.mxu0 0.0
      %2664 = vmatpush1.msra.mxu0 0.0
      %2665 = vmatprep.subr.mxu0 0.0
      %2666 = vmatpush1.msra.mxu0 0.0
      %2667 = vmatprep.subr.mxu0 0.0
      %2668 = vmatpush1.msra.mxu0 0.0
      %2669 = vmatprep.subr.mxu0 0.0
      %2670 = vmatpush1.msra.mxu0 0.0
      %2671 = vmatprep.subr.mxu0 0.0
      %2672 = vmatpush1.msra.mxu0 0.0
      %2673 = vmatprep.mubr.f32.mxu0 0.0
      %2674 = vmatmul.mubr.f32.gmra.mrb[0].mxu0 %v2607
      %v2675 = vpop.f32.mrb[0].mxu0
      %v2676 = vadd.f32 0.0, %v2675
      %v2677 = vpop.f32.mrb[0].mxu0
      %2678 = vdwg.mxu0
      %v2680 = vsel %vm709, %v2676, 0
      %2682 = vmatprep.subr.mxu0 0.0
      %2683 = vmatpush1.msra.mxu0 %v2031
      %2684 = vmatprep.subr.mxu0 0.0
      %2685 = vmatpush1.msra.mxu0 0.0
      %2686 = vmatprep.subr.mxu0 0.0
      %2687 = vmatpush1.msra.mxu0 0.0
      %2688 = vmatprep.subr.mxu0 0.0
      %2689 = vmatpush1.msra.mxu0 0.0
      %2690 = vmatprep.subr.mxu0 0.0
      %2691 = vmatpush1.msra.mxu0 0.0
      %2692 = vmatprep.subr.mxu0 0.0
      %2693 = vmatpush1.msra.mxu0 0.0
      %2694 = vmatprep.subr.mxu0 0.0
      %2695 = vmatpush1.msra.mxu0 0.0
      %2696 = vmatprep.subr.mxu0 0.0
      %2697 = vmatpush1.msra.mxu0 0.0
      %2698 = vmatprep.subr.mxu0 0.0
      %2699 = vmatpush1.msra.mxu0 0.0
      %2700 = vmatprep.subr.mxu0 0.0
      %2701 = vmatpush1.msra.mxu0 0.0
      %2702 = vmatprep.subr.mxu0 0.0
      %2703 = vmatpush1.msra.mxu0 0.0
      %2704 = vmatprep.subr.mxu0 0.0
      %2705 = vmatpush1.msra.mxu0 0.0
      %2706 = vmatprep.subr.mxu0 0.0
      %2707 = vmatpush1.msra.mxu0 0.0
      %2708 = vmatprep.subr.mxu0 0.0
      %2709 = vmatpush1.msra.mxu0 0.0
      %2710 = vmatprep.subr.mxu0 0.0
      %2711 = vmatpush1.msra.mxu0 0.0
      %2712 = vmatprep.subr.mxu0 0.0
      %2713 = vmatpush1.msra.mxu0 0.0
      %2714 = vmatprep.subr.mxu0 0.0
      %2715 = vmatpush1.msra.mxu0 0.0
      %2716 = vmatprep.subr.mxu0 0.0
      %2717 = vmatpush1.msra.mxu0 0.0
      %2718 = vmatprep.subr.mxu0 0.0
      %2719 = vmatpush1.msra.mxu0 0.0
      %2720 = vmatprep.subr.mxu0 0.0
      %2721 = vmatpush1.msra.mxu0 0.0
      %2722 = vmatprep.subr.mxu0 0.0
      %2723 = vmatpush1.msra.mxu0 0.0
      %2724 = vmatprep.subr.mxu0 0.0
      %2725 = vmatpush1.msra.mxu0 0.0
      %2726 = vmatprep.subr.mxu0 0.0
      %2727 = vmatpush1.msra.mxu0 0.0
      %2728 = vmatprep.subr.mxu0 0.0
      %2729 = vmatpush1.msra.mxu0 0.0
      %2730 = vmatprep.subr.mxu0 0.0
      %2731 = vmatpush1.msra.mxu0 0.0
      %2732 = vmatprep.subr.mxu0 0.0
      %2733 = vmatpush1.msra.mxu0 0.0
      %2734 = vmatprep.subr.mxu0 0.0
      %2735 = vmatpush1.msra.mxu0 0.0
      %2736 = vmatprep.subr.mxu0 0.0
      %2737 = vmatpush1.msra.mxu0 0.0
      %2738 = vmatprep.subr.mxu0 0.0
      %2739 = vmatpush1.msra.mxu0 0.0
      %2740 = vmatprep.subr.mxu0 0.0
      %2741 = vmatpush1.msra.mxu0 0.0
      %2742 = vmatprep.subr.mxu0 0.0
      %2743 = vmatpush1.msra.mxu0 0.0
      %2744 = vmatprep.subr.mxu0 0.0
      %2745 = vmatpush1.msra.mxu0 0.0
      %2746 = vmatprep.mubr.f32.mxu0 0.0
      %2747 = vmatmul.mubr.f32.gmra.mrb[0].mxu0 %v2680
      %v2748 = vpop.f32.mrb[0].mxu0
      %v2749 = vadd.f32 0.0, %v2748
      %v2750 = vpop.f32.mrb[0].mxu0
      %2751 = vdwg.mxu0
      %v2752 = vadd.f32 %v2509, %v2749
      %2753 = vrot.lane.b32.xlu0 %v2025, 104
      %v2754 = vpop.permute.xlu0 %2753
      %2755 = vrot.lane.b32.xlu0 %v2025, 72
      %v2756 = vpop.permute.xlu0 %2755
      %v2757 = vsel %vm709, %v2754, 0
      %v2759 = vsel %vm709, %v2756, 0
      %2761 = vmatprep.subr.mxu0 0.0
      %2762 = vmatpush1.xpose.msra.mxu0 %v2759
      %2763 = vmatprep.subr.mxu0 0.0
      %2764 = vmatpush1.xpose.msra.mxu0 0.0
      %2765 = vmatprep.subr.mxu0 0.0
      %2766 = vmatpush1.xpose.msra.mxu0 0.0
      %2767 = vmatprep.subr.mxu0 0.0
      %2768 = vmatpush1.xpose.msra.mxu0 0.0
      %2769 = vmatprep.subr.mxu0 0.0
      %2770 = vmatpush1.xpose.msra.mxu0 0.0
      %2771 = vmatprep.subr.mxu0 0.0
      %2772 = vmatpush1.xpose.msra.mxu0 0.0
      %2773 = vmatprep.subr.mxu0 0.0
      %2774 = vmatpush1.xpose.msra.mxu0 0.0
      %2775 = vmatprep.subr.mxu0 0.0
      %2776 = vmatpush1.xpose.msra.mxu0 0.0
      %2777 = vmatprep.subr.mxu0 0.0
      %2778 = vmatpush1.xpose.msra.mxu0 0.0
      %2779 = vmatprep.subr.mxu0 0.0
      %2780 = vmatpush1.xpose.msra.mxu0 0.0
      %2781 = vmatprep.subr.mxu0 0.0
      %2782 = vmatpush1.xpose.msra.mxu0 0.0
      %2783 = vmatprep.subr.mxu0 0.0
      %2784 = vmatpush1.xpose.msra.mxu0 0.0
      %2785 = vmatprep.subr.mxu0 0.0
      %2786 = vmatpush1.xpose.msra.mxu0 0.0
      %2787 = vmatprep.subr.mxu0 0.0
      %2788 = vmatpush1.xpose.msra.mxu0 0.0
      %2789 = vmatprep.subr.mxu0 0.0
      %2790 = vmatpush1.xpose.msra.mxu0 0.0
      %2791 = vmatprep.subr.mxu0 0.0
      %2792 = vmatpush1.xpose.msra.mxu0 0.0
      %2793 = vmatprep.subr.mxu0 0.0
      %2794 = vmatpush1.xpose.msra.mxu0 0.0
      %2795 = vmatprep.subr.mxu0 0.0
      %2796 = vmatpush1.xpose.msra.mxu0 0.0
      %2797 = vmatprep.subr.mxu0 0.0
      %2798 = vmatpush1.xpose.msra.mxu0 0.0
      %2799 = vmatprep.subr.mxu0 0.0
      %2800 = vmatpush1.xpose.msra.mxu0 0.0
      %2801 = vmatprep.subr.mxu0 0.0
      %2802 = vmatpush1.xpose.msra.mxu0 0.0
      %2803 = vmatprep.subr.mxu0 0.0
      %2804 = vmatpush1.xpose.msra.mxu0 0.0
      %2805 = vmatprep.subr.mxu0 0.0
      %2806 = vmatpush1.xpose.msra.mxu0 0.0
      %2807 = vmatprep.subr.mxu0 0.0
      %2808 = vmatpush1.xpose.msra.mxu0 0.0
      %2809 = vmatprep.subr.mxu0 0.0
      %2810 = vmatpush1.xpose.msra.mxu0 0.0
      %2811 = vmatprep.subr.mxu0 0.0
      %2812 = vmatpush1.xpose.msra.mxu0 0.0
      %2813 = vmatprep.subr.mxu0 0.0
      %2814 = vmatpush1.xpose.msra.mxu0 0.0
      %2815 = vmatprep.subr.mxu0 0.0
      %2816 = vmatpush1.xpose.msra.mxu0 0.0
      %2817 = vmatprep.subr.mxu0 0.0
      %2818 = vmatpush1.xpose.msra.mxu0 0.0
      %2819 = vmatprep.subr.mxu0 0.0
      %2820 = vmatpush1.xpose.msra.mxu0 0.0
      %2821 = vmatprep.subr.mxu0 0.0
      %2822 = vmatpush1.xpose.msra.mxu0 0.0
      %2823 = vmatprep.subr.mxu0 0.0
      %2824 = vmatpush1.xpose.msra.mxu0 0.0
      %2825 = vmatprep.mubr.f32.mxu0 0.0
      %2826 = vmatmul.mubr.f32.gmra.mrb[0].mxu0 %v2757
      %v2827 = vpop.f32.mrb[0].mxu0
      %v2828 = vadd.f32 0.0, %v2827
      %v2829 = vpop.f32.mrb[0].mxu0
      %2830 = vdwg.mxu0
      %v2831 = vmul.f32 %v2828, 0.35355338
      %v2832 = vadd.f32 %v2831, %v789
      %v2833 = vsel %vm709, %v2832, -inf
      %2834 = vmax.xlane.f32.xlu0 %v2833
      %v2835 = vpop.xlane.xlu0 %2834
      %v2836 = vsub.f32 %v2832, %v2835
      %v2837 = vmul.f32 %v2836, 1.442695
      %v2838 = vpow.pop %v2837
      %v2839 = vsel %vm709, %v2838, 0.0
      %2840 = vadd.xlane.f32.xlu0 %v2839
      %v2841 = vpop.xlane.xlu0 %2840
      %v2842 = vrcp.pop %v2841
      %v2843 = vmul.f32 %v2838, %v2842
      %2844 = vrot.lane.b32.xlu0 %v2025, 40
      %v2845 = vpop.permute.xlu0 %2844
      %v2848 = vsel %vm709, %v2843, 0
      %2850 = vmatprep.subr.mxu0 0.0
      %2851 = vmatpush1.msra.mxu0 %v2845
      %2852 = vmatprep.subr.mxu0 0.0
      %2853 = vmatpush1.msra.mxu0 0.0
      %2854 = vmatprep.subr.mxu0 0.0
      %2855 = vmatpush1.msra.mxu0 0.0
      %2856 = vmatprep.subr.mxu0 0.0
      %2857 = vmatpush1.msra.mxu0 0.0
      %2858 = vmatprep.subr.mxu0 0.0
      %2859 = vmatpush1.msra.mxu0 0.0
      %2860 = vmatprep.subr.mxu0 0.0
      %2861 = vmatpush1.msra.mxu0 0.0
      %2862 = vmatprep.subr.mxu0 0.0
      %2863 = vmatpush1.msra.mxu0 0.0
      %2864 = vmatprep.subr.mxu0 0.0
      %2865 = vmatpush1.msra.mxu0 0.0
      %2866 = vmatprep.subr.mxu0 0.0
      %2867 = vmatpush1.msra.mxu0 0.0
      %2868 = vmatprep.subr.mxu0 0.0
      %2869 = vmatpush1.msra.mxu0 0.0
      %2870 = vmatprep.subr.mxu0 0.0
      %2871 = vmatpush1.msra.mxu0 0.0
      %2872 = vmatprep.subr.mxu0 0.0
      %2873 = vmatpush1.msra.mxu0 0.0
      %2874 = vmatprep.subr.mxu0 0.0
      %2875 = vmatpush1.msra.mxu0 0.0
      %2876 = vmatprep.subr.mxu0 0.0
      %2877 = vmatpush1.msra.mxu0 0.0
      %2878 = vmatprep.subr.mxu0 0.0
      %2879 = vmatpush1.msra.mxu0 0.0
      %2880 = vmatprep.subr.mxu0 0.0
      %2881 = vmatpush1.msra.mxu0 0.0
      %2882 = vmatprep.subr.mxu0 0.0
      %2883 = vmatpush1.msra.mxu0 0.0
      %2884 = vmatprep.subr.mxu0 0.0
      %2885 = vmatpush1.msra.mxu0 0.0
      %2886 = vmatprep.subr.mxu0 0.0
      %2887 = vmatpush1.msra.mxu0 0.0
      %2888 = vmatprep.subr.mxu0 0.0
      %2889 = vmatpush1.msra.mxu0 0.0
      %2890 = vmatprep.subr.mxu0 0.0
      %2891 = vmatpush1.msra.mxu0 0.0
      %2892 = vmatprep.subr.mxu0 0.0
      %2893 = vmatpush1.msra.mxu0 0.0
      %2894 = vmatprep.subr.mxu0 0.0
      %2895 = vmatpush1.msra.mxu0 0.0
      %2896 = vmatprep.subr.mxu0 0.0
      %2897 = vmatpush1.msra.mxu0 0.0
      %2898 = vmatprep.subr.mxu0 0.0
      %2899 = vmatpush1.msra.mxu0 0.0
      %2900 = vmatprep.subr.mxu0 0.0
      %2901 = vmatpush1.msra.mxu0 0.0
      %2902 = vmatprep.subr.mxu0 0.0
      %2903 = vmatpush1.msra.mxu0 0.0
      %2904 = vmatprep.subr.mxu0 0.0
      %2905 = vmatpush1.msra.mxu0 0.0
      %2906 = vmatprep.subr.mxu0 0.0
      %2907 = vmatpush1.msra.mxu0 0.0
      %2908 = vmatprep.subr.mxu0 0.0
      %2909 = vmatpush1.msra.mxu0 0.0
      %2910 = vmatprep.subr.mxu0 0.0
      %2911 = vmatpush1.msra.mxu0 0.0
      %2912 = vmatprep.subr.mxu0 0.0
      %2913 = vmatpush1.msra.mxu0 0.0
      %2914 = vmatprep.mubr.f32.mxu0 0.0
      %2915 = vmatmul.mubr.f32.gmra.mrb[0].mxu0 %v2848
      %v2916 = vpop.f32.mrb[0].mxu0
      %v2917 = vadd.f32 0.0, %v2916
      %v2918 = vpop.f32.mrb[0].mxu0
      %2919 = vdwg.mxu0
      %v2921 = vsel %vm709, %v2917, 0
      %2923 = vmatprep.subr.mxu0 0.0
      %2924 = vmatpush1.msra.mxu0 %v2032
      %2925 = vmatprep.subr.mxu0 0.0
      %2926 = vmatpush1.msra.mxu0 0.0
      %2927 = vmatprep.subr.mxu0 0.0
      %2928 = vmatpush1.msra.mxu0 0.0
      %2929 = vmatprep.subr.mxu0 0.0
      %2930 = vmatpush1.msra.mxu0 0.0
      %2931 = vmatprep.subr.mxu0 0.0
      %2932 = vmatpush1.msra.mxu0 0.0
      %2933 = vmatprep.subr.mxu0 0.0
      %2934 = vmatpush1.msra.mxu0 0.0
      %2935 = vmatprep.subr.mxu0 0.0
      %2936 = vmatpush1.msra.mxu0 0.0
      %2937 = vmatprep.subr.mxu0 0.0
      %2938 = vmatpush1.msra.mxu0 0.0
      %2939 = vmatprep.subr.mxu0 0.0
      %2940 = vmatpush1.msra.mxu0 0.0
      %2941 = vmatprep.subr.mxu0 0.0
      %2942 = vmatpush1.msra.mxu0 0.0
      %2943 = vmatprep.subr.mxu0 0.0
      %2944 = vmatpush1.msra.mxu0 0.0
      %2945 = vmatprep.subr.mxu0 0.0
      %2946 = vmatpush1.msra.mxu0 0.0
      %2947 = vmatprep.subr.mxu0 0.0
      %2948 = vmatpush1.msra.mxu0 0.0
      %2949 = vmatprep.subr.mxu0 0.0
      %2950 = vmatpush1.msra.mxu0 0.0
      %2951 = vmatprep.subr.mxu0 0.0
      %2952 = vmatpush1.msra.mxu0 0.0
      %2953 = vmatprep.subr.mxu0 0.0
      %2954 = vmatpush1.msra.mxu0 0.0
      %2955 = vmatprep.subr.mxu0 0.0
      %2956 = vmatpush1.msra.mxu0 0.0
      %2957 = vmatprep.subr.mxu0 0.0
      %2958 = vmatpush1.msra.mxu0 0.0
      %2959 = vmatprep.subr.mxu0 0.0
      %2960 = vmatpush1.msra.mxu0 0.0
      %2961 = vmatprep.subr.mxu0 0.0
      %2962 = vmatpush1.msra.mxu0 0.0
      %2963 = vmatprep.subr.mxu0 0.0
      %2964 = vmatpush1.msra.mxu0 0.0
      %2965 = vmatprep.subr.mxu0 0.0
      %2966 = vmatpush1.msra.mxu0 0.0
      %2967 = vmatprep.subr.mxu0 0.0
      %2968 = vmatpush1.msra.mxu0 0.0
      %2969 = vmatprep.subr.mxu0 0.0
      %2970 = vmatpush1.msra.mxu0 0.0
      %2971 = vmatprep.subr.mxu0 0.0
      %2972 = vmatpush1.msra.mxu0 0.0
      %2973 = vmatprep.subr.mxu0 0.0
      %2974 = vmatpush1.msra.mxu0 0.0
      %2975 = vmatprep.subr.mxu0 0.0
      %2976 = vmatpush1.msra.mxu0 0.0
      %2977 = vmatprep.subr.mxu0 0.0
      %2978 = vmatpush1.msra.mxu0 0.0
      %2979 = vmatprep.subr.mxu0 0.0
      %2980 = vmatpush1.msra.mxu0 0.0
      %2981 = vmatprep.subr.mxu0 0.0
      %2982 = vmatpush1.msra.mxu0 0.0
      %2983 = vmatprep.subr.mxu0 0.0
      %2984 = vmatpush1.msra.mxu0 0.0
      %2985 = vmatprep.subr.mxu0 0.0
      %2986 = vmatpush1.msra.mxu0 0.0
      %2987 = vmatprep.mubr.f32.mxu0 0.0
      %2988 = vmatmul.mubr.f32.gmra.mrb[0].mxu0 %v2921
      %v2989 = vpop.f32.mrb[0].mxu0
      %v2990 = vadd.f32 0.0, %v2989
      %v2991 = vpop.f32.mrb[0].mxu0
      %2992 = vdwg.mxu0
      %v2993 = vadd.f32 %v2752, %v2990
      %s2994 = scalar_lea.vmem %s7, 1
      %v2995 = vld [vmem:[%s2994] sm:$0x1]
      %v2997 = vlaneseq
      %v2998 = vshrl.u32 %v2997, 7
      %v2999 = vsub.s32 0, %v2998
      %v3000 = vrot.slane %v2995, %v2999
      %v3002 = vadd.f32 %v2993, %v3000
      %v3003 = vadd.f32 %v3002, %v1941
      %s3004 = scalar_lea.vmem %s8, 1
      %v3005 = vld [vmem:[%s3004] sm:$0x1]
      %s3006 = scalar_lea.vmem %s9, 1
      %v3007 = vld [vmem:[%s3006] sm:$0x1]
      %v3008 = vsel %vm588, %v3003, 0.0
      %3009 = vadd.xlane.f32.xlu0 %v3008
      %v3010 = vpop.xlane.xlu0 %3009
      %v3011 = vmul.f32 %v3010, %v592
      %v3012 = vsub.f32 %v3003, %v3011
      %v3013 = vmul.f32 %v3012, %v3012
      %v3014 = vsel %vm588, %v3013, 0.0
      %3015 = vadd.xlane.f32.xlu0 %v3014
      %v3016 = vpop.xlane.xlu0 %3015
      %v3017 = vmul.f32 %v3016, %v592
      %v3018 = vadd.f32 %v3017, 1e-05
      %v3019 = vrsqrt.pop %v3018
      %v3020 = vmul.f32 %v3012, %v3019
      %v3022 = vlaneseq
      %v3023 = vshrl.u32 %v3022, 7
      %v3024 = vsub.s32 0, %v3023
      %v3025 = vrot.slane %v3005, %v3024
      %v3027 = vmul.f32 %v3020, %v3025
      %v3029 = vlaneseq
      %v3030 = vshrl.u32 %v3029, 7
      %v3031 = vsub.s32 0, %v3030
      %v3032 = vrot.slane %v3007, %v3031
      %v3034 = vadd.f32 %v3027, %v3032
      %s3035 = scalar_lea.vmem %s10, 32
      %v3036 = vld [vmem:[%s3035] sm:$0xff]
      %v3037 = vld [vmem:[%s3035 + $0x8] sm:$0xff]
      %v3038 = vld [vmem:[%s3035 + $0x10] sm:$0xff]
      %v3039 = vld [vmem:[%s3035 + $0x18] sm:$0xff]
      %s3040 = scalar_lea.vmem %s11, 1
      %v3041 = vld [vmem:[%s3040] sm:$0x1]
      %v3043 = vlaneseq
      %v3044 = vshrl.u32 %v3043, 7
      %v3045 = vsub.s32 0, %v3044
      %v3046 = vrot.slane %v3041, %v3045
      %v3049 = vsel %vm588, %v3034, 0
      %3051 = vmatprep.subr.mxu0 0.0
      %3052 = vmatpush1.msra.mxu0 %v3036
      %3053 = vmatprep.subr.mxu0 0.0
      %3054 = vmatpush1.msra.mxu0 %v3037
      %3055 = vmatprep.subr.mxu0 0.0
      %3056 = vmatpush1.msra.mxu0 %v3038
      %3057 = vmatprep.subr.mxu0 0.0
      %3058 = vmatpush1.msra.mxu0 %v3039
      %3059 = vmatprep.subr.mxu0 0.0
      %3060 = vmatpush1.msra.mxu0 0.0
      %3061 = vmatprep.subr.mxu0 0.0
      %3062 = vmatpush1.msra.mxu0 0.0
      %3063 = vmatprep.subr.mxu0 0.0
      %3064 = vmatpush1.msra.mxu0 0.0
      %3065 = vmatprep.subr.mxu0 0.0
      %3066 = vmatpush1.msra.mxu0 0.0
      %3067 = vmatprep.subr.mxu0 0.0
      %3068 = vmatpush1.msra.mxu0 0.0
      %3069 = vmatprep.subr.mxu0 0.0
      %3070 = vmatpush1.msra.mxu0 0.0
      %3071 = vmatprep.subr.mxu0 0.0
      %3072 = vmatpush1.msra.mxu0 0.0
      %3073 = vmatprep.subr.mxu0 0.0
      %3074 = vmatpush1.msra.mxu0 0.0
      %3075 = vmatprep.subr.mxu0 0.0
      %3076 = vmatpush1.msra.mxu0 0.0
      %3077 = vmatprep.subr.mxu0 0.0
      %3078 = vmatpush1.msra.mxu0 0.0
      %3079 = vmatprep.subr.mxu0 0.0
      %3080 = vmatpush1.msra.mxu0 0.0
      %3081 = vmatprep.subr.mxu0 0.0
      %3082 = vmatpush1.msra.mxu0 0.0
      %3083 = vmatprep.subr.mxu0 0.0
      %3084 = vmatpush1.msra.mxu0 0.0
      %3085 = vmatprep.subr.mxu0 0.0
      %3086 = vmatpush1.msra.mxu0 0.0
      %3087 = vmatprep.subr.mxu0 0.0
      %3088 = vmatpush1.msra.mxu0 0.0
      %3089 = vmatprep.subr.mxu0 0.0
      %3090 = vmatpush1.msra.mxu0 0.0
      %3091 = vmatprep.subr.mxu0 0.0
      %3092 = vmatpush1.msra.mxu0 0.0
      %3093 = vmatprep.subr.mxu0 0.0
      %3094 = vmatpush1.msra.mxu0 0.0
      %3095 = vmatprep.subr.mxu0 0.0
      %3096 = vmatpush1.msra.mxu0 0.0
      %3097 = vmatprep.subr.mxu0 0.0
      %3098 = vmatpush1.msra.mxu0 0.0
      %3099 = vmatprep.subr.mxu0 0.0
      %3100 = vmatpush1.msra.mxu0 0.0
      %3101 = vmatprep.subr.mxu0 0.0
      %3102 = vmatpush1.msra.mxu0 0.0
      %3103 = vmatprep.subr.mxu0 0.0
      %3104 = vmatpush1.msra.mxu0 0.0
      %3105 = vmatprep.subr.mxu0 0.0
      %3106 = vmatpush1.msra.mxu0 0.0
      %3107 = vmatprep.subr.mxu0 0.0
      %3108 = vmatpush1.msra.mxu0 0.0
      %3109 = vmatprep.subr.mxu0 0.0
      %3110 = vmatpush1.msra.mxu0 0.0
      %3111 = vmatprep.subr.mxu0 0.0
      %3112 = vmatpush1.msra.mxu0 0.0
      %3113 = vmatprep.subr.mxu0 0.0
      %3114 = vmatpush1.msra.mxu0 0.0
      %3115 = vmatprep.mubr.f32.mxu0 0.0
      %3116 = vmatmul.mubr.f32.gmra.mrb[0].mxu0 %v3049
      %v3117 = vpop.f32.mrb[0].mxu0
      %v3118 = vadd.f32 %v3046, %v3117
      %v3119 = vpop.f32.mrb[0].mxu0
      %3120 = vdwg.mxu0
      %v3121 = vmul.f32 %v3118, 0.5
      %v3122 = vmul.f32 %v3118, 0.70710677
      %v3123 = vand.u32 2147483647, %v3122
      %v3124 = vmul.f32 %v3123, 0.3275911
      %v3125 = vadd.f32 %v3124, 1.0
      %v3126 = vrcp.pop %v3125
      %v3127 = vmul.f32 1.0, %v3126
      %v3128 = vmul.f32 %v3127, 1.0614054
      %v3129 = vadd.f32 %v3128, -1.4531521
      %v3130 = vmul.f32 %v3129, %v3127
      %v3131 = vadd.f32 %v3130, 1.4214138
      %v3132 = vmul.f32 %v3131, %v3127
      %v3133 = vadd.f32 %v3132, -0.28449672
      %v3134 = vmul.f32 %v3133, %v3127
      %v3135 = vadd.f32 %v3134, 0.2548296
      %v3136 = vmul.f32 %v3135, %v3127
      %v3137 = vmul.f32 %v3123, %v3123
      %v3138 = vsub.f32 0.0, %v3137
      %v3139 = vmul.f32 %v3138, 1.442695
      %v3140 = vpow.pop %v3139
      %v3141 = vmul.f32 %v3136, %v3140
      %v3142 = vsub.f32 1.0, %v3141
      %vm3143 = vcmp.lt.f32.partialorder %v3122, 0.0
      %v3144 = vsub.f32 0.0, %v3142
      %v3145 = vsel %vm3143, %v3144, %v3142
      %v3146 = vadd.f32 %v3145, 1.0
      %v3147 = vmul.f32 %v3121, %v3146
      %s3148 = scalar_lea.vmem %s12, 64
      %v3149 = vld [vmem:[%s3148] sm:$0xff]
      %v3150 = vld [vmem:[%s3148 + $0x8] sm:$0xff]
      %v3151 = vld [vmem:[%s3148 + $0x10] sm:$0xff]
      %v3152 = vld [vmem:[%s3148 + $0x18] sm:$0xff]
      %v3153 = vld [vmem:[%s3148 + $0x20] sm:$0xff]
      %v3154 = vld [vmem:[%s3148 + $0x28] sm:$0xff]
      %v3155 = vld [vmem:[%s3148 + $0x30] sm:$0xff]
      %v3156 = vld [vmem:[%s3148 + $0x38] sm:$0xff]
      %s3157 = scalar_lea.vmem %s13, 1
      %v3158 = vld [vmem:[%s3157] sm:$0x1]
      %v3160 = vlaneseq
      %v3161 = vshrl.u32 %v3160, 7
      %v3162 = vsub.s32 0, %v3161
      %v3163 = vrot.slane %v3158, %v3162
      %v3166 = vsel %vm1838, %v3147, 0
      %3168 = vmatprep.subr.mxu0 0.0
      %3169 = vmatpush1.msra.mxu0 %v3149
      %3170 = vmatprep.subr.mxu0 0.0
      %3171 = vmatpush1.msra.mxu0 %v3150
      %3172 = vmatprep.subr.mxu0 0.0
      %3173 = vmatpush1.msra.mxu0 %v3151
      %3174 = vmatprep.subr.mxu0 0.0
      %3175 = vmatpush1.msra.mxu0 %v3152
      %3176 = vmatprep.subr.mxu0 0.0
      %3177 = vmatpush1.msra.mxu0 %v3153
      %3178 = vmatprep.subr.mxu0 0.0
      %3179 = vmatpush1.msra.mxu0 %v3154
      %3180 = vmatprep.subr.mxu0 0.0
      %3181 = vmatpush1.msra.mxu0 %v3155
      %3182 = vmatprep.subr.mxu0 0.0
      %3183 = vmatpush1.msra.mxu0 %v3156
      %3184 = vmatprep.subr.mxu0 0.0
      %3185 = vmatpush1.msra.mxu0 0.0
      %3186 = vmatprep.subr.mxu0 0.0
      %3187 = vmatpush1.msra.mxu0 0.0
      %3188 = vmatprep.subr.mxu0 0.0
      %3189 = vmatpush1.msra.mxu0 0.0
      %3190 = vmatprep.subr.mxu0 0.0
      %3191 = vmatpush1.msra.mxu0 0.0
      %3192 = vmatprep.subr.mxu0 0.0
      %3193 = vmatpush1.msra.mxu0 0.0
      %3194 = vmatprep.subr.mxu0 0.0
      %3195 = vmatpush1.msra.mxu0 0.0
      %3196 = vmatprep.subr.mxu0 0.0
      %3197 = vmatpush1.msra.mxu0 0.0
      %3198 = vmatprep.subr.mxu0 0.0
      %3199 = vmatpush1.msra.mxu0 0.0
      %3200 = vmatprep.subr.mxu0 0.0
      %3201 = vmatpush1.msra.mxu0 0.0
      %3202 = vmatprep.subr.mxu0 0.0
      %3203 = vmatpush1.msra.mxu0 0.0
      %3204 = vmatprep.subr.mxu0 0.0
      %3205 = vmatpush1.msra.mxu0 0.0
      %3206 = vmatprep.subr.mxu0 0.0
      %3207 = vmatpush1.msra.mxu0 0.0
      %3208 = vmatprep.subr.mxu0 0.0
      %3209 = vmatpush1.msra.mxu0 0.0
      %3210 = vmatprep.subr.mxu0 0.0
      %3211 = vmatpush1.msra.mxu0 0.0
      %3212 = vmatprep.subr.mxu0 0.0
      %3213 = vmatpush1.msra.mxu0 0.0
      %3214 = vmatprep.subr.mxu0 0.0
      %3215 = vmatpush1.msra.mxu0 0.0
      %3216 = vmatprep.subr.mxu0 0.0
      %3217 = vmatpush1.msra.mxu0 0.0
      %3218 = vmatprep.subr.mxu0 0.0
      %3219 = vmatpush1.msra.mxu0 0.0
      %3220 = vmatprep.subr.mxu0 0.0
      %3221 = vmatpush1.msra.mxu0 0.0
      %3222 = vmatprep.subr.mxu0 0.0
      %3223 = vmatpush1.msra.mxu0 0.0
      %3224 = vmatprep.subr.mxu0 0.0
      %3225 = vmatpush1.msra.mxu0 0.0
      %3226 = vmatprep.subr.mxu0 0.0
      %3227 = vmatpush1.msra.mxu0 0.0
      %3228 = vmatprep.subr.mxu0 0.0
      %3229 = vmatpush1.msra.mxu0 0.0
      %3230 = vmatprep.subr.mxu0 0.0
      %3231 = vmatpush1.msra.mxu0 0.0
      %3232 = vmatprep.mubr.f32.mxu0 0.0
      %3233 = vmatmul.mubr.f32.gmra.mrb[0].mxu0 %v3166
      %v3234 = vpop.f32.mrb[0].mxu0
      %v3235 = vadd.f32 %v3163, %v3234
      %v3236 = vpop.f32.mrb[0].mxu0
      %3237 = vdwg.mxu0
      %v3238 = vadd.f32 %v3235, %v3034
      %s3239 = scalar_lea.vmem %s14, 1
      %v3240 = vld [vmem:[%s3239] sm:$0x1]
      %s3241 = scalar_lea.vmem %s15, 1
      %v3242 = vld [vmem:[%s3241] sm:$0x1]
      %v3243 = vsel %vm588, %v3238, 0.0
      %3244 = vadd.xlane.f32.xlu0 %v3243
      %v3245 = vpop.xlane.xlu0 %3244
      %v3246 = vmul.f32 %v3245, %v592
      %v3247 = vsub.f32 %v3238, %v3246
      %v3248 = vmul.f32 %v3247, %v3247
      %v3249 = vsel %vm588, %v3248, 0.0
      %3250 = vadd.xlane.f32.xlu0 %v3249
      %v3251 = vpop.xlane.xlu0 %3250
      %v3252 = vmul.f32 %v3251, %v592
      %v3253 = vadd.f32 %v3252, 1e-05
      %v3254 = vrsqrt.pop %v3253
      %v3255 = vmul.f32 %v3247, %v3254
      %v3257 = vlaneseq
      %v3258 = vshrl.u32 %v3257, 7
      %v3259 = vsub.s32 0, %v3258
      %v3260 = vrot.slane %v3240, %v3259
      %v3262 = vmul.f32 %v3255, %v3260
      %v3264 = vlaneseq
      %v3265 = vshrl.u32 %v3264, 7
      %v3266 = vsub.s32 0, %v3265
      %v3267 = vrot.slane %v3242, %v3266
      %v3269 = vadd.f32 %v3262, %v3267
      %v3270 = vld [vmem:[%s16] sm:$0xff]
      %v3271 = vld [vmem:[%s16 + $0x8] sm:$0xff]
      %v3272 = vld [vmem:[%s16 + $0x10] sm:$0xff]
      %v3273 = vld [vmem:[%s16 + $0x18] sm:$0xff]
      %v3274 = vld [vmem:[#allocation2] sm:$0x1]
      %v3276 = vsel %vm588, %v3269, 0
      %3278 = vmatprep.subr.mxu0 0.0
      %3279 = vmatpush1.msra.mxu0 %v3270
      %3280 = vmatprep.subr.mxu0 0.0
      %3281 = vmatpush1.msra.mxu0 %v3271
      %3282 = vmatprep.subr.mxu0 0.0
      %3283 = vmatpush1.msra.mxu0 %v3272
      %3284 = vmatprep.subr.mxu0 0.0
      %3285 = vmatpush1.msra.mxu0 %v3273
      %3286 = vmatprep.subr.mxu0 0.0
      %3287 = vmatpush1.msra.mxu0 0.0
      %3288 = vmatprep.subr.mxu0 0.0
      %3289 = vmatpush1.msra.mxu0 0.0
      %3290 = vmatprep.subr.mxu0 0.0
      %3291 = vmatpush1.msra.mxu0 0.0
      %3292 = vmatprep.subr.mxu0 0.0
      %3293 = vmatpush1.msra.mxu0 0.0
      %3294 = vmatprep.subr.mxu0 0.0
      %3295 = vmatpush1.msra.mxu0 0.0
      %3296 = vmatprep.subr.mxu0 0.0
      %3297 = vmatpush1.msra.mxu0 0.0
      %3298 = vmatprep.subr.mxu0 0.0
      %3299 = vmatpush1.msra.mxu0 0.0
      %3300 = vmatprep.subr.mxu0 0.0
      %3301 = vmatpush1.msra.mxu0 0.0
      %3302 = vmatprep.subr.mxu0 0.0
      %3303 = vmatpush1.msra.mxu0 0.0
      %3304 = vmatprep.subr.mxu0 0.0
      %3305 = vmatpush1.msra.mxu0 0.0
      %3306 = vmatprep.subr.mxu0 0.0
      %3307 = vmatpush1.msra.mxu0 0.0
      %3308 = vmatprep.subr.mxu0 0.0
      %3309 = vmatpush1.msra.mxu0 0.0
      %3310 = vmatprep.subr.mxu0 0.0
      %3311 = vmatpush1.msra.mxu0 0.0
      %3312 = vmatprep.subr.mxu0 0.0
      %3313 = vmatpush1.msra.mxu0 0.0
      %3314 = vmatprep.subr.mxu0 0.0
      %3315 = vmatpush1.msra.mxu0 0.0
      %3316 = vmatprep.subr.mxu0 0.0
      %3317 = vmatpush1.msra.mxu0 0.0
      %3318 = vmatprep.subr.mxu0 0.0
      %3319 = vmatpush1.msra.mxu0 0.0
      %3320 = vmatprep.subr.mxu0 0.0
      %3321 = vmatpush1.msra.mxu0 0.0
      %3322 = vmatprep.subr.mxu0 0.0
      %3323 = vmatpush1.msra.mxu0 0.0
      %3324 = vmatprep.subr.mxu0 0.0
      %3325 = vmatpush1.msra.mxu0 0.0
      %3326 = vmatprep.subr.mxu0 0.0
      %3327 = vmatpush1.msra.mxu0 0.0
      %3328 = vmatprep.subr.mxu0 0.0
      %3329 = vmatpush1.msra.mxu0 0.0
      %3330 = vmatprep.subr.mxu0 0.0
      %3331 = vmatpush1.msra.mxu0 0.0
      %3332 = vmatprep.subr.mxu0 0.0
      %3333 = vmatpush1.msra.mxu0 0.0
      %3334 = vmatprep.subr.mxu0 0.0
      %3335 = vmatpush1.msra.mxu0 0.0
      %3336 = vmatprep.subr.mxu0 0.0
      %3337 = vmatpush1.msra.mxu0 0.0
      %3338 = vmatprep.subr.mxu0 0.0
      %3339 = vmatpush1.msra.mxu0 0.0
      %3340 = vmatprep.subr.mxu0 0.0
      %3341 = vmatpush1.msra.mxu0 0.0
      %3342 = vmatprep.mubr.f32.mxu0 0.0
      %3343 = vmatmul.mubr.f32.gmra.mrb[0].mxu0 %v3276
      %v3344 = vpop.f32.mrb[0].mxu0
      %v3345 = vadd.f32 %v3274, %v3344
      %v3346 = vpop.f32.mrb[0].mxu0
      %3347 = vdwg.mxu0
      %vm3348 = vcmask 0
      %3349 = vst.msk [vmem:[%s584] sm:$0x1] %vm3348, %v3345
      %p3350 = scmp.lt.s32.totalorder %s31, 1
      %s3351 = scalar_select %p3350, %s31, 1
      %s3352 = scalar_lea.vmem %s18, %s3351
      // Predicated region
      $region93: #{bert_small_forward.1} parent=91 // pred_check
        %p3353 = pneg %p437
      $region94: #{bert_small_forward.1} parent=91 // pred_check_branch
        %3355 = sbr.rel (%p3353) target = $region96
      $region95: #{bert_small_forward.1} parent=91 // pred_region
        _
      $region96: #{bert_small_forward.1} parent=91 // pred_fallthru
        _
    $region92: #{bert_small_forward.1} parent=5 // pred_fallthru
      _
    %p3356 = scmp.le.s32.totalorder 2, %s26
    // Predicated region
    $region97: #{bert_small_forward.1} parent=5 // pred_check
      %p3357 = pneg %p3356
    $region98: #{bert_small_forward.1} parent=5 // pred_check_branch
      %3359 = sbr.rel (%p3357) target = $region100
    $region99: #{bert_small_forward.1} parent=5 // pred_region
      %s3360 = ssub.s32 %s26, 2
      // Predicated region
      $region101: #{bert_small_forward.1} parent=99 // pred_check
        %p3361 = pneg %p443
      $region102: #{bert_small_forward.1} parent=99 // pred_check_branch
        %3363 = sbr.rel (%p3361) target = $region104
      $region103: #{bert_small_forward.1} parent=99 // pred_region
        %p3364 = scmp.lt.s32.totalorder %s32, 1
        %s3365 = scalar_select %p3364, %s32, 1
        %s3366 = scalar_lea.vmem %s18, %s3365
      $region104: #{bert_small_forward.1} parent=99 // pred_fallthru
        _
    $region100: #{bert_small_forward.1} parent=5 // pred_fallthru
      _
  $region6: #{bert_small_forward.1} parent=0 // loop_footer
    %s30 = sadd.s32 1, %s26
  $region7: #{bert_small_forward.1} parent=0 // loop_footer_branch
    %25 = sbr.rel target = $region3
  $region8: #{bert_small_forward.1} parent=0 // loop_exit
    _

</llo_original>
